<compile_context>
chip_gen: v5e
topology: v5e:2x2
jax: 0.10.0
libtpu: 0.0.40
codegen_flags: <defaults>
</compile_context>

<pallas_src>
import functools

import jax
import jax.numpy as jnp
from jax.experimental import pallas as pl
from jax.experimental.pallas import tpu as pltpu


def deeprnn_kernel(num_chains,
                   x_ref,
                   w_ih_ref,
                   w11_ref, w12_ref, w22_ref, w23_ref, w33_ref,
                   b1_ref, b2_ref, b3_ref,
                   w_ho_ref, b_ho_ref,
                   out_ref):
    Bb, T, I = x_ref.shape
    H = w11_ref.shape[0]
    O = w_ho_ref.shape[1]
    cb = Bb // num_chains                     # rows per independent chain

    def dot(a, b):
        return jnp.dot(a, b, preferred_element_type=jnp.float32)

    # Hoist all weights out of the time loop (VMEM/vreg resident at H=32).
    w11 = w11_ref[...]
    w12 = w12_ref[...]
    w22 = w22_ref[...]
    w23 = w23_ref[...]
    w33 = w33_ref[...]
    w_ho = w_ho_ref[...]
    # Pre-broadcast biases ONCE (JAX does not CSE broadcast_in_dim; the
    # unrolled T=8 loop would otherwise re-materialize them every step).
    b2 = jnp.broadcast_to(b2_ref[...], (cb, H))
    b3 = jnp.broadcast_to(b3_ref[...], (cb, H))
    b_ho = jnp.broadcast_to(b_ho_ref[...], (cb, O))

    # Hoisted input projection: one (Bb*T, I) @ (I, H) MXU dot replaces T tiny
    # per-step dots.  Fused layer-1 bias (b_ih + b11) added here once.
    x2d = x_ref[...].reshape(Bb * T, I)                       # contiguous
    xh_all = (dot(x2d, w_ih_ref[...]) + b1_ref[...]).reshape(Bb, T, H)

    zero = jnp.zeros((cb, H), jnp.float32)
    h1 = [zero] * num_chains
    h2 = [zero] * num_chains
    h3 = [zero] * num_chains

    # Fully-unrolled recurrence (static T, static slices).  Chains are
    # data-independent, so their MXU pushes / tanh interleave and fill the
    # serial h1 -> h2 -> h3 latency bubbles.
    for t in range(T):
        for c in range(num_chains):
            lo = c * cb
            xh_t = xh_all[lo:lo + cb, t, :]                   # (cb, H)
            # r2 / r3 depend only on the previous step's state -> scheduler
            # issues them off the critical chain automatically.
            h1[c] = jnp.tanh(xh_t + dot(h1[c], w11))
            h2[c] = jnp.tanh(dot(h1[c], w12) + dot(h2[c], w22) + b2)
            h3[c] = jnp.tanh(dot(h2[c], w23) + dot(h3[c], w33) + b3)

    # Final Linear + LogSoftmax(dim=1) on the LAST timestep only, written
    # straight into the per-chain output rows (no concat needed).
    for c in range(num_chains):
        lo = c * cb
        logits = dot(h3[c], w_ho) + b_ho                      # (cb, O)
        m = jnp.max(logits, axis=1, keepdims=True)
        shifted = logits - m
        out_ref[lo:lo + cb, :] = shifted - jnp.log(
            jnp.sum(jnp.exp(shifted), axis=1, keepdims=True))


def deeprnn_forward(x, params, *, batch_block=None, num_chains=None):
    """x: [B, T, input_size] float32 (B independent sequences).
    Returns log-softmax output [B, output_size] (row b == module forward of
    sequence b)."""
    B, T, input_size = x.shape
    output_size = params["w_ho"].shape[1]

    if batch_block is None:
        # One grid step for small/medium batches; cap the block at 256 rows
        # (fills MXU rows on v6e/v7x; VMEM is a non-issue at these sizes).
        batch_block = min(B, 256)
    batch_block = max(8, ((batch_block + 7) // 8) * 8)        # sublane aligned

    # Pad the batch so it tiles evenly; padded rows are harmless (zero-init
    # hidden state) and dropped after the call.
    B_pad = pl.cdiv(B, batch_block) * batch_block
    if B_pad != B:
        x = jnp.pad(x, ((0, B_pad - B), (0, 0), (0, 0)))

    if num_chains is None:
        num_chains = 2 if batch_block % 16 == 0 else 1

    args = (
        x,
        params["w_ih"],
        params["w11"], params["w12"], params["w22"],
        params["w23"], params["w33"],
        params["b_ih"] + params["b11"],                       # fused layer-1 bias
        params["b12"] + params["b22"],                        # fused layer-2 bias
        params["b23"] + params["b33"],                        # fused layer-3 bias
        params["w_ho"], params["b_ho"],
    )

    # Weights/biases: whole (2D) array resident in VMEM, constant block index
    # => no re-DMA across grid steps.
    const_specs = [pl.BlockSpec(a.shape, lambda b: (0, 0)) for a in args[1:]]
    in_specs = ([pl.BlockSpec((batch_block, T, input_size),
                              lambda b: (b, 0, 0))]
                + const_specs)
    out_spec = pl.BlockSpec((batch_block, output_size), lambda b: (b, 0))

    out = pl.pallas_call(
        functools.partial(deeprnn_kernel, num_chains),
        out_shape=jax.ShapeDtypeStruct((B_pad, output_size), jnp.float32),
        grid=(B_pad // batch_block,),
        in_specs=in_specs,
        out_specs=out_spec,
        compiler_params=pltpu.CompilerParams(
            dimension_semantics=("parallel",)),
    )(*args)

    return out[:B] if B_pad != B else out


def init_params(key, input_size, hidden_size, output_size):
    """Deterministic init mimicking nn.Linear default (uniform +/- 1/sqrt(fan_in)).
    Weights are stored transposed: [in_features, out_features]."""
    def linear(key, fan_in, fan_out):
        k_w, k_b = jax.random.split(key)
        bound = 1.0 / jnp.sqrt(fan_in)
        w = jax.random.uniform(k_w, (fan_in, fan_out), jnp.float32, -bound, bound)
        b = jax.random.uniform(k_b, (1, fan_out), jnp.float32, -bound, bound)
        return w, b

    keys = jax.random.split(key, 7)
    p = {}
    p["w_ih"], p["b_ih"] = linear(keys[0], input_size, hidden_size)
    p["w11"], p["b11"] = linear(keys[1], hidden_size, hidden_size)
    p["w12"], p["b12"] = linear(keys[2], hidden_size, hidden_size)
    p["w22"], p["b22"] = linear(keys[3], hidden_size, hidden_size)
    p["w23"], p["b23"] = linear(keys[4], hidden_size, hidden_size)
    p["w33"], p["b33"] = linear(keys[5], hidden_size, hidden_size)
    p["w_ho"], p["b_ho"] = linear(keys[6], hidden_size, output_size)
    return p


def deeprnn_reference(x, params):
    """Pure-JAX mirror of the PyTorch forward (unfused math), batched rowwise."""
    B, T, _ = x.shape
    H = params["w11"].shape[0]
    h1 = h2 = h3 = jnp.zeros((B, H), jnp.float32)
    for t in range(T):
        word = x[:, t, :]
        h1 = jnp.tanh(word @ params["w_ih"] + params["b_ih"]
                      + h1 @ params["w11"] + params["b11"])
        h2 = jnp.tanh(h1 @ params["w12"] + params["b12"]
                      + h2 @ params["w22"] + params["b22"])
        h3 = jnp.tanh(h2 @ params["w23"] + params["b23"]
                      + h3 @ params["w33"] + params["b33"])
    logits = h3 @ params["w_ho"] + params["b_ho"]
    return jax.nn.log_softmax(logits, axis=1)


if __name__ == "__main__":
    input_size = 8
    hidden_size = 32
    output_size = 16
    seq_len = 8
    batch = 16          # single grid step, 2 interleaved chains of 8 rows

    key = jax.random.PRNGKey(0)
    k_x, k_p = jax.random.split(key)
    x = jax.random.normal(k_x, (batch, seq_len, input_size), jnp.float32)
    params = init_params(k_p, input_size, hidden_size, output_size)

    out = deeprnn_forward(x, params)
    out = jax.block_until_ready(out)

    assert out.shape == (batch, output_size)
    # log-softmax rows should sum to ~1 in prob space
    assert jnp.allclose(jnp.sum(jnp.exp(out), axis=1), 1.0, atol=1e-4)
    # match the pure-JAX (PyTorch-equivalent) reference
    ref = deeprnn_reference(x, params)
    assert jnp.allclose(out, ref, atol=1e-4, rtol=1e-4)
    print("KERNEL_OK")
</pallas_src>

<mosaic_0001>
module attributes {stable_mosaic.version = 11 : i64} {
  func.func @deeprnn_kernel(%arg0: i32, %arg1: memref<16x8x8xf32, #tpu.memory_space<vmem>>, %arg2: memref<8x32xf32, #tpu.memory_space<vmem>>, %arg3: memref<32x32xf32, #tpu.memory_space<vmem>>, %arg4: memref<32x32xf32, #tpu.memory_space<vmem>>, %arg5: memref<32x32xf32, #tpu.memory_space<vmem>>, %arg6: memref<32x32xf32, #tpu.memory_space<vmem>>, %arg7: memref<32x32xf32, #tpu.memory_space<vmem>>, %arg8: memref<1x32xf32, #tpu.memory_space<vmem>>, %arg9: memref<1x32xf32, #tpu.memory_space<vmem>>, %arg10: memref<1x32xf32, #tpu.memory_space<vmem>>, %arg11: memref<32x16xf32, #tpu.memory_space<vmem>>, %arg12: memref<1x16xf32, #tpu.memory_space<vmem>>, %arg13: memref<16x16xf32, #tpu.memory_space<vmem>>) attributes {dimension_semantics = [#tpu.dimension_semantics<parallel>], iteration_bounds = array<i64: 1>, scalar_prefetch = 0 : i64, scratch_operands = 0 : i64, tpu.core_type = #tpu.core_type<tc>, window_params = [{transform_indices = @transform_0, window_bounds = array<i64: 16, 8, 8>}, {pipeline_mode = #tpu.pipeline_mode<synchronous>, transform_indices = @transform_1, window_bounds = array<i64: 8, 32>}, {pipeline_mode = #tpu.pipeline_mode<synchronous>, transform_indices = @transform_2, window_bounds = array<i64: 32, 32>}, {pipeline_mode = #tpu.pipeline_mode<synchronous>, transform_indices = @transform_3, window_bounds = array<i64: 32, 32>}, {pipeline_mode = #tpu.pipeline_mode<synchronous>, transform_indices = @transform_4, window_bounds = array<i64: 32, 32>}, {pipeline_mode = #tpu.pipeline_mode<synchronous>, transform_indices = @transform_5, window_bounds = array<i64: 32, 32>}, {pipeline_mode = #tpu.pipeline_mode<synchronous>, transform_indices = @transform_6, window_bounds = array<i64: 32, 32>}, {pipeline_mode = #tpu.pipeline_mode<synchronous>, transform_indices = @transform_7, window_bounds = array<i64: 1, 32>}, {pipeline_mode = #tpu.pipeline_mode<synchronous>, transform_indices = @transform_8, window_bounds = array<i64: 1, 32>}, {pipeline_mode = #tpu.pipeline_mode<synchronous>, transform_indices = @transform_9, window_bounds = array<i64: 1, 32>}, {pipeline_mode = #tpu.pipeline_mode<synchronous>, transform_indices = @transform_10, window_bounds = array<i64: 32, 16>}, {pipeline_mode = #tpu.pipeline_mode<synchronous>, transform_indices = @transform_11, window_bounds = array<i64: 1, 16>}, {transform_indices = @transform_12, window_bounds = array<i64: 16, 16>}]} {
    %c0 = arith.constant 0 : index
    %c0_0 = arith.constant 0 : index
    %0 = vector.load %arg3[%c0, %c0_0] : memref<32x32xf32, #tpu.memory_space<vmem>>, vector<32x32xf32>
    %c0_1 = arith.constant 0 : index
    %c0_2 = arith.constant 0 : index
    %1 = vector.load %arg4[%c0_1, %c0_2] : memref<32x32xf32, #tpu.memory_space<vmem>>, vector<32x32xf32>
    %c0_3 = arith.constant 0 : index
    %c0_4 = arith.constant 0 : index
    %2 = vector.load %arg5[%c0_3, %c0_4] : memref<32x32xf32, #tpu.memory_space<vmem>>, vector<32x32xf32>
    %c0_5 = arith.constant 0 : index
    %c0_6 = arith.constant 0 : index
    %3 = vector.load %arg6[%c0_5, %c0_6] : memref<32x32xf32, #tpu.memory_space<vmem>>, vector<32x32xf32>
    %c0_7 = arith.constant 0 : index
    %c0_8 = arith.constant 0 : index
    %4 = vector.load %arg7[%c0_7, %c0_8] : memref<32x32xf32, #tpu.memory_space<vmem>>, vector<32x32xf32>
    %c0_9 = arith.constant 0 : index
    %c0_10 = arith.constant 0 : index
    %5 = vector.load %arg11[%c0_9, %c0_10] : memref<32x16xf32, #tpu.memory_space<vmem>>, vector<32x16xf32>
    %c0_11 = arith.constant 0 : index
    %c0_12 = arith.constant 0 : index
    %6 = vector.load %arg9[%c0_11, %c0_12] : memref<1x32xf32, #tpu.memory_space<vmem>>, vector<1x32xf32>
    %7 = vector.shape_cast %6 : vector<1x32xf32> to vector<1x32xf32>
    %8 = vector.broadcast %7 : vector<1x32xf32> to vector<8x32xf32>
    %c0_13 = arith.constant 0 : index
    %c0_14 = arith.constant 0 : index
    %9 = vector.load %arg10[%c0_13, %c0_14] : memref<1x32xf32, #tpu.memory_space<vmem>>, vector<1x32xf32>
    %10 = vector.shape_cast %9 : vector<1x32xf32> to vector<1x32xf32>
    %11 = vector.broadcast %10 : vector<1x32xf32> to vector<8x32xf32>
    %c0_15 = arith.constant 0 : index
    %c0_16 = arith.constant 0 : index
    %12 = vector.load %arg12[%c0_15, %c0_16] : memref<1x16xf32, #tpu.memory_space<vmem>>, vector<1x16xf32>
    %13 = vector.shape_cast %12 : vector<1x16xf32> to vector<1x16xf32>
    %14 = vector.broadcast %13 : vector<1x16xf32> to vector<8x16xf32>
    %c0_17 = arith.constant 0 : index
    %c0_18 = arith.constant 0 : index
    %c0_19 = arith.constant 0 : index
    %15 = vector.load %arg1[%c0_17, %c0_18, %c0_19] : memref<16x8x8xf32, #tpu.memory_space<vmem>>, vector<16x8x8xf32>
    %16 = vector.shape_cast %15 : vector<16x8x8xf32> to vector<128x8xf32>
    %c0_20 = arith.constant 0 : index
    %c0_21 = arith.constant 0 : index
    %17 = vector.load %arg2[%c0_20, %c0_21] : memref<8x32xf32, #tpu.memory_space<vmem>>, vector<8x32xf32>
    %cst = arith.constant dense<0.000000e+00> : vector<128x32xf32>
    %18 = tpu.matmul %16, %17, %cst {dimension_numbers = #tpu.dot_dimension_numbers<[1], [0], [0], [1], [0, 0, 1, 1], [], []>} : vector<128x8xf32>, vector<8x32xf32>, vector<128x32xf32> -> vector<128x32xf32>
    %c0_22 = arith.constant 0 : index
    %c0_23 = arith.constant 0 : index
    %19 = vector.load %arg8[%c0_22, %c0_23] : memref<1x32xf32, #tpu.memory_space<vmem>>, vector<1x32xf32>
    %20 = vector.broadcast %19 : vector<1x32xf32> to vector<128x32xf32>
    %21 = arith.addf %18, %20 : vector<128x32xf32>
    %22 = vector.shape_cast %21 : vector<128x32xf32> to vector<16x8x32xf32>
    %cst_24 = arith.constant 0.000000e+00 : f32
    %23 = vector.broadcast %cst_24 : f32 to vector<8x32xf32>
    %24 = vector.extract_strided_slice %22 {offsets = [0, 0, 0], sizes = [8, 1, 32], strides = [1, 1, 1]} : vector<16x8x32xf32> to vector<8x1x32xf32>
    %25 = vector.shape_cast %24 : vector<8x1x32xf32> to vector<8x32xf32>
    %cst_25 = arith.constant dense<0.000000e+00> : vector<8x32xf32>
    %26 = tpu.matmul %23, %0, %cst_25 {dimension_numbers = #tpu.dot_dimension_numbers<[1], [0], [0], [1], [0, 0, 1, 1], [], []>} : vector<8x32xf32>, vector<32x32xf32>, vector<8x32xf32> -> vector<8x32xf32>
    %27 = arith.addf %25, %26 : vector<8x32xf32>
    %28 = math.tanh %27 : vector<8x32xf32>
    %cst_26 = arith.constant dense<0.000000e+00> : vector<8x32xf32>
    %29 = tpu.matmul %28, %1, %cst_26 {dimension_numbers = #tpu.dot_dimension_numbers<[1], [0], [0], [1], [0, 0, 1, 1], [], []>} : vector<8x32xf32>, vector<32x32xf32>, vector<8x32xf32> -> vector<8x32xf32>
    %cst_27 = arith.constant dense<0.000000e+00> : vector<8x32xf32>
    %30 = tpu.matmul %23, %2, %cst_27 {dimension_numbers = #tpu.dot_dimension_numbers<[1], [0], [0], [1], [0, 0, 1, 1], [], []>} : vector<8x32xf32>, vector<32x32xf32>, vector<8x32xf32> -> vector<8x32xf32>
    %31 = arith.addf %29, %30 : vector<8x32xf32>
    %32 = arith.addf %31, %8 : vector<8x32xf32>
    %33 = math.tanh %32 : vector<8x32xf32>
    %cst_28 = arith.constant dense<0.000000e+00> : vector<8x32xf32>
    %34 = tpu.matmul %33, %3, %cst_28 {dimension_numbers = #tpu.dot_dimension_numbers<[1], [0], [0], [1], [0, 0, 1, 1], [], []>} : vector<8x32xf32>, vector<32x32xf32>, vector<8x32xf32> -> vector<8x32xf32>
    %cst_29 = arith.constant dense<0.000000e+00> : vector<8x32xf32>
    %35 = tpu.matmul %23, %4, %cst_29 {dimension_numbers = #tpu.dot_dimension_numbers<[1], [0], [0], [1], [0, 0, 1, 1], [], []>} : vector<8x32xf32>, vector<32x32xf32>, vector<8x32xf32> -> vector<8x32xf32>
    %36 = arith.addf %34, %35 : vector<8x32xf32>
    %37 = arith.addf %36, %11 : vector<8x32xf32>
    %38 = math.tanh %37 : vector<8x32xf32>
    %39 = vector.extract_strided_slice %22 {offsets = [8, 0, 0], sizes = [8, 1, 32], strides = [1, 1, 1]} : vector<16x8x32xf32> to vector<8x1x32xf32>
    %40 = vector.shape_cast %39 : vector<8x1x32xf32> to vector<8x32xf32>
    %cst_30 = arith.constant dense<0.000000e+00> : vector<8x32xf32>
    %41 = tpu.matmul %23, %0, %cst_30 {dimension_numbers = #tpu.dot_dimension_numbers<[1], [0], [0], [1], [0, 0, 1, 1], [], []>} : vector<8x32xf32>, vector<32x32xf32>, vector<8x32xf32> -> vector<8x32xf32>
    %42 = arith.addf %40, %41 : vector<8x32xf32>
    %43 = math.tanh %42 : vector<8x32xf32>
    %cst_31 = arith.constant dense<0.000000e+00> : vector<8x32xf32>
    %44 = tpu.matmul %43, %1, %cst_31 {dimension_numbers = #tpu.dot_dimension_numbers<[1], [0], [0], [1], [0, 0, 1, 1], [], []>} : vector<8x32xf32>, vector<32x32xf32>, vector<8x32xf32> -> vector<8x32xf32>
    %cst_32 = arith.constant dense<0.000000e+00> : vector<8x32xf32>
    %45 = tpu.matmul %23, %2, %cst_32 {dimension_numbers = #tpu.dot_dimension_numbers<[1], [0], [0], [1], [0, 0, 1, 1], [], []>} : vector<8x32xf32>, vector<32x32xf32>, vector<8x32xf32> -> vector<8x32xf32>
    %46 = arith.addf %44, %45 : vector<8x32xf32>
    %47 = arith.addf %46, %8 : vector<8x32xf32>
    %48 = math.tanh %47 : vector<8x32xf32>
    %cst_33 = arith.constant dense<0.000000e+00> : vector<8x32xf32>
    %49 = tpu.matmul %48, %3, %cst_33 {dimension_numbers = #tpu.dot_dimension_numbers<[1], [0], [0], [1], [0, 0, 1, 1], [], []>} : vector<8x32xf32>, vector<32x32xf32>, vector<8x32xf32> -> vector<8x32xf32>
    %cst_34 = arith.constant dense<0.000000e+00> : vector<8x32xf32>
    %50 = tpu.matmul %23, %4, %cst_34 {dimension_numbers = #tpu.dot_dimension_numbers<[1], [0], [0], [1], [0, 0, 1, 1], [], []>} : vector<8x32xf32>, vector<32x32xf32>, vector<8x32xf32> -> vector<8x32xf32>
    %51 = arith.addf %49, %50 : vector<8x32xf32>
    %52 = arith.addf %51, %11 : vector<8x32xf32>
    %53 = math.tanh %52 : vector<8x32xf32>
    %54 = vector.extract_strided_slice %22 {offsets = [0, 1, 0], sizes = [8, 1, 32], strides = [1, 1, 1]} : vector<16x8x32xf32> to vector<8x1x32xf32>
    %55 = vector.shape_cast %54 : vector<8x1x32xf32> to vector<8x32xf32>
    %cst_35 = arith.constant dense<0.000000e+00> : vector<8x32xf32>
    %56 = tpu.matmul %28, %0, %cst_35 {dimension_numbers = #tpu.dot_dimension_numbers<[1], [0], [0], [1], [0, 0, 1, 1], [], []>} : vector<8x32xf32>, vector<32x32xf32>, vector<8x32xf32> -> vector<8x32xf32>
    %57 = arith.addf %55, %56 : vector<8x32xf32>
    %58 = math.tanh %57 : vector<8x32xf32>
    %cst_36 = arith.constant dense<0.000000e+00> : vector<8x32xf32>
    %59 = tpu.matmul %58, %1, %cst_36 {dimension_numbers = #tpu.dot_dimension_numbers<[1], [0], [0], [1], [0, 0, 1, 1], [], []>} : vector<8x32xf32>, vector<32x32xf32>, vector<8x32xf32> -> vector<8x32xf32>
    %cst_37 = arith.constant dense<0.000000e+00> : vector<8x32xf32>
    %60 = tpu.matmul %33, %2, %cst_37 {dimension_numbers = #tpu.dot_dimension_numbers<[1], [0], [0], [1], [0, 0, 1, 1], [], []>} : vector<8x32xf32>, vector<32x32xf32>, vector<8x32xf32> -> vector<8x32xf32>
    %61 = arith.addf %59, %60 : vector<8x32xf32>
    %62 = arith.addf %61, %8 : vector<8x32xf32>
    %63 = math.tanh %62 : vector<8x32xf32>
    %cst_38 = arith.constant dense<0.000000e+00> : vector<8x32xf32>
    %64 = tpu.matmul %63, %3, %cst_38 {dimension_numbers = #tpu.dot_dimension_numbers<[1], [0], [0], [1], [0, 0, 1, 1], [], []>} : vector<8x32xf32>, vector<32x32xf32>, vector<8x32xf32> -> vector<8x32xf32>
    %cst_39 = arith.constant dense<0.000000e+00> : vector<8x32xf32>
    %65 = tpu.matmul %38, %4, %cst_39 {dimension_numbers = #tpu.dot_dimension_numbers<[1], [0], [0], [1], [0, 0, 1, 1], [], []>} : vector<8x32xf32>, vector<32x32xf32>, vector<8x32xf32> -> vector<8x32xf32>
    %66 = arith.addf %64, %65 : vector<8x32xf32>
    %67 = arith.addf %66, %11 : vector<8x32xf32>
    %68 = math.tanh %67 : vector<8x32xf32>
    %69 = vector.extract_strided_slice %22 {offsets = [8, 1, 0], sizes = [8, 1, 32], strides = [1, 1, 1]} : vector<16x8x32xf32> to vector<8x1x32xf32>
    %70 = vector.shape_cast %69 : vector<8x1x32xf32> to vector<8x32xf32>
    %cst_40 = arith.constant dense<0.000000e+00> : vector<8x32xf32>
    %71 = tpu.matmul %43, %0, %cst_40 {dimension_numbers = #tpu.dot_dimension_numbers<[1], [0], [0], [1], [0, 0, 1, 1], [], []>} : vector<8x32xf32>, vector<32x32xf32>, vector<8x32xf32> -> vector<8x32xf32>
    %72 = arith.addf %70, %71 : vector<8x32xf32>
    %73 = math.tanh %72 : vector<8x32xf32>
    %cst_41 = arith.constant dense<0.000000e+00> : vector<8x32xf32>
    %74 = tpu.matmul %73, %1, %cst_41 {dimension_numbers = #tpu.dot_dimension_numbers<[1], [0], [0], [1], [0, 0, 1, 1], [], []>} : vector<8x32xf32>, vector<32x32xf32>, vector<8x32xf32> -> vector<8x32xf32>
    %cst_42 = arith.constant dense<0.000000e+00> : vector<8x32xf32>
    %75 = tpu.matmul %48, %2, %cst_42 {dimension_numbers = #tpu.dot_dimension_numbers<[1], [0], [0], [1], [0, 0, 1, 1], [], []>} : vector<8x32xf32>, vector<32x32xf32>, vector<8x32xf32> -> vector<8x32xf32>
    %76 = arith.addf %74, %75 : vector<8x32xf32>
    %77 = arith.addf %76, %8 : vector<8x32xf32>
    %78 = math.tanh %77 : vector<8x32xf32>
    %cst_43 = arith.constant dense<0.000000e+00> : vector<8x32xf32>
    %79 = tpu.matmul %78, %3, %cst_43 {dimension_numbers = #tpu.dot_dimension_numbers<[1], [0], [0], [1], [0, 0, 1, 1], [], []>} : vector<8x32xf32>, vector<32x32xf32>, vector<8x32xf32> -> vector<8x32xf32>
    %cst_44 = arith.constant dense<0.000000e+00> : vector<8x32xf32>
    %80 = tpu.matmul %53, %4, %cst_44 {dimension_numbers = #tpu.dot_dimension_numbers<[1], [0], [0], [1], [0, 0, 1, 1], [], []>} : vector<8x32xf32>, vector<32x32xf32>, vector<8x32xf32> -> vector<8x32xf32>
    %81 = arith.addf %79, %80 : vector<8x32xf32>
    %82 = arith.addf %81, %11 : vector<8x32xf32>
    %83 = math.tanh %82 : vector<8x32xf32>
    %84 = vector.extract_strided_slice %22 {offsets = [0, 2, 0], sizes = [8, 1, 32], strides = [1, 1, 1]} : vector<16x8x32xf32> to vector<8x1x32xf32>
    %85 = vector.shape_cast %84 : vector<8x1x32xf32> to vector<8x32xf32>
    %cst_45 = arith.constant dense<0.000000e+00> : vector<8x32xf32>
    %86 = tpu.matmul %58, %0, %cst_45 {dimension_numbers = #tpu.dot_dimension_numbers<[1], [0], [0], [1], [0, 0, 1, 1], [], []>} : vector<8x32xf32>, vector<32x32xf32>, vector<8x32xf32> -> vector<8x32xf32>
    %87 = arith.addf %85, %86 : vector<8x32xf32>
    %88 = math.tanh %87 : vector<8x32xf32>
    %cst_46 = arith.constant dense<0.000000e+00> : vector<8x32xf32>
    %89 = tpu.matmul %88, %1, %cst_46 {dimension_numbers = #tpu.dot_dimension_numbers<[1], [0], [0], [1], [0, 0, 1, 1], [], []>} : vector<8x32xf32>, vector<32x32xf32>, vector<8x32xf32> -> vector<8x32xf32>
    %cst_47 = arith.constant dense<0.000000e+00> : vector<8x32xf32>
    %90 = tpu.matmul %63, %2, %cst_47 {dimension_numbers = #tpu.dot_dimension_numbers<[1], [0], [0], [1], [0, 0, 1, 1], [], []>} : vector<8x32xf32>, vector<32x32xf32>, vector<8x32xf32> -> vector<8x32xf32>
    %91 = arith.addf %89, %90 : vector<8x32xf32>
    %92 = arith.addf %91, %8 : vector<8x32xf32>
    %93 = math.tanh %92 : vector<8x32xf32>
    %cst_48 = arith.constant dense<0.000000e+00> : vector<8x32xf32>
    %94 = tpu.matmul %93, %3, %cst_48 {dimension_numbers = #tpu.dot_dimension_numbers<[1], [0], [0], [1], [0, 0, 1, 1], [], []>} : vector<8x32xf32>, vector<32x32xf32>, vector<8x32xf32> -> vector<8x32xf32>
    %cst_49 = arith.constant dense<0.000000e+00> : vector<8x32xf32>
    %95 = tpu.matmul %68, %4, %cst_49 {dimension_numbers = #tpu.dot_dimension_numbers<[1], [0], [0], [1], [0, 0, 1, 1], [], []>} : vector<8x32xf32>, vector<32x32xf32>, vector<8x32xf32> -> vector<8x32xf32>
    %96 = arith.addf %94, %95 : vector<8x32xf32>
    %97 = arith.addf %96, %11 : vector<8x32xf32>
    %98 = math.tanh %97 : vector<8x32xf32>
    %99 = vector.extract_strided_slice %22 {offsets = [8, 2, 0], sizes = [8, 1, 32], strides = [1, 1, 1]} : vector<16x8x32xf32> to vector<8x1x32xf32>
    %100 = vector.shape_cast %99 : vector<8x1x32xf32> to vector<8x32xf32>
    %cst_50 = arith.constant dense<0.000000e+00> : vector<8x32xf32>
    %101 = tpu.matmul %73, %0, %cst_50 {dimension_numbers = #tpu.dot_dimension_numbers<[1], [0], [0], [1], [0, 0, 1, 1], [], []>} : vector<8x32xf32>, vector<32x32xf32>, vector<8x32xf32> -> vector<8x32xf32>
    %102 = arith.addf %100, %101 : vector<8x32xf32>
    %103 = math.tanh %102 : vector<8x32xf32>
    %cst_51 = arith.constant dense<0.000000e+00> : vector<8x32xf32>
    %104 = tpu.matmul %103, %1, %cst_51 {dimension_numbers = #tpu.dot_dimension_numbers<[1], [0], [0], [1], [0, 0, 1, 1], [], []>} : vector<8x32xf32>, vector<32x32xf32>, vector<8x32xf32> -> vector<8x32xf32>
    %cst_52 = arith.constant dense<0.000000e+00> : vector<8x32xf32>
    %105 = tpu.matmul %78, %2, %cst_52 {dimension_numbers = #tpu.dot_dimension_numbers<[1], [0], [0], [1], [0, 0, 1, 1], [], []>} : vector<8x32xf32>, vector<32x32xf32>, vector<8x32xf32> -> vector<8x32xf32>
    %106 = arith.addf %104, %105 : vector<8x32xf32>
    %107 = arith.addf %106, %8 : vector<8x32xf32>
    %108 = math.tanh %107 : vector<8x32xf32>
    %cst_53 = arith.constant dense<0.000000e+00> : vector<8x32xf32>
    %109 = tpu.matmul %108, %3, %cst_53 {dimension_numbers = #tpu.dot_dimension_numbers<[1], [0], [0], [1], [0, 0, 1, 1], [], []>} : vector<8x32xf32>, vector<32x32xf32>, vector<8x32xf32> -> vector<8x32xf32>
    %cst_54 = arith.constant dense<0.000000e+00> : vector<8x32xf32>
    %110 = tpu.matmul %83, %4, %cst_54 {dimension_numbers = #tpu.dot_dimension_numbers<[1], [0], [0], [1], [0, 0, 1, 1], [], []>} : vector<8x32xf32>, vector<32x32xf32>, vector<8x32xf32> -> vector<8x32xf32>
    %111 = arith.addf %109, %110 : vector<8x32xf32>
    %112 = arith.addf %111, %11 : vector<8x32xf32>
    %113 = math.tanh %112 : vector<8x32xf32>
    %114 = vector.extract_strided_slice %22 {offsets = [0, 3, 0], sizes = [8, 1, 32], strides = [1, 1, 1]} : vector<16x8x32xf32> to vector<8x1x32xf32>
    %115 = vector.shape_cast %114 : vector<8x1x32xf32> to vector<8x32xf32>
    %cst_55 = arith.constant dense<0.000000e+00> : vector<8x32xf32>
    %116 = tpu.matmul %88, %0, %cst_55 {dimension_numbers = #tpu.dot_dimension_numbers<[1], [0], [0], [1], [0, 0, 1, 1], [], []>} : vector<8x32xf32>, vector<32x32xf32>, vector<8x32xf32> -> vector<8x32xf32>
    %117 = arith.addf %115, %116 : vector<8x32xf32>
    %118 = math.tanh %117 : vector<8x32xf32>
    %cst_56 = arith.constant dense<0.000000e+00> : vector<8x32xf32>
    %119 = tpu.matmul %118, %1, %cst_56 {dimension_numbers = #tpu.dot_dimension_numbers<[1], [0], [0], [1], [0, 0, 1, 1], [], []>} : vector<8x32xf32>, vector<32x32xf32>, vector<8x32xf32> -> vector<8x32xf32>
    %cst_57 = arith.constant dense<0.000000e+00> : vector<8x32xf32>
    %120 = tpu.matmul %93, %2, %cst_57 {dimension_numbers = #tpu.dot_dimension_numbers<[1], [0], [0], [1], [0, 0, 1, 1], [], []>} : vector<8x32xf32>, vector<32x32xf32>, vector<8x32xf32> -> vector<8x32xf32>
    %121 = arith.addf %119, %120 : vector<8x32xf32>
    %122 = arith.addf %121, %8 : vector<8x32xf32>
    %123 = math.tanh %122 : vector<8x32xf32>
    %cst_58 = arith.constant dense<0.000000e+00> : vector<8x32xf32>
    %124 = tpu.matmul %123, %3, %cst_58 {dimension_numbers = #tpu.dot_dimension_numbers<[1], [0], [0], [1], [0, 0, 1, 1], [], []>} : vector<8x32xf32>, vector<32x32xf32>, vector<8x32xf32> -> vector<8x32xf32>
    %cst_59 = arith.constant dense<0.000000e+00> : vector<8x32xf32>
    %125 = tpu.matmul %98, %4, %cst_59 {dimension_numbers = #tpu.dot_dimension_numbers<[1], [0], [0], [1], [0, 0, 1, 1], [], []>} : vector<8x32xf32>, vector<32x32xf32>, vector<8x32xf32> -> vector<8x32xf32>
    %126 = arith.addf %124, %125 : vector<8x32xf32>
    %127 = arith.addf %126, %11 : vector<8x32xf32>
    %128 = math.tanh %127 : vector<8x32xf32>
    %129 = vector.extract_strided_slice %22 {offsets = [8, 3, 0], sizes = [8, 1, 32], strides = [1, 1, 1]} : vector<16x8x32xf32> to vector<8x1x32xf32>
    %130 = vector.shape_cast %129 : vector<8x1x32xf32> to vector<8x32xf32>
    %cst_60 = arith.constant dense<0.000000e+00> : vector<8x32xf32>
    %131 = tpu.matmul %103, %0, %cst_60 {dimension_numbers = #tpu.dot_dimension_numbers<[1], [0], [0], [1], [0, 0, 1, 1], [], []>} : vector<8x32xf32>, vector<32x32xf32>, vector<8x32xf32> -> vector<8x32xf32>
    %132 = arith.addf %130, %131 : vector<8x32xf32>
    %133 = math.tanh %132 : vector<8x32xf32>
    %cst_61 = arith.constant dense<0.000000e+00> : vector<8x32xf32>
    %134 = tpu.matmul %133, %1, %cst_61 {dimension_numbers = #tpu.dot_dimension_numbers<[1], [0], [0], [1], [0, 0, 1, 1], [], []>} : vector<8x32xf32>, vector<32x32xf32>, vector<8x32xf32> -> vector<8x32xf32>
    %cst_62 = arith.constant dense<0.000000e+00> : vector<8x32xf32>
    %135 = tpu.matmul %108, %2, %cst_62 {dimension_numbers = #tpu.dot_dimension_numbers<[1], [0], [0], [1], [0, 0, 1, 1], [], []>} : vector<8x32xf32>, vector<32x32xf32>, vector<8x32xf32> -> vector<8x32xf32>
    %136 = arith.addf %134, %135 : vector<8x32xf32>
    %137 = arith.addf %136, %8 : vector<8x32xf32>
    %138 = math.tanh %137 : vector<8x32xf32>
    %cst_63 = arith.constant dense<0.000000e+00> : vector<8x32xf32>
    %139 = tpu.matmul %138, %3, %cst_63 {dimension_numbers = #tpu.dot_dimension_numbers<[1], [0], [0], [1], [0, 0, 1, 1], [], []>} : vector<8x32xf32>, vector<32x32xf32>, vector<8x32xf32> -> vector<8x32xf32>
    %cst_64 = arith.constant dense<0.000000e+00> : vector<8x32xf32>
    %140 = tpu.matmul %113, %4, %cst_64 {dimension_numbers = #tpu.dot_dimension_numbers<[1], [0], [0], [1], [0, 0, 1, 1], [], []>} : vector<8x32xf32>, vector<32x32xf32>, vector<8x32xf32> -> vector<8x32xf32>
    %141 = arith.addf %139, %140 : vector<8x32xf32>
    %142 = arith.addf %141, %11 : vector<8x32xf32>
    %143 = math.tanh %142 : vector<8x32xf32>
    %144 = vector.extract_strided_slice %22 {offsets = [0, 4, 0], sizes = [8, 1, 32], strides = [1, 1, 1]} : vector<16x8x32xf32> to vector<8x1x32xf32>
    %145 = vector.shape_cast %144 : vector<8x1x32xf32> to vector<8x32xf32>
    %cst_65 = arith.constant dense<0.000000e+00> : vector<8x32xf32>
    %146 = tpu.matmul %118, %0, %cst_65 {dimension_numbers = #tpu.dot_dimension_numbers<[1], [0], [0], [1], [0, 0, 1, 1], [], []>} : vector<8x32xf32>, vector<32x32xf32>, vector<8x32xf32> -> vector<8x32xf32>
    %147 = arith.addf %145, %146 : vector<8x32xf32>
    %148 = math.tanh %147 : vector<8x32xf32>
    %cst_66 = arith.constant dense<0.000000e+00> : vector<8x32xf32>
    %149 = tpu.matmul %148, %1, %cst_66 {dimension_numbers = #tpu.dot_dimension_numbers<[1], [0], [0], [1], [0, 0, 1, 1], [], []>} : vector<8x32xf32>, vector<32x32xf32>, vector<8x32xf32> -> vector<8x32xf32>
    %cst_67 = arith.constant dense<0.000000e+00> : vector<8x32xf32>
    %150 = tpu.matmul %123, %2, %cst_67 {dimension_numbers = #tpu.dot_dimension_numbers<[1], [0], [0], [1], [0, 0, 1, 1], [], []>} : vector<8x32xf32>, vector<32x32xf32>, vector<8x32xf32> -> vector<8x32xf32>
    %151 = arith.addf %149, %150 : vector<8x32xf32>
    %152 = arith.addf %151, %8 : vector<8x32xf32>
    %153 = math.tanh %152 : vector<8x32xf32>
    %cst_68 = arith.constant dense<0.000000e+00> : vector<8x32xf32>
    %154 = tpu.matmul %153, %3, %cst_68 {dimension_numbers = #tpu.dot_dimension_numbers<[1], [0], [0], [1], [0, 0, 1, 1], [], []>} : vector<8x32xf32>, vector<32x32xf32>, vector<8x32xf32> -> vector<8x32xf32>
    %cst_69 = arith.constant dense<0.000000e+00> : vector<8x32xf32>
    %155 = tpu.matmul %128, %4, %cst_69 {dimension_numbers = #tpu.dot_dimension_numbers<[1], [0], [0], [1], [0, 0, 1, 1], [], []>} : vector<8x32xf32>, vector<32x32xf32>, vector<8x32xf32> -> vector<8x32xf32>
    %156 = arith.addf %154, %155 : vector<8x32xf32>
    %157 = arith.addf %156, %11 : vector<8x32xf32>
    %158 = math.tanh %157 : vector<8x32xf32>
    %159 = vector.extract_strided_slice %22 {offsets = [8, 4, 0], sizes = [8, 1, 32], strides = [1, 1, 1]} : vector<16x8x32xf32> to vector<8x1x32xf32>
    %160 = vector.shape_cast %159 : vector<8x1x32xf32> to vector<8x32xf32>
    %cst_70 = arith.constant dense<0.000000e+00> : vector<8x32xf32>
    %161 = tpu.matmul %133, %0, %cst_70 {dimension_numbers = #tpu.dot_dimension_numbers<[1], [0], [0], [1], [0, 0, 1, 1], [], []>} : vector<8x32xf32>, vector<32x32xf32>, vector<8x32xf32> -> vector<8x32xf32>
    %162 = arith.addf %160, %161 : vector<8x32xf32>
    %163 = math.tanh %162 : vector<8x32xf32>
    %cst_71 = arith.constant dense<0.000000e+00> : vector<8x32xf32>
    %164 = tpu.matmul %163, %1, %cst_71 {dimension_numbers = #tpu.dot_dimension_numbers<[1], [0], [0], [1], [0, 0, 1, 1], [], []>} : vector<8x32xf32>, vector<32x32xf32>, vector<8x32xf32> -> vector<8x32xf32>
    %cst_72 = arith.constant dense<0.000000e+00> : vector<8x32xf32>
    %165 = tpu.matmul %138, %2, %cst_72 {dimension_numbers = #tpu.dot_dimension_numbers<[1], [0], [0], [1], [0, 0, 1, 1], [], []>} : vector<8x32xf32>, vector<32x32xf32>, vector<8x32xf32> -> vector<8x32xf32>
    %166 = arith.addf %164, %165 : vector<8x32xf32>
    %167 = arith.addf %166, %8 : vector<8x32xf32>
    %168 = math.tanh %167 : vector<8x32xf32>
    %cst_73 = arith.constant dense<0.000000e+00> : vector<8x32xf32>
    %169 = tpu.matmul %168, %3, %cst_73 {dimension_numbers = #tpu.dot_dimension_numbers<[1], [0], [0], [1], [0, 0, 1, 1], [], []>} : vector<8x32xf32>, vector<32x32xf32>, vector<8x32xf32> -> vector<8x32xf32>
    %cst_74 = arith.constant dense<0.000000e+00> : vector<8x32xf32>
    %170 = tpu.matmul %143, %4, %cst_74 {dimension_numbers = #tpu.dot_dimension_numbers<[1], [0], [0], [1], [0, 0, 1, 1], [], []>} : vector<8x32xf32>, vector<32x32xf32>, vector<8x32xf32> -> vector<8x32xf32>
    %171 = arith.addf %169, %170 : vector<8x32xf32>
    %172 = arith.addf %171, %11 : vector<8x32xf32>
    %173 = math.tanh %172 : vector<8x32xf32>
    %174 = vector.extract_strided_slice %22 {offsets = [0, 5, 0], sizes = [8, 1, 32], strides = [1, 1, 1]} : vector<16x8x32xf32> to vector<8x1x32xf32>
    %175 = vector.shape_cast %174 : vector<8x1x32xf32> to vector<8x32xf32>
    %cst_75 = arith.constant dense<0.000000e+00> : vector<8x32xf32>
    %176 = tpu.matmul %148, %0, %cst_75 {dimension_numbers = #tpu.dot_dimension_numbers<[1], [0], [0], [1], [0, 0, 1, 1], [], []>} : vector<8x32xf32>, vector<32x32xf32>, vector<8x32xf32> -> vector<8x32xf32>
    %177 = arith.addf %175, %176 : vector<8x32xf32>
    %178 = math.tanh %177 : vector<8x32xf32>
    %cst_76 = arith.constant dense<0.000000e+00> : vector<8x32xf32>
    %179 = tpu.matmul %178, %1, %cst_76 {dimension_numbers = #tpu.dot_dimension_numbers<[1], [0], [0], [1], [0, 0, 1, 1], [], []>} : vector<8x32xf32>, vector<32x32xf32>, vector<8x32xf32> -> vector<8x32xf32>
    %cst_77 = arith.constant dense<0.000000e+00> : vector<8x32xf32>
    %180 = tpu.matmul %153, %2, %cst_77 {dimension_numbers = #tpu.dot_dimension_numbers<[1], [0], [0], [1], [0, 0, 1, 1], [], []>} : vector<8x32xf32>, vector<32x32xf32>, vector<8x32xf32> -> vector<8x32xf32>
    %181 = arith.addf %179, %180 : vector<8x32xf32>
    %182 = arith.addf %181, %8 : vector<8x32xf32>
    %183 = math.tanh %182 : vector<8x32xf32>
    %cst_78 = arith.constant dense<0.000000e+00> : vector<8x32xf32>
    %184 = tpu.matmul %183, %3, %cst_78 {dimension_numbers = #tpu.dot_dimension_numbers<[1], [0], [0], [1], [0, 0, 1, 1], [], []>} : vector<8x32xf32>, vector<32x32xf32>, vector<8x32xf32> -> vector<8x32xf32>
    %cst_79 = arith.constant dense<0.000000e+00> : vector<8x32xf32>
    %185 = tpu.matmul %158, %4, %cst_79 {dimension_numbers = #tpu.dot_dimension_numbers<[1], [0], [0], [1], [0, 0, 1, 1], [], []>} : vector<8x32xf32>, vector<32x32xf32>, vector<8x32xf32> -> vector<8x32xf32>
    %186 = arith.addf %184, %185 : vector<8x32xf32>
    %187 = arith.addf %186, %11 : vector<8x32xf32>
    %188 = math.tanh %187 : vector<8x32xf32>
    %189 = vector.extract_strided_slice %22 {offsets = [8, 5, 0], sizes = [8, 1, 32], strides = [1, 1, 1]} : vector<16x8x32xf32> to vector<8x1x32xf32>
    %190 = vector.shape_cast %189 : vector<8x1x32xf32> to vector<8x32xf32>
    %cst_80 = arith.constant dense<0.000000e+00> : vector<8x32xf32>
    %191 = tpu.matmul %163, %0, %cst_80 {dimension_numbers = #tpu.dot_dimension_numbers<[1], [0], [0], [1], [0, 0, 1, 1], [], []>} : vector<8x32xf32>, vector<32x32xf32>, vector<8x32xf32> -> vector<8x32xf32>
    %192 = arith.addf %190, %191 : vector<8x32xf32>
    %193 = math.tanh %192 : vector<8x32xf32>
    %cst_81 = arith.constant dense<0.000000e+00> : vector<8x32xf32>
    %194 = tpu.matmul %193, %1, %cst_81 {dimension_numbers = #tpu.dot_dimension_numbers<[1], [0], [0], [1], [0, 0, 1, 1], [], []>} : vector<8x32xf32>, vector<32x32xf32>, vector<8x32xf32> -> vector<8x32xf32>
    %cst_82 = arith.constant dense<0.000000e+00> : vector<8x32xf32>
    %195 = tpu.matmul %168, %2, %cst_82 {dimension_numbers = #tpu.dot_dimension_numbers<[1], [0], [0], [1], [0, 0, 1, 1], [], []>} : vector<8x32xf32>, vector<32x32xf32>, vector<8x32xf32> -> vector<8x32xf32>
    %196 = arith.addf %194, %195 : vector<8x32xf32>
    %197 = arith.addf %196, %8 : vector<8x32xf32>
    %198 = math.tanh %197 : vector<8x32xf32>
    %cst_83 = arith.constant dense<0.000000e+00> : vector<8x32xf32>
    %199 = tpu.matmul %198, %3, %cst_83 {dimension_numbers = #tpu.dot_dimension_numbers<[1], [0], [0], [1], [0, 0, 1, 1], [], []>} : vector<8x32xf32>, vector<32x32xf32>, vector<8x32xf32> -> vector<8x32xf32>
    %cst_84 = arith.constant dense<0.000000e+00> : vector<8x32xf32>
    %200 = tpu.matmul %173, %4, %cst_84 {dimension_numbers = #tpu.dot_dimension_numbers<[1], [0], [0], [1], [0, 0, 1, 1], [], []>} : vector<8x32xf32>, vector<32x32xf32>, vector<8x32xf32> -> vector<8x32xf32>
    %201 = arith.addf %199, %200 : vector<8x32xf32>
    %202 = arith.addf %201, %11 : vector<8x32xf32>
    %203 = math.tanh %202 : vector<8x32xf32>
    %204 = vector.extract_strided_slice %22 {offsets = [0, 6, 0], sizes = [8, 1, 32], strides = [1, 1, 1]} : vector<16x8x32xf32> to vector<8x1x32xf32>
    %205 = vector.shape_cast %204 : vector<8x1x32xf32> to vector<8x32xf32>
    %cst_85 = arith.constant dense<0.000000e+00> : vector<8x32xf32>
    %206 = tpu.matmul %178, %0, %cst_85 {dimension_numbers = #tpu.dot_dimension_numbers<[1], [0], [0], [1], [0, 0, 1, 1], [], []>} : vector<8x32xf32>, vector<32x32xf32>, vector<8x32xf32> -> vector<8x32xf32>
    %207 = arith.addf %205, %206 : vector<8x32xf32>
    %208 = math.tanh %207 : vector<8x32xf32>
    %cst_86 = arith.constant dense<0.000000e+00> : vector<8x32xf32>
    %209 = tpu.matmul %208, %1, %cst_86 {dimension_numbers = #tpu.dot_dimension_numbers<[1], [0], [0], [1], [0, 0, 1, 1], [], []>} : vector<8x32xf32>, vector<32x32xf32>, vector<8x32xf32> -> vector<8x32xf32>
    %cst_87 = arith.constant dense<0.000000e+00> : vector<8x32xf32>
    %210 = tpu.matmul %183, %2, %cst_87 {dimension_numbers = #tpu.dot_dimension_numbers<[1], [0], [0], [1], [0, 0, 1, 1], [], []>} : vector<8x32xf32>, vector<32x32xf32>, vector<8x32xf32> -> vector<8x32xf32>
    %211 = arith.addf %209, %210 : vector<8x32xf32>
    %212 = arith.addf %211, %8 : vector<8x32xf32>
    %213 = math.tanh %212 : vector<8x32xf32>
    %cst_88 = arith.constant dense<0.000000e+00> : vector<8x32xf32>
    %214 = tpu.matmul %213, %3, %cst_88 {dimension_numbers = #tpu.dot_dimension_numbers<[1], [0], [0], [1], [0, 0, 1, 1], [], []>} : vector<8x32xf32>, vector<32x32xf32>, vector<8x32xf32> -> vector<8x32xf32>
    %cst_89 = arith.constant dense<0.000000e+00> : vector<8x32xf32>
    %215 = tpu.matmul %188, %4, %cst_89 {dimension_numbers = #tpu.dot_dimension_numbers<[1], [0], [0], [1], [0, 0, 1, 1], [], []>} : vector<8x32xf32>, vector<32x32xf32>, vector<8x32xf32> -> vector<8x32xf32>
    %216 = arith.addf %214, %215 : vector<8x32xf32>
    %217 = arith.addf %216, %11 : vector<8x32xf32>
    %218 = math.tanh %217 : vector<8x32xf32>
    %219 = vector.extract_strided_slice %22 {offsets = [8, 6, 0], sizes = [8, 1, 32], strides = [1, 1, 1]} : vector<16x8x32xf32> to vector<8x1x32xf32>
    %220 = vector.shape_cast %219 : vector<8x1x32xf32> to vector<8x32xf32>
    %cst_90 = arith.constant dense<0.000000e+00> : vector<8x32xf32>
    %221 = tpu.matmul %193, %0, %cst_90 {dimension_numbers = #tpu.dot_dimension_numbers<[1], [0], [0], [1], [0, 0, 1, 1], [], []>} : vector<8x32xf32>, vector<32x32xf32>, vector<8x32xf32> -> vector<8x32xf32>
    %222 = arith.addf %220, %221 : vector<8x32xf32>
    %223 = math.tanh %222 : vector<8x32xf32>
    %cst_91 = arith.constant dense<0.000000e+00> : vector<8x32xf32>
    %224 = tpu.matmul %223, %1, %cst_91 {dimension_numbers = #tpu.dot_dimension_numbers<[1], [0], [0], [1], [0, 0, 1, 1], [], []>} : vector<8x32xf32>, vector<32x32xf32>, vector<8x32xf32> -> vector<8x32xf32>
    %cst_92 = arith.constant dense<0.000000e+00> : vector<8x32xf32>
    %225 = tpu.matmul %198, %2, %cst_92 {dimension_numbers = #tpu.dot_dimension_numbers<[1], [0], [0], [1], [0, 0, 1, 1], [], []>} : vector<8x32xf32>, vector<32x32xf32>, vector<8x32xf32> -> vector<8x32xf32>
    %226 = arith.addf %224, %225 : vector<8x32xf32>
    %227 = arith.addf %226, %8 : vector<8x32xf32>
    %228 = math.tanh %227 : vector<8x32xf32>
    %cst_93 = arith.constant dense<0.000000e+00> : vector<8x32xf32>
    %229 = tpu.matmul %228, %3, %cst_93 {dimension_numbers = #tpu.dot_dimension_numbers<[1], [0], [0], [1], [0, 0, 1, 1], [], []>} : vector<8x32xf32>, vector<32x32xf32>, vector<8x32xf32> -> vector<8x32xf32>
    %cst_94 = arith.constant dense<0.000000e+00> : vector<8x32xf32>
    %230 = tpu.matmul %203, %4, %cst_94 {dimension_numbers = #tpu.dot_dimension_numbers<[1], [0], [0], [1], [0, 0, 1, 1], [], []>} : vector<8x32xf32>, vector<32x32xf32>, vector<8x32xf32> -> vector<8x32xf32>
    %231 = arith.addf %229, %230 : vector<8x32xf32>
    %232 = arith.addf %231, %11 : vector<8x32xf32>
    %233 = math.tanh %232 : vector<8x32xf32>
    %234 = vector.extract_strided_slice %22 {offsets = [0, 7, 0], sizes = [8, 1, 32], strides = [1, 1, 1]} : vector<16x8x32xf32> to vector<8x1x32xf32>
    %235 = vector.shape_cast %234 : vector<8x1x32xf32> to vector<8x32xf32>
    %cst_95 = arith.constant dense<0.000000e+00> : vector<8x32xf32>
    %236 = tpu.matmul %208, %0, %cst_95 {dimension_numbers = #tpu.dot_dimension_numbers<[1], [0], [0], [1], [0, 0, 1, 1], [], []>} : vector<8x32xf32>, vector<32x32xf32>, vector<8x32xf32> -> vector<8x32xf32>
    %237 = arith.addf %235, %236 : vector<8x32xf32>
    %238 = math.tanh %237 : vector<8x32xf32>
    %cst_96 = arith.constant dense<0.000000e+00> : vector<8x32xf32>
    %239 = tpu.matmul %238, %1, %cst_96 {dimension_numbers = #tpu.dot_dimension_numbers<[1], [0], [0], [1], [0, 0, 1, 1], [], []>} : vector<8x32xf32>, vector<32x32xf32>, vector<8x32xf32> -> vector<8x32xf32>
    %cst_97 = arith.constant dense<0.000000e+00> : vector<8x32xf32>
    %240 = tpu.matmul %213, %2, %cst_97 {dimension_numbers = #tpu.dot_dimension_numbers<[1], [0], [0], [1], [0, 0, 1, 1], [], []>} : vector<8x32xf32>, vector<32x32xf32>, vector<8x32xf32> -> vector<8x32xf32>
    %241 = arith.addf %239, %240 : vector<8x32xf32>
    %242 = arith.addf %241, %8 : vector<8x32xf32>
    %243 = math.tanh %242 : vector<8x32xf32>
    %cst_98 = arith.constant dense<0.000000e+00> : vector<8x32xf32>
    %244 = tpu.matmul %243, %3, %cst_98 {dimension_numbers = #tpu.dot_dimension_numbers<[1], [0], [0], [1], [0, 0, 1, 1], [], []>} : vector<8x32xf32>, vector<32x32xf32>, vector<8x32xf32> -> vector<8x32xf32>
    %cst_99 = arith.constant dense<0.000000e+00> : vector<8x32xf32>
    %245 = tpu.matmul %218, %4, %cst_99 {dimension_numbers = #tpu.dot_dimension_numbers<[1], [0], [0], [1], [0, 0, 1, 1], [], []>} : vector<8x32xf32>, vector<32x32xf32>, vector<8x32xf32> -> vector<8x32xf32>
    %246 = arith.addf %244, %245 : vector<8x32xf32>
    %247 = arith.addf %246, %11 : vector<8x32xf32>
    %248 = math.tanh %247 : vector<8x32xf32>
    %249 = vector.extract_strided_slice %22 {offsets = [8, 7, 0], sizes = [8, 1, 32], strides = [1, 1, 1]} : vector<16x8x32xf32> to vector<8x1x32xf32>
    %250 = vector.shape_cast %249 : vector<8x1x32xf32> to vector<8x32xf32>
    %cst_100 = arith.constant dense<0.000000e+00> : vector<8x32xf32>
    %251 = tpu.matmul %223, %0, %cst_100 {dimension_numbers = #tpu.dot_dimension_numbers<[1], [0], [0], [1], [0, 0, 1, 1], [], []>} : vector<8x32xf32>, vector<32x32xf32>, vector<8x32xf32> -> vector<8x32xf32>
    %252 = arith.addf %250, %251 : vector<8x32xf32>
    %253 = math.tanh %252 : vector<8x32xf32>
    %cst_101 = arith.constant dense<0.000000e+00> : vector<8x32xf32>
    %254 = tpu.matmul %253, %1, %cst_101 {dimension_numbers = #tpu.dot_dimension_numbers<[1], [0], [0], [1], [0, 0, 1, 1], [], []>} : vector<8x32xf32>, vector<32x32xf32>, vector<8x32xf32> -> vector<8x32xf32>
    %cst_102 = arith.constant dense<0.000000e+00> : vector<8x32xf32>
    %255 = tpu.matmul %228, %2, %cst_102 {dimension_numbers = #tpu.dot_dimension_numbers<[1], [0], [0], [1], [0, 0, 1, 1], [], []>} : vector<8x32xf32>, vector<32x32xf32>, vector<8x32xf32> -> vector<8x32xf32>
    %256 = arith.addf %254, %255 : vector<8x32xf32>
    %257 = arith.addf %256, %8 : vector<8x32xf32>
    %258 = math.tanh %257 : vector<8x32xf32>
    %cst_103 = arith.constant dense<0.000000e+00> : vector<8x32xf32>
    %259 = tpu.matmul %258, %3, %cst_103 {dimension_numbers = #tpu.dot_dimension_numbers<[1], [0], [0], [1], [0, 0, 1, 1], [], []>} : vector<8x32xf32>, vector<32x32xf32>, vector<8x32xf32> -> vector<8x32xf32>
    %cst_104 = arith.constant dense<0.000000e+00> : vector<8x32xf32>
    %260 = tpu.matmul %233, %4, %cst_104 {dimension_numbers = #tpu.dot_dimension_numbers<[1], [0], [0], [1], [0, 0, 1, 1], [], []>} : vector<8x32xf32>, vector<32x32xf32>, vector<8x32xf32> -> vector<8x32xf32>
    %261 = arith.addf %259, %260 : vector<8x32xf32>
    %262 = arith.addf %261, %11 : vector<8x32xf32>
    %263 = math.tanh %262 : vector<8x32xf32>
    %cst_105 = arith.constant dense<0.000000e+00> : vector<8x16xf32>
    %264 = tpu.matmul %248, %5, %cst_105 {dimension_numbers = #tpu.dot_dimension_numbers<[1], [0], [0], [1], [0, 0, 1, 1], [], []>} : vector<8x32xf32>, vector<32x16xf32>, vector<8x16xf32> -> vector<8x16xf32>
    %265 = arith.addf %264, %14 : vector<8x16xf32>
    %cst_106 = arith.constant dense<0xFF800000> : vector<8xf32>
    %266 = vector.multi_reduction <maximumf>, %265, %cst_106 [1] : vector<8x16xf32> to vector<8xf32>
    %267 = vector.shape_cast %266 : vector<8xf32> to vector<8x1xf32>
    %268 = vector.broadcast %267 : vector<8x1xf32> to vector<8x16xf32>
    %269 = arith.subf %265, %268 : vector<8x16xf32>
    %270 = math.exp %269 : vector<8x16xf32>
    %cst_107 = arith.constant dense<0.000000e+00> : vector<8xf32>
    %271 = vector.multi_reduction <add>, %270, %cst_107 [1] : vector<8x16xf32> to vector<8xf32>
    %272 = vector.shape_cast %271 : vector<8xf32> to vector<8x1xf32>
    %273 = math.log %272 : vector<8x1xf32>
    %274 = vector.broadcast %273 : vector<8x1xf32> to vector<8x16xf32>
    %275 = arith.subf %269, %274 : vector<8x16xf32>
    %c0_108 = arith.constant 0 : index
    %c0_109 = arith.constant 0 : index
    %276 = vector.load %arg13[%c0_108, %c0_109] : memref<16x16xf32, #tpu.memory_space<vmem>>, vector<8x16xf32>
    tpu.vector_store %arg13[%c0_108, %c0_109], %275 {strides = array<i32>} : memref<16x16xf32, #tpu.memory_space<vmem>>, vector<8x16xf32>,
    %cst_110 = arith.constant dense<0.000000e+00> : vector<8x16xf32>
    %277 = tpu.matmul %263, %5, %cst_110 {dimension_numbers = #tpu.dot_dimension_numbers<[1], [0], [0], [1], [0, 0, 1, 1], [], []>} : vector<8x32xf32>, vector<32x16xf32>, vector<8x16xf32> -> vector<8x16xf32>
    %278 = arith.addf %277, %14 : vector<8x16xf32>
    %cst_111 = arith.constant dense<0xFF800000> : vector<8xf32>
    %279 = vector.multi_reduction <maximumf>, %278, %cst_111 [1] : vector<8x16xf32> to vector<8xf32>
    %280 = vector.shape_cast %279 : vector<8xf32> to vector<8x1xf32>
    %281 = vector.broadcast %280 : vector<8x1xf32> to vector<8x16xf32>
    %282 = arith.subf %278, %281 : vector<8x16xf32>
    %283 = math.exp %282 : vector<8x16xf32>
    %cst_112 = arith.constant dense<0.000000e+00> : vector<8xf32>
    %284 = vector.multi_reduction <add>, %283, %cst_112 [1] : vector<8x16xf32> to vector<8xf32>
    %285 = vector.shape_cast %284 : vector<8xf32> to vector<8x1xf32>
    %286 = math.log %285 : vector<8x1xf32>
    %287 = vector.broadcast %286 : vector<8x1xf32> to vector<8x16xf32>
    %288 = arith.subf %282, %287 : vector<8x16xf32>
    %c8 = arith.constant 8 : index
    %c0_113 = arith.constant 0 : index
    %289 = vector.load %arg13[%c8, %c0_113] : memref<16x16xf32, #tpu.memory_space<vmem>>, vector<8x16xf32>
    tpu.vector_store %arg13[%c8, %c0_113], %288 {strides = array<i32>} : memref<16x16xf32, #tpu.memory_space<vmem>>, vector<8x16xf32>,
    return
  }
  func.func @transform_0(%arg0: i32) -> (i32, i32, i32) {
    %c0_i32 = arith.constant 0 : i32
    %c0_i32_0 = arith.constant 0 : i32
    %c0_i32_1 = arith.constant 0 : i32
    return %arg0, %c0_i32, %c0_i32_0 : i32, i32, i32
  }
  func.func @transform_1(%arg0: i32) -> (i32, i32) {
    %c0_i32 = arith.constant 0 : i32
    %c0_i32_0 = arith.constant 0 : i32
    %c0_i32_1 = arith.constant 0 : i32
    return %c0_i32, %c0_i32_0 : i32, i32
  }
  func.func @transform_2(%arg0: i32) -> (i32, i32) {
    %c0_i32 = arith.constant 0 : i32
    %c0_i32_0 = arith.constant 0 : i32
    %c0_i32_1 = arith.constant 0 : i32
    return %c0_i32, %c0_i32_0 : i32, i32
  }
  func.func @transform_3(%arg0: i32) -> (i32, i32) {
    %c0_i32 = arith.constant 0 : i32
    %c0_i32_0 = arith.constant 0 : i32
    %c0_i32_1 = arith.constant 0 : i32
    return %c0_i32, %c0_i32_0 : i32, i32
  }
  func.func @transform_4(%arg0: i32) -> (i32, i32) {
    %c0_i32 = arith.constant 0 : i32
    %c0_i32_0 = arith.constant 0 : i32
    %c0_i32_1 = arith.constant 0 : i32
    return %c0_i32, %c0_i32_0 : i32, i32
  }
  func.func @transform_5(%arg0: i32) -> (i32, i32) {
    %c0_i32 = arith.constant 0 : i32
    %c0_i32_0 = arith.constant 0 : i32
    %c0_i32_1 = arith.constant 0 : i32
    return %c0_i32, %c0_i32_0 : i32, i32
  }
  func.func @transform_6(%arg0: i32) -> (i32, i32) {
    %c0_i32 = arith.constant 0 : i32
    %c0_i32_0 = arith.constant 0 : i32
    %c0_i32_1 = arith.constant 0 : i32
    return %c0_i32, %c0_i32_0 : i32, i32
  }
  func.func @transform_7(%arg0: i32) -> (i32, i32) {
    %c0_i32 = arith.constant 0 : i32
    %c0_i32_0 = arith.constant 0 : i32
    %c0_i32_1 = arith.constant 0 : i32
    return %c0_i32, %c0_i32_0 : i32, i32
  }
  func.func @transform_8(%arg0: i32) -> (i32, i32) {
    %c0_i32 = arith.constant 0 : i32
    %c0_i32_0 = arith.constant 0 : i32
    %c0_i32_1 = arith.constant 0 : i32
    return %c0_i32, %c0_i32_0 : i32, i32
  }
  func.func @transform_9(%arg0: i32) -> (i32, i32) {
    %c0_i32 = arith.constant 0 : i32
    %c0_i32_0 = arith.constant 0 : i32
    %c0_i32_1 = arith.constant 0 : i32
    return %c0_i32, %c0_i32_0 : i32, i32
  }
  func.func @transform_10(%arg0: i32) -> (i32, i32) {
    %c0_i32 = arith.constant 0 : i32
    %c0_i32_0 = arith.constant 0 : i32
    %c0_i32_1 = arith.constant 0 : i32
    return %c0_i32, %c0_i32_0 : i32, i32
  }
  func.func @transform_11(%arg0: i32) -> (i32, i32) {
    %c0_i32 = arith.constant 0 : i32
    %c0_i32_0 = arith.constant 0 : i32
    %c0_i32_1 = arith.constant 0 : i32
    return %c0_i32, %c0_i32_0 : i32, i32
  }
  func.func @transform_12(%arg0: i32) -> (i32, i32) {
    %c0_i32 = arith.constant 0 : i32
    %c0_i32_0 = arith.constant 0 : i32
    return %arg0, %c0_i32 : i32, i32
  }
}

</mosaic_0001>

<llo_original>
// kernel: tpu_custom_call.1
$region0: #{tpu_custom_call.1}
  #allocation0 [shape = 'u32[]', space=smem, size = 0x4, offset = 0x4, fixed_abs, tag = 'smem constant byte address 0x4 - core index']
  #allocation1 [shape = 'u32[72,128]{1,0:T(1,128)}', space=vmem, size = 0x9000, scoped, tag = 'internal scratch']
  %s0 = inlined_call_operand.vmem [shape: f32[16,8,8], index: 0, kind: input, shape index: {}]
  %s1 = inlined_call_operand.vmem [shape: f32[8,32], index: 1, kind: input, shape index: {}]
  %s2 = inlined_call_operand.vmem [shape: f32[32,32], index: 2, kind: input, shape index: {}]
  %s3 = inlined_call_operand.vmem [shape: f32[32,32], index: 3, kind: input, shape index: {}]
  %s4 = inlined_call_operand.vmem [shape: f32[32,32], index: 4, kind: input, shape index: {}]
  %s5 = inlined_call_operand.vmem [shape: f32[32,32], index: 5, kind: input, shape index: {}]
  %s6 = inlined_call_operand.vmem [shape: f32[32,32], index: 6, kind: input, shape index: {}]
  %s7 = inlined_call_operand.vmem [shape: f32[1,32], index: 7, kind: input, shape index: {}]
  %s8 = inlined_call_operand.vmem [shape: f32[1,32], index: 8, kind: input, shape index: {}]
  %s9 = inlined_call_operand.vmem [shape: f32[1,32], index: 9, kind: input, shape index: {}]
  %s10 = inlined_call_operand.vmem [shape: f32[32,16], index: 10, kind: input, shape index: {}]
  %s11 = inlined_call_operand.vmem [shape: f32[1,16], index: 11, kind: input, shape index: {}]
  %s12 = inlined_call_operand.hbm [shape: f32[16,16], index: 12, kind: output, shape index: {}]
  %s13 = sld [smem:[#allocation0]]
  $region58: #{tpu_custom_call.1} parent=0
    _
  %s15 = ssub.s32 1, %s13
  %s16 = scalar_select 0, %s15, %s13
  $region1: #{tpu_custom_call.1} parent=0
    #allocation2 [shape = 'u8[8192]{0}', space=vmem, size = 0x2000, scoped, tag = 'output window, operand 0, single buffered']
    #allocation3 [shape = 's32[1]{0}', space=sflag, size = 0x4, scoped, tag = 'scoped memory for tpu_custom_call.1']
    %17 = vsyncpa [#allocation3], 0
    // Predicated region
    $region2: #{tpu_custom_call.1} parent=1 // pred_check
      _
    $region3: #{tpu_custom_call.1} parent=1 // pred_check_branch
      %19 = sbr.rel (0) target = $region5
    $region4: #{tpu_custom_call.1} parent=1 // pred_region
      _
    $region5: #{tpu_custom_call.1} parent=1 // pred_fallthru
      _
    // Predicated region
    $region6: #{tpu_custom_call.1} parent=1 // pred_check
      _
    $region7: #{tpu_custom_call.1} parent=1 // pred_check_branch
      %21 = sbr.rel (0) target = $region9
    $region8: #{tpu_custom_call.1} parent=1 // pred_region
      _
    $region9: #{tpu_custom_call.1} parent=1 // pred_fallthru
      _
    // Predicated region
    $region10: #{tpu_custom_call.1} parent=1 // pred_check
      _
    $region11: #{tpu_custom_call.1} parent=1 // pred_check_branch
      %23 = sbr.rel (0) target = $region13
    $region12: #{tpu_custom_call.1} parent=1 // pred_region
      _
    $region13: #{tpu_custom_call.1} parent=1 // pred_fallthru
      _
    // Predicated region
    $region14: #{tpu_custom_call.1} parent=1 // pred_check
      _
    $region15: #{tpu_custom_call.1} parent=1 // pred_check_branch
      %25 = sbr.rel (0) target = $region17
    $region16: #{tpu_custom_call.1} parent=1 // pred_region
      _
    $region17: #{tpu_custom_call.1} parent=1 // pred_fallthru
      _
    // Predicated region
    $region18: #{tpu_custom_call.1} parent=1 // pred_check
      _
    $region19: #{tpu_custom_call.1} parent=1 // pred_check_branch
      %27 = sbr.rel (0) target = $region21
    $region20: #{tpu_custom_call.1} parent=1 // pred_region
      _
    $region21: #{tpu_custom_call.1} parent=1 // pred_fallthru
      _
    // Predicated region
    $region22: #{tpu_custom_call.1} parent=1 // pred_check
      _
    $region23: #{tpu_custom_call.1} parent=1 // pred_check_branch
      %29 = sbr.rel (0) target = $region25
    $region24: #{tpu_custom_call.1} parent=1 // pred_region
      _
    $region25: #{tpu_custom_call.1} parent=1 // pred_fallthru
      _
    // Predicated region
    $region26: #{tpu_custom_call.1} parent=1 // pred_check
      _
    $region27: #{tpu_custom_call.1} parent=1 // pred_check_branch
      %31 = sbr.rel (0) target = $region29
    $region28: #{tpu_custom_call.1} parent=1 // pred_region
      _
    $region29: #{tpu_custom_call.1} parent=1 // pred_fallthru
      _
    // Predicated region
    $region30: #{tpu_custom_call.1} parent=1 // pred_check
      _
    $region31: #{tpu_custom_call.1} parent=1 // pred_check_branch
      %33 = sbr.rel (0) target = $region33
    $region32: #{tpu_custom_call.1} parent=1 // pred_region
      _
    $region33: #{tpu_custom_call.1} parent=1 // pred_fallthru
      _
    // Predicated region
    $region34: #{tpu_custom_call.1} parent=1 // pred_check
      _
    $region35: #{tpu_custom_call.1} parent=1 // pred_check_branch
      %35 = sbr.rel (0) target = $region37
    $region36: #{tpu_custom_call.1} parent=1 // pred_region
      _
    $region37: #{tpu_custom_call.1} parent=1 // pred_fallthru
      _
    // Predicated region
    $region38: #{tpu_custom_call.1} parent=1 // pred_check
      _
    $region39: #{tpu_custom_call.1} parent=1 // pred_check_branch
      %37 = sbr.rel (0) target = $region41
    $region40: #{tpu_custom_call.1} parent=1 // pred_region
      _
    $region41: #{tpu_custom_call.1} parent=1 // pred_fallthru
      _
    // Predicated region
    $region42: #{tpu_custom_call.1} parent=1 // pred_check
      _
    $region43: #{tpu_custom_call.1} parent=1 // pred_check_branch
      %39 = sbr.rel (0) target = $region45
    $region44: #{tpu_custom_call.1} parent=1 // pred_region
      _
    $region45: #{tpu_custom_call.1} parent=1 // pred_fallthru
      _
    // Predicated region
    $region46: #{tpu_custom_call.1} parent=1 // pred_check
      _
    $region47: #{tpu_custom_call.1} parent=1 // pred_check_branch
      %41 = sbr.rel (0) target = $region49
    $region48: #{tpu_custom_call.1} parent=1 // pred_region
      _
    $region49: #{tpu_custom_call.1} parent=1 // pred_fallthru
      _
    %v42 = vld [vmem:[%s2] sm:$0xff]
    %v43 = vld [vmem:[%s2 + $0x8] sm:$0xff]
    %v44 = vld [vmem:[%s2 + $0x10] sm:$0xff]
    %v45 = vld [vmem:[%s2 + $0x18] sm:$0xff]
    %v46 = vld [vmem:[%s3] sm:$0xff]
    %v47 = vld [vmem:[%s3 + $0x8] sm:$0xff]
    %v48 = vld [vmem:[%s3 + $0x10] sm:$0xff]
    %v49 = vld [vmem:[%s3 + $0x18] sm:$0xff]
    %v50 = vld [vmem:[%s4] sm:$0xff]
    %v51 = vld [vmem:[%s4 + $0x8] sm:$0xff]
    %v52 = vld [vmem:[%s4 + $0x10] sm:$0xff]
    %v53 = vld [vmem:[%s4 + $0x18] sm:$0xff]
    %v54 = vld [vmem:[%s5] sm:$0xff]
    %v55 = vld [vmem:[%s5 + $0x8] sm:$0xff]
    %v56 = vld [vmem:[%s5 + $0x10] sm:$0xff]
    %v57 = vld [vmem:[%s5 + $0x18] sm:$0xff]
    %v58 = vld [vmem:[%s6] sm:$0xff]
    %v59 = vld [vmem:[%s6 + $0x8] sm:$0xff]
    %v60 = vld [vmem:[%s6 + $0x10] sm:$0xff]
    %v61 = vld [vmem:[%s6 + $0x18] sm:$0xff]
    %v62 = vld [vmem:[%s10] sm:$0xff]
    %v63 = vld [vmem:[%s10 + $0x8] sm:$0xff]
    %v64 = vld [vmem:[%s10 + $0x10] sm:$0xff]
    %v65 = vld [vmem:[%s10 + $0x18] sm:$0xff]
    %v66 = vld [vmem:[%s8] sm:$0x1]
    %v68 = vperm.slane %v66, 0
    %v70 = vld [vmem:[%s9] sm:$0x1]
    %v72 = vperm.slane %v70, 0
    %v74 = vld [vmem:[%s11] sm:$0x1]
    %v76 = vperm.slane %v74, 0
    %v78 = vld [vmem:[%s0] sm:$0xff]
    %v79 = vld [vmem:[%s0 + $0x8] sm:$0xff]
    %v80 = vld [vmem:[%s0 + $0x10] sm:$0xff]
    %v81 = vld [vmem:[%s0 + $0x18] sm:$0xff]
    %v82 = vld [vmem:[%s0 + $0x20] sm:$0xff]
    %v83 = vld [vmem:[%s0 + $0x28] sm:$0xff]
    %v84 = vld [vmem:[%s0 + $0x30] sm:$0xff]
    %v85 = vld [vmem:[%s0 + $0x38] sm:$0xff]
    %v86 = vld [vmem:[%s0 + $0x40] sm:$0xff]
    %v87 = vld [vmem:[%s0 + $0x48] sm:$0xff]
    %v88 = vld [vmem:[%s0 + $0x50] sm:$0xff]
    %v89 = vld [vmem:[%s0 + $0x58] sm:$0xff]
    %v90 = vld [vmem:[%s0 + $0x60] sm:$0xff]
    %v91 = vld [vmem:[%s0 + $0x68] sm:$0xff]
    %v92 = vld [vmem:[%s0 + $0x70] sm:$0xff]
    %v93 = vld [vmem:[%s0 + $0x78] sm:$0xff]
    %v94 = vld [vmem:[%s1] sm:$0xff]
    %v95 = vld [vmem:[%s7] sm:$0x1]
    %v97 = vperm.slane %v95, 0
    %vm99 = vcmask 64512
    %v101 = vsel %vm99, %v78, 0
    %v104 = vsel %vm99, %v79, 0
    %v107 = vsel %vm99, %v80, 0
    %v110 = vsel %vm99, %v81, 0
    %v113 = vsel %vm99, %v82, 0
    %v116 = vsel %vm99, %v83, 0
    %v119 = vsel %vm99, %v84, 0
    %v122 = vsel %vm99, %v85, 0
    %v125 = vsel %vm99, %v86, 0
    %v128 = vsel %vm99, %v87, 0
    %v131 = vsel %vm99, %v88, 0
    %v134 = vsel %vm99, %v89, 0
    %v137 = vsel %vm99, %v90, 0
    %v140 = vsel %vm99, %v91, 0
    %v143 = vsel %vm99, %v92, 0
    %v146 = vsel %vm99, %v93, 0
    %148 = vmatpush.msra.mxu0 0.0
    %149 = vmatpush.msra.mxu0 0.0
    %150 = vmatpush.msra.mxu0 0.0
    %151 = vmatpush.msra.mxu0 0.0
    %152 = vmatpush.msra.mxu0 0.0
    %153 = vmatpush.msra.mxu0 0.0
    %154 = vmatpush.msra.mxu0 0.0
    %155 = vmatpush.msra.mxu0 0.0
    %156 = vmatpush.msra.mxu0 0.0
    %157 = vmatpush.msra.mxu0 0.0
    %158 = vmatpush.msra.mxu0 0.0
    %159 = vmatpush.msra.mxu0 0.0
    %160 = vmatpush.msra.mxu0 0.0
    %161 = vmatpush.msra.mxu0 0.0
    %162 = vmatpush.msra.mxu0 0.0
    %163 = vmatpush.msra.mxu0 %v94
    %164 = vmatmul.f32.gmra.mxu0 %v101
    %v165 = vpop.f32.mrf.mxu0
    %v166 = vadd.f32 %v97, %v165
    %167 = vmatmul.f32.gmra.mxu0 %v104
    %v168 = vpop.f32.mrf.mxu0
    %v169 = vadd.f32 %v97, %v168
    %170 = vmatmul.f32.gmra.mxu0 %v107
    %v171 = vpop.f32.mrf.mxu0
    %v172 = vadd.f32 %v97, %v171
    %173 = vmatmul.f32.gmra.mxu0 %v110
    %v174 = vpop.f32.mrf.mxu0
    %v175 = vadd.f32 %v97, %v174
    %176 = vmatmul.f32.gmra.mxu0 %v113
    %v177 = vpop.f32.mrf.mxu0
    %v178 = vadd.f32 %v97, %v177
    %179 = vmatmul.f32.gmra.mxu0 %v116
    %v180 = vpop.f32.mrf.mxu0
    %v181 = vadd.f32 %v97, %v180
    %182 = vmatmul.f32.gmra.mxu0 %v119
    %v183 = vpop.f32.mrf.mxu0
    %v184 = vadd.f32 %v97, %v183
    %185 = vmatmul.f32.gmra.mxu0 %v122
    %v186 = vpop.f32.mrf.mxu0
    %v187 = vadd.f32 %v97, %v186
    %188 = vmatmul.f32.gmra.mxu0 %v125
    %v189 = vpop.f32.mrf.mxu0
    %v190 = vadd.f32 %v97, %v189
    %191 = vmatmul.f32.gmra.mxu0 %v128
    %v192 = vpop.f32.mrf.mxu0
    %v193 = vadd.f32 %v97, %v192
    %194 = vmatmul.f32.gmra.mxu0 %v131
    %v195 = vpop.f32.mrf.mxu0
    %v196 = vadd.f32 %v97, %v195
    %197 = vmatmul.f32.gmra.mxu0 %v134
    %v198 = vpop.f32.mrf.mxu0
    %v199 = vadd.f32 %v97, %v198
    %200 = vmatmul.f32.gmra.mxu0 %v137
    %v201 = vpop.f32.mrf.mxu0
    %v202 = vadd.f32 %v97, %v201
    %203 = vmatmul.f32.gmra.mxu0 %v140
    %v204 = vpop.f32.mrf.mxu0
    %v205 = vadd.f32 %v97, %v204
    %206 = vmatmul.f32.gmra.mxu0 %v143
    %v207 = vpop.f32.mrf.mxu0
    %v208 = vadd.f32 %v97, %v207
    %209 = vmatmul.f32.gmra.mxu0 %v146
    %v210 = vpop.f32.mrf.mxu0
    %v211 = vadd.f32 %v97, %v210
    %212 = vdwg.mxu0
    %vm213 = vcmask 261120
    %v215 = vsel %vm213, 0.0, 0
    %217 = vmatpush.msra.mxu0 0.0
    %218 = vmatpush.msra.mxu0 0.0
    %219 = vmatpush.msra.mxu0 0.0
    %220 = vmatpush.msra.mxu0 0.0
    %221 = vmatpush.msra.mxu0 0.0
    %222 = vmatpush.msra.mxu0 0.0
    %223 = vmatpush.msra.mxu0 0.0
    %224 = vmatpush.msra.mxu0 0.0
    %225 = vmatpush.msra.mxu0 0.0
    %226 = vmatpush.msra.mxu0 0.0
    %227 = vmatpush.msra.mxu0 0.0
    %228 = vmatpush.msra.mxu0 0.0
    %229 = vmatpush.msra.mxu0 %v45
    %230 = vmatpush.msra.mxu0 %v44
    %231 = vmatpush.msra.mxu0 %v43
    %232 = vmatpush.msra.mxu0 %v42
    %233 = vmatmul.f32.gmra.mxu0 %v215
    %v234 = vpop.f32.mrf.mxu0
    %v235 = vadd.f32 0.0, %v234
    %236 = vdwg.mxu0
    %v238 = vrot.slane %v235, 1
    %v239 = vrot.slane %v235, 2
    %v240 = vrot.slane %v235, 3
    %v241 = vrot.slane %v235, 4
    %v242 = vrot.slane %v235, 5
    %v243 = vrot.slane %v235, 6
    %v244 = vrot.slane %v235, 7
    %v253 = vadd.f32 %v166, %v235
    %v254 = vadd.f32 %v169, %v238
    %v255 = vadd.f32 %v172, %v239
    %v256 = vadd.f32 %v175, %v240
    %v257 = vadd.f32 %v178, %v241
    %v258 = vadd.f32 %v181, %v242
    %v259 = vadd.f32 %v184, %v243
    %v260 = vadd.f32 %v187, %v244
    %v261 = vtanh.pop %v253
    %v262 = vtanh.pop %v254
    %v263 = vtanh.pop %v255
    %v264 = vtanh.pop %v256
    %v265 = vtanh.pop %v257
    %v266 = vtanh.pop %v258
    %v267 = vtanh.pop %v259
    %v268 = vtanh.pop %v260
    %269 = vmatpush.msra.mxu0 0.0
    %270 = vmatpush.msra.mxu0 0.0
    %271 = vmatpush.msra.mxu0 0.0
    %272 = vmatpush.msra.mxu0 0.0
    %273 = vmatpush.msra.mxu0 0.0
    %274 = vmatpush.msra.mxu0 0.0
    %275 = vmatpush.msra.mxu0 0.0
    %276 = vmatpush.msra.mxu0 0.0
    %277 = vmatpush.msra.mxu0 0.0
    %278 = vmatpush.msra.mxu0 0.0
    %279 = vmatpush.msra.mxu0 0.0
    %280 = vmatpush.msra.mxu0 0.0
    %281 = vmatpush.msra.mxu0 %v53
    %282 = vmatpush.msra.mxu0 %v52
    %283 = vmatpush.msra.mxu0 %v51
    %284 = vmatpush.msra.mxu0 %v50
    %285 = vmatmul.f32.gmra.mxu0 %v215
    %v286 = vpop.f32.mrf.mxu0
    %v287 = vadd.f32 0.0, %v286
    %288 = vdwg.mxu0
    %v297 = vrot.slane %v262, 7
    %vm298 = vcmask 1041409
    %v299 = vsel %vm298, %v297, %v261
    %v300 = vrot.slane %v263, 6
    %vm301 = vcmask 1042434
    %v302 = vsel %vm301, %v300, %v299
    %v303 = vrot.slane %v264, 5
    %vm304 = vcmask 1043459
    %v305 = vsel %vm304, %v303, %v302
    %v306 = vrot.slane %v265, 4
    %vm307 = vcmask 1044484
    %v308 = vsel %vm307, %v306, %v305
    %v309 = vrot.slane %v266, 3
    %vm310 = vcmask 1045509
    %v311 = vsel %vm310, %v309, %v308
    %v312 = vrot.slane %v267, 2
    %vm313 = vcmask 1046534
    %v314 = vsel %vm313, %v312, %v311
    %v315 = vrot.slane %v268, 1
    %vm316 = vcmask 1047559
    %v317 = vsel %vm316, %v315, %v314
    %v318 = vsel %vm213, %v317, 0
    %320 = vmatpush.msra.mxu0 0.0
    %321 = vmatpush.msra.mxu0 0.0
    %322 = vmatpush.msra.mxu0 0.0
    %323 = vmatpush.msra.mxu0 0.0
    %324 = vmatpush.msra.mxu0 0.0
    %325 = vmatpush.msra.mxu0 0.0
    %326 = vmatpush.msra.mxu0 0.0
    %327 = vmatpush.msra.mxu0 0.0
    %328 = vmatpush.msra.mxu0 0.0
    %329 = vmatpush.msra.mxu0 0.0
    %330 = vmatpush.msra.mxu0 0.0
    %331 = vmatpush.msra.mxu0 0.0
    %332 = vmatpush.msra.mxu0 %v49
    %333 = vmatpush.msra.mxu0 %v48
    %334 = vmatpush.msra.mxu0 %v47
    %335 = vmatpush.msra.mxu0 %v46
    %336 = vmatmul.f32.gmra.mxu0 %v318
    %v337 = vpop.f32.mrf.mxu0
    %v338 = vadd.f32 %v287, %v337
    %339 = vdwg.mxu0
    %v340 = vadd.f32 %v338, %v68
    %v341 = vtanh.pop %v340
    %342 = vmatpush.msra.mxu0 0.0
    %343 = vmatpush.msra.mxu0 0.0
    %344 = vmatpush.msra.mxu0 0.0
    %345 = vmatpush.msra.mxu0 0.0
    %346 = vmatpush.msra.mxu0 0.0
    %347 = vmatpush.msra.mxu0 0.0
    %348 = vmatpush.msra.mxu0 0.0
    %349 = vmatpush.msra.mxu0 0.0
    %350 = vmatpush.msra.mxu0 0.0
    %351 = vmatpush.msra.mxu0 0.0
    %352 = vmatpush.msra.mxu0 0.0
    %353 = vmatpush.msra.mxu0 0.0
    %354 = vmatpush.msra.mxu0 %v61
    %355 = vmatpush.msra.mxu0 %v60
    %356 = vmatpush.msra.mxu0 %v59
    %357 = vmatpush.msra.mxu0 %v58
    %358 = vmatmul.f32.gmra.mxu0 %v215
    %v359 = vpop.f32.mrf.mxu0
    %v360 = vadd.f32 0.0, %v359
    %361 = vdwg.mxu0
    %v363 = vsel %vm213, %v341, 0
    %365 = vmatpush.msra.mxu0 0.0
    %366 = vmatpush.msra.mxu0 0.0
    %367 = vmatpush.msra.mxu0 0.0
    %368 = vmatpush.msra.mxu0 0.0
    %369 = vmatpush.msra.mxu0 0.0
    %370 = vmatpush.msra.mxu0 0.0
    %371 = vmatpush.msra.mxu0 0.0
    %372 = vmatpush.msra.mxu0 0.0
    %373 = vmatpush.msra.mxu0 0.0
    %374 = vmatpush.msra.mxu0 0.0
    %375 = vmatpush.msra.mxu0 0.0
    %376 = vmatpush.msra.mxu0 0.0
    %377 = vmatpush.msra.mxu0 %v57
    %378 = vmatpush.msra.mxu0 %v56
    %379 = vmatpush.msra.mxu0 %v55
    %380 = vmatpush.msra.mxu0 %v54
    %381 = vmatmul.f32.gmra.mxu0 %v363
    %v382 = vpop.f32.mrf.mxu0
    %v383 = vadd.f32 %v360, %v382
    %384 = vdwg.mxu0
    %v385 = vadd.f32 %v383, %v72
    %v386 = vtanh.pop %v385
    %v387 = vadd.f32 %v190, %v235
    %v388 = vadd.f32 %v193, %v238
    %v389 = vadd.f32 %v196, %v239
    %v390 = vadd.f32 %v199, %v240
    %v391 = vadd.f32 %v202, %v241
    %v392 = vadd.f32 %v205, %v242
    %v393 = vadd.f32 %v208, %v243
    %v394 = vadd.f32 %v211, %v244
    %v395 = vtanh.pop %v387
    %v396 = vtanh.pop %v388
    %v397 = vtanh.pop %v389
    %v398 = vtanh.pop %v390
    %v399 = vtanh.pop %v391
    %v400 = vtanh.pop %v392
    %v401 = vtanh.pop %v393
    %v402 = vtanh.pop %v394
    %v411 = vrot.slane %v396, 7
    %v412 = vsel %vm298, %v411, %v395
    %v413 = vrot.slane %v397, 6
    %v414 = vsel %vm301, %v413, %v412
    %v415 = vrot.slane %v398, 5
    %v416 = vsel %vm304, %v415, %v414
    %v417 = vrot.slane %v399, 4
    %v418 = vsel %vm307, %v417, %v416
    %v419 = vrot.slane %v400, 3
    %v420 = vsel %vm310, %v419, %v418
    %v421 = vrot.slane %v401, 2
    %v422 = vsel %vm313, %v421, %v420
    %v423 = vrot.slane %v402, 1
    %v424 = vsel %vm316, %v423, %v422
    %v425 = vsel %vm213, %v424, 0
    %427 = vmatpush.msra.mxu0 0.0
    %428 = vmatpush.msra.mxu0 0.0
    %429 = vmatpush.msra.mxu0 0.0
    %430 = vmatpush.msra.mxu0 0.0
    %431 = vmatpush.msra.mxu0 0.0
    %432 = vmatpush.msra.mxu0 0.0
    %433 = vmatpush.msra.mxu0 0.0
    %434 = vmatpush.msra.mxu0 0.0
    %435 = vmatpush.msra.mxu0 0.0
    %436 = vmatpush.msra.mxu0 0.0
    %437 = vmatpush.msra.mxu0 0.0
    %438 = vmatpush.msra.mxu0 0.0
    %439 = vmatpush.msra.mxu0 %v49
    %440 = vmatpush.msra.mxu0 %v48
    %441 = vmatpush.msra.mxu0 %v47
    %442 = vmatpush.msra.mxu0 %v46
    %443 = vmatmul.f32.gmra.mxu0 %v425
    %v444 = vpop.f32.mrf.mxu0
    %v445 = vadd.f32 %v287, %v444
    %446 = vdwg.mxu0
    %v447 = vadd.f32 %v445, %v68
    %v448 = vtanh.pop %v447
    %v450 = vsel %vm213, %v448, 0
    %452 = vmatpush.msra.mxu0 0.0
    %453 = vmatpush.msra.mxu0 0.0
    %454 = vmatpush.msra.mxu0 0.0
    %455 = vmatpush.msra.mxu0 0.0
    %456 = vmatpush.msra.mxu0 0.0
    %457 = vmatpush.msra.mxu0 0.0
    %458 = vmatpush.msra.mxu0 0.0
    %459 = vmatpush.msra.mxu0 0.0
    %460 = vmatpush.msra.mxu0 0.0
    %461 = vmatpush.msra.mxu0 0.0
    %462 = vmatpush.msra.mxu0 0.0
    %463 = vmatpush.msra.mxu0 0.0
    %464 = vmatpush.msra.mxu0 %v57
    %465 = vmatpush.msra.mxu0 %v56
    %466 = vmatpush.msra.mxu0 %v55
    %467 = vmatpush.msra.mxu0 %v54
    %468 = vmatmul.f32.gmra.mxu0 %v450
    %v469 = vpop.f32.mrf.mxu0
    %v470 = vadd.f32 %v360, %v469
    %471 = vdwg.mxu0
    %v472 = vadd.f32 %v470, %v72
    %v473 = vtanh.pop %v472
    %474 = vmatpush.msra.mxu0 0.0
    %475 = vmatpush.msra.mxu0 0.0
    %476 = vmatpush.msra.mxu0 0.0
    %477 = vmatpush.msra.mxu0 0.0
    %478 = vmatpush.msra.mxu0 0.0
    %479 = vmatpush.msra.mxu0 0.0
    %480 = vmatpush.msra.mxu0 0.0
    %481 = vmatpush.msra.mxu0 0.0
    %482 = vmatpush.msra.mxu0 0.0
    %483 = vmatpush.msra.mxu0 0.0
    %484 = vmatpush.msra.mxu0 0.0
    %485 = vmatpush.msra.mxu0 0.0
    %486 = vmatpush.msra.mxu0 %v45
    %487 = vmatpush.msra.mxu0 %v44
    %488 = vmatpush.msra.mxu0 %v43
    %489 = vmatpush.msra.mxu0 %v42
    %490 = vmatmul.f32.gmra.mxu0 %v318
    %v491 = vpop.f32.mrf.mxu0
    %v492 = vadd.f32 0.0, %v491
    %493 = vdwg.mxu0
    %v495 = vrot.slane %v492, 7
    %v496 = vrot.slane %v492, 1
    %v497 = vrot.slane %v492, 2
    %v498 = vrot.slane %v492, 3
    %v499 = vrot.slane %v492, 4
    %v500 = vrot.slane %v492, 5
    %v501 = vrot.slane %v492, 6
    %v510 = vadd.f32 %v166, %v495
    %v511 = vadd.f32 %v169, %v492
    %v512 = vadd.f32 %v172, %v496
    %v513 = vadd.f32 %v175, %v497
    %v514 = vadd.f32 %v178, %v498
    %v515 = vadd.f32 %v181, %v499
    %v516 = vadd.f32 %v184, %v500
    %v517 = vadd.f32 %v187, %v501
    %v518 = vtanh.pop %v510
    %v519 = vtanh.pop %v511
    %v520 = vtanh.pop %v512
    %v521 = vtanh.pop %v513
    %v522 = vtanh.pop %v514
    %v523 = vtanh.pop %v515
    %v524 = vtanh.pop %v516
    %v525 = vtanh.pop %v517
    %526 = vmatpush.msra.mxu0 0.0
    %527 = vmatpush.msra.mxu0 0.0
    %528 = vmatpush.msra.mxu0 0.0
    %529 = vmatpush.msra.mxu0 0.0
    %530 = vmatpush.msra.mxu0 0.0
    %531 = vmatpush.msra.mxu0 0.0
    %532 = vmatpush.msra.mxu0 0.0
    %533 = vmatpush.msra.mxu0 0.0
    %534 = vmatpush.msra.mxu0 0.0
    %535 = vmatpush.msra.mxu0 0.0
    %536 = vmatpush.msra.mxu0 0.0
    %537 = vmatpush.msra.mxu0 0.0
    %538 = vmatpush.msra.mxu0 %v53
    %539 = vmatpush.msra.mxu0 %v52
    %540 = vmatpush.msra.mxu0 %v51
    %541 = vmatpush.msra.mxu0 %v50
    %542 = vmatmul.f32.gmra.mxu0 %v363
    %v543 = vpop.f32.mrf.mxu0
    %v544 = vadd.f32 0.0, %v543
    %545 = vdwg.mxu0
    %v554 = vrot.slane %v518, 1
    %v555 = vsel %vm298, %v519, %v554
    %v556 = vrot.slane %v520, 7
    %v557 = vsel %vm301, %v556, %v555
    %v558 = vrot.slane %v521, 6
    %v559 = vsel %vm304, %v558, %v557
    %v560 = vrot.slane %v522, 5
    %v561 = vsel %vm307, %v560, %v559
    %v562 = vrot.slane %v523, 4
    %v563 = vsel %vm310, %v562, %v561
    %v564 = vrot.slane %v524, 3
    %v565 = vsel %vm313, %v564, %v563
    %v566 = vrot.slane %v525, 2
    %v567 = vsel %vm316, %v566, %v565
    %v568 = vsel %vm213, %v567, 0
    %570 = vmatpush.msra.mxu0 0.0
    %571 = vmatpush.msra.mxu0 0.0
    %572 = vmatpush.msra.mxu0 0.0
    %573 = vmatpush.msra.mxu0 0.0
    %574 = vmatpush.msra.mxu0 0.0
    %575 = vmatpush.msra.mxu0 0.0
    %576 = vmatpush.msra.mxu0 0.0
    %577 = vmatpush.msra.mxu0 0.0
    %578 = vmatpush.msra.mxu0 0.0
    %579 = vmatpush.msra.mxu0 0.0
    %580 = vmatpush.msra.mxu0 0.0
    %581 = vmatpush.msra.mxu0 0.0
    %582 = vmatpush.msra.mxu0 %v49
    %583 = vmatpush.msra.mxu0 %v48
    %584 = vmatpush.msra.mxu0 %v47
    %585 = vmatpush.msra.mxu0 %v46
    %586 = vmatmul.f32.gmra.mxu0 %v568
    %v587 = vpop.f32.mrf.mxu0
    %v588 = vadd.f32 %v544, %v587
    %589 = vdwg.mxu0
    %v590 = vadd.f32 %v588, %v68
    %v591 = vtanh.pop %v590
    %v593 = vsel %vm213, %v386, 0
    %595 = vmatpush.msra.mxu0 0.0
    %596 = vmatpush.msra.mxu0 0.0
    %597 = vmatpush.msra.mxu0 0.0
    %598 = vmatpush.msra.mxu0 0.0
    %599 = vmatpush.msra.mxu0 0.0
    %600 = vmatpush.msra.mxu0 0.0
    %601 = vmatpush.msra.mxu0 0.0
    %602 = vmatpush.msra.mxu0 0.0
    %603 = vmatpush.msra.mxu0 0.0
    %604 = vmatpush.msra.mxu0 0.0
    %605 = vmatpush.msra.mxu0 0.0
    %606 = vmatpush.msra.mxu0 0.0
    %607 = vmatpush.msra.mxu0 %v61
    %608 = vmatpush.msra.mxu0 %v60
    %609 = vmatpush.msra.mxu0 %v59
    %610 = vmatpush.msra.mxu0 %v58
    %611 = vmatmul.f32.gmra.mxu0 %v593
    %v612 = vpop.f32.mrf.mxu0
    %v613 = vadd.f32 0.0, %v612
    %614 = vdwg.mxu0
    %v616 = vsel %vm213, %v591, 0
    %618 = vmatpush.msra.mxu0 0.0
    %619 = vmatpush.msra.mxu0 0.0
    %620 = vmatpush.msra.mxu0 0.0
    %621 = vmatpush.msra.mxu0 0.0
    %622 = vmatpush.msra.mxu0 0.0
    %623 = vmatpush.msra.mxu0 0.0
    %624 = vmatpush.msra.mxu0 0.0
    %625 = vmatpush.msra.mxu0 0.0
    %626 = vmatpush.msra.mxu0 0.0
    %627 = vmatpush.msra.mxu0 0.0
    %628 = vmatpush.msra.mxu0 0.0
    %629 = vmatpush.msra.mxu0 0.0
    %630 = vmatpush.msra.mxu0 %v57
    %631 = vmatpush.msra.mxu0 %v56
    %632 = vmatpush.msra.mxu0 %v55
    %633 = vmatpush.msra.mxu0 %v54
    %634 = vmatmul.f32.gmra.mxu0 %v616
    %v635 = vpop.f32.mrf.mxu0
    %v636 = vadd.f32 %v613, %v635
    %637 = vdwg.mxu0
    %v638 = vadd.f32 %v636, %v72
    %v639 = vtanh.pop %v638
    %640 = vmatpush.msra.mxu0 0.0
    %641 = vmatpush.msra.mxu0 0.0
    %642 = vmatpush.msra.mxu0 0.0
    %643 = vmatpush.msra.mxu0 0.0
    %644 = vmatpush.msra.mxu0 0.0
    %645 = vmatpush.msra.mxu0 0.0
    %646 = vmatpush.msra.mxu0 0.0
    %647 = vmatpush.msra.mxu0 0.0
    %648 = vmatpush.msra.mxu0 0.0
    %649 = vmatpush.msra.mxu0 0.0
    %650 = vmatpush.msra.mxu0 0.0
    %651 = vmatpush.msra.mxu0 0.0
    %652 = vmatpush.msra.mxu0 %v45
    %653 = vmatpush.msra.mxu0 %v44
    %654 = vmatpush.msra.mxu0 %v43
    %655 = vmatpush.msra.mxu0 %v42
    %656 = vmatmul.f32.gmra.mxu0 %v425
    %v657 = vpop.f32.mrf.mxu0
    %v658 = vadd.f32 0.0, %v657
    %659 = vdwg.mxu0
    %v661 = vrot.slane %v658, 7
    %v662 = vrot.slane %v658, 1
    %v663 = vrot.slane %v658, 2
    %v664 = vrot.slane %v658, 3
    %v665 = vrot.slane %v658, 4
    %v666 = vrot.slane %v658, 5
    %v667 = vrot.slane %v658, 6
    %v676 = vadd.f32 %v190, %v661
    %v677 = vadd.f32 %v193, %v658
    %v678 = vadd.f32 %v196, %v662
    %v679 = vadd.f32 %v199, %v663
    %v680 = vadd.f32 %v202, %v664
    %v681 = vadd.f32 %v205, %v665
    %v682 = vadd.f32 %v208, %v666
    %v683 = vadd.f32 %v211, %v667
    %v684 = vtanh.pop %v676
    %v685 = vtanh.pop %v677
    %v686 = vtanh.pop %v678
    %v687 = vtanh.pop %v679
    %v688 = vtanh.pop %v680
    %v689 = vtanh.pop %v681
    %v690 = vtanh.pop %v682
    %v691 = vtanh.pop %v683
    %692 = vmatpush.msra.mxu0 0.0
    %693 = vmatpush.msra.mxu0 0.0
    %694 = vmatpush.msra.mxu0 0.0
    %695 = vmatpush.msra.mxu0 0.0
    %696 = vmatpush.msra.mxu0 0.0
    %697 = vmatpush.msra.mxu0 0.0
    %698 = vmatpush.msra.mxu0 0.0
    %699 = vmatpush.msra.mxu0 0.0
    %700 = vmatpush.msra.mxu0 0.0
    %701 = vmatpush.msra.mxu0 0.0
    %702 = vmatpush.msra.mxu0 0.0
    %703 = vmatpush.msra.mxu0 0.0
    %704 = vmatpush.msra.mxu0 %v53
    %705 = vmatpush.msra.mxu0 %v52
    %706 = vmatpush.msra.mxu0 %v51
    %707 = vmatpush.msra.mxu0 %v50
    %708 = vmatmul.f32.gmra.mxu0 %v450
    %v709 = vpop.f32.mrf.mxu0
    %v710 = vadd.f32 0.0, %v709
    %711 = vdwg.mxu0
    %v720 = vrot.slane %v684, 1
    %v721 = vsel %vm298, %v685, %v720
    %v722 = vrot.slane %v686, 7
    %v723 = vsel %vm301, %v722, %v721
    %v724 = vrot.slane %v687, 6
    %v725 = vsel %vm304, %v724, %v723
    %v726 = vrot.slane %v688, 5
    %v727 = vsel %vm307, %v726, %v725
    %v728 = vrot.slane %v689, 4
    %v729 = vsel %vm310, %v728, %v727
    %v730 = vrot.slane %v690, 3
    %v731 = vsel %vm313, %v730, %v729
    %v732 = vrot.slane %v691, 2
    %v733 = vsel %vm316, %v732, %v731
    %v734 = vsel %vm213, %v733, 0
    %736 = vmatpush.msra.mxu0 0.0
    %737 = vmatpush.msra.mxu0 0.0
    %738 = vmatpush.msra.mxu0 0.0
    %739 = vmatpush.msra.mxu0 0.0
    %740 = vmatpush.msra.mxu0 0.0
    %741 = vmatpush.msra.mxu0 0.0
    %742 = vmatpush.msra.mxu0 0.0
    %743 = vmatpush.msra.mxu0 0.0
    %744 = vmatpush.msra.mxu0 0.0
    %745 = vmatpush.msra.mxu0 0.0
    %746 = vmatpush.msra.mxu0 0.0
    %747 = vmatpush.msra.mxu0 0.0
    %748 = vmatpush.msra.mxu0 %v49
    %749 = vmatpush.msra.mxu0 %v48
    %750 = vmatpush.msra.mxu0 %v47
    %751 = vmatpush.msra.mxu0 %v46
    %752 = vmatmul.f32.gmra.mxu0 %v734
    %v753 = vpop.f32.mrf.mxu0
    %v754 = vadd.f32 %v710, %v753
    %755 = vdwg.mxu0
    %v756 = vadd.f32 %v754, %v68
    %v757 = vtanh.pop %v756
    %v759 = vsel %vm213, %v473, 0
    %761 = vmatpush.msra.mxu0 0.0
    %762 = vmatpush.msra.mxu0 0.0
    %763 = vmatpush.msra.mxu0 0.0
    %764 = vmatpush.msra.mxu0 0.0
    %765 = vmatpush.msra.mxu0 0.0
    %766 = vmatpush.msra.mxu0 0.0
    %767 = vmatpush.msra.mxu0 0.0
    %768 = vmatpush.msra.mxu0 0.0
    %769 = vmatpush.msra.mxu0 0.0
    %770 = vmatpush.msra.mxu0 0.0
    %771 = vmatpush.msra.mxu0 0.0
    %772 = vmatpush.msra.mxu0 0.0
    %773 = vmatpush.msra.mxu0 %v61
    %774 = vmatpush.msra.mxu0 %v60
    %775 = vmatpush.msra.mxu0 %v59
    %776 = vmatpush.msra.mxu0 %v58
    %777 = vmatmul.f32.gmra.mxu0 %v759
    %v778 = vpop.f32.mrf.mxu0
    %v779 = vadd.f32 0.0, %v778
    %780 = vdwg.mxu0
    %v782 = vsel %vm213, %v757, 0
    %784 = vmatpush.msra.mxu0 0.0
    %785 = vmatpush.msra.mxu0 0.0
    %786 = vmatpush.msra.mxu0 0.0
    %787 = vmatpush.msra.mxu0 0.0
    %788 = vmatpush.msra.mxu0 0.0
    %789 = vmatpush.msra.mxu0 0.0
    %790 = vmatpush.msra.mxu0 0.0
    %791 = vmatpush.msra.mxu0 0.0
    %792 = vmatpush.msra.mxu0 0.0
    %793 = vmatpush.msra.mxu0 0.0
    %794 = vmatpush.msra.mxu0 0.0
    %795 = vmatpush.msra.mxu0 0.0
    %796 = vmatpush.msra.mxu0 %v57
    %797 = vmatpush.msra.mxu0 %v56
    %798 = vmatpush.msra.mxu0 %v55
    %799 = vmatpush.msra.mxu0 %v54
    %800 = vmatmul.f32.gmra.mxu0 %v782
    %v801 = vpop.f32.mrf.mxu0
    %v802 = vadd.f32 %v779, %v801
    %803 = vdwg.mxu0
    %v804 = vadd.f32 %v802, %v72
    %v805 = vtanh.pop %v804
    %806 = vmatpush.msra.mxu0 0.0
    %807 = vmatpush.msra.mxu0 0.0
    %808 = vmatpush.msra.mxu0 0.0
    %809 = vmatpush.msra.mxu0 0.0
    %810 = vmatpush.msra.mxu0 0.0
    %811 = vmatpush.msra.mxu0 0.0
    %812 = vmatpush.msra.mxu0 0.0
    %813 = vmatpush.msra.mxu0 0.0
    %814 = vmatpush.msra.mxu0 0.0
    %815 = vmatpush.msra.mxu0 0.0
    %816 = vmatpush.msra.mxu0 0.0
    %817 = vmatpush.msra.mxu0 0.0
    %818 = vmatpush.msra.mxu0 %v45
    %819 = vmatpush.msra.mxu0 %v44
    %820 = vmatpush.msra.mxu0 %v43
    %821 = vmatpush.msra.mxu0 %v42
    %822 = vmatmul.f32.gmra.mxu0 %v568
    %v823 = vpop.f32.mrf.mxu0
    %v824 = vadd.f32 0.0, %v823
    %825 = vdwg.mxu0
    %v827 = vrot.slane %v824, 6
    %v828 = vrot.slane %v824, 7
    %v829 = vrot.slane %v824, 1
    %v830 = vrot.slane %v824, 2
    %v831 = vrot.slane %v824, 3
    %v832 = vrot.slane %v824, 4
    %v833 = vrot.slane %v824, 5
    %v842 = vadd.f32 %v166, %v827
    %v843 = vadd.f32 %v169, %v828
    %v844 = vadd.f32 %v172, %v824
    %v845 = vadd.f32 %v175, %v829
    %v846 = vadd.f32 %v178, %v830
    %v847 = vadd.f32 %v181, %v831
    %v848 = vadd.f32 %v184, %v832
    %v849 = vadd.f32 %v187, %v833
    %v850 = vtanh.pop %v842
    %v851 = vtanh.pop %v843
    %v852 = vtanh.pop %v844
    %v853 = vtanh.pop %v845
    %v854 = vtanh.pop %v846
    %v855 = vtanh.pop %v847
    %v856 = vtanh.pop %v848
    %v857 = vtanh.pop %v849
    %858 = vmatpush.msra.mxu0 0.0
    %859 = vmatpush.msra.mxu0 0.0
    %860 = vmatpush.msra.mxu0 0.0
    %861 = vmatpush.msra.mxu0 0.0
    %862 = vmatpush.msra.mxu0 0.0
    %863 = vmatpush.msra.mxu0 0.0
    %864 = vmatpush.msra.mxu0 0.0
    %865 = vmatpush.msra.mxu0 0.0
    %866 = vmatpush.msra.mxu0 0.0
    %867 = vmatpush.msra.mxu0 0.0
    %868 = vmatpush.msra.mxu0 0.0
    %869 = vmatpush.msra.mxu0 0.0
    %870 = vmatpush.msra.mxu0 %v53
    %871 = vmatpush.msra.mxu0 %v52
    %872 = vmatpush.msra.mxu0 %v51
    %873 = vmatpush.msra.mxu0 %v50
    %874 = vmatmul.f32.gmra.mxu0 %v616
    %v875 = vpop.f32.mrf.mxu0
    %v876 = vadd.f32 0.0, %v875
    %877 = vdwg.mxu0
    %v886 = vrot.slane %v850, 2
    %v887 = vrot.slane %v851, 1
    %v888 = vsel %vm298, %v887, %v886
    %v889 = vsel %vm301, %v852, %v888
    %v890 = vrot.slane %v853, 7
    %v891 = vsel %vm304, %v890, %v889
    %v892 = vrot.slane %v854, 6
    %v893 = vsel %vm307, %v892, %v891
    %v894 = vrot.slane %v855, 5
    %v895 = vsel %vm310, %v894, %v893
    %v896 = vrot.slane %v856, 4
    %v897 = vsel %vm313, %v896, %v895
    %v898 = vrot.slane %v857, 3
    %v899 = vsel %vm316, %v898, %v897
    %v900 = vsel %vm213, %v899, 0
    %902 = vmatpush.msra.mxu0 0.0
    %903 = vmatpush.msra.mxu0 0.0
    %904 = vmatpush.msra.mxu0 0.0
    %905 = vmatpush.msra.mxu0 0.0
    %906 = vmatpush.msra.mxu0 0.0
    %907 = vmatpush.msra.mxu0 0.0
    %908 = vmatpush.msra.mxu0 0.0
    %909 = vmatpush.msra.mxu0 0.0
    %910 = vmatpush.msra.mxu0 0.0
    %911 = vmatpush.msra.mxu0 0.0
    %912 = vmatpush.msra.mxu0 0.0
    %913 = vmatpush.msra.mxu0 0.0
    %914 = vmatpush.msra.mxu0 %v49
    %915 = vmatpush.msra.mxu0 %v48
    %916 = vmatpush.msra.mxu0 %v47
    %917 = vmatpush.msra.mxu0 %v46
    %918 = vmatmul.f32.gmra.mxu0 %v900
    %v919 = vpop.f32.mrf.mxu0
    %v920 = vadd.f32 %v876, %v919
    %921 = vdwg.mxu0
    %v922 = vadd.f32 %v920, %v68
    %v923 = vtanh.pop %v922
    %v925 = vsel %vm213, %v639, 0
    %927 = vmatpush.msra.mxu0 0.0
    %928 = vmatpush.msra.mxu0 0.0
    %929 = vmatpush.msra.mxu0 0.0
    %930 = vmatpush.msra.mxu0 0.0
    %931 = vmatpush.msra.mxu0 0.0
    %932 = vmatpush.msra.mxu0 0.0
    %933 = vmatpush.msra.mxu0 0.0
    %934 = vmatpush.msra.mxu0 0.0
    %935 = vmatpush.msra.mxu0 0.0
    %936 = vmatpush.msra.mxu0 0.0
    %937 = vmatpush.msra.mxu0 0.0
    %938 = vmatpush.msra.mxu0 0.0
    %939 = vmatpush.msra.mxu0 %v61
    %940 = vmatpush.msra.mxu0 %v60
    %941 = vmatpush.msra.mxu0 %v59
    %942 = vmatpush.msra.mxu0 %v58
    %943 = vmatmul.f32.gmra.mxu0 %v925
    %v944 = vpop.f32.mrf.mxu0
    %v945 = vadd.f32 0.0, %v944
    %946 = vdwg.mxu0
    %v948 = vsel %vm213, %v923, 0
    %950 = vmatpush.msra.mxu0 0.0
    %951 = vmatpush.msra.mxu0 0.0
    %952 = vmatpush.msra.mxu0 0.0
    %953 = vmatpush.msra.mxu0 0.0
    %954 = vmatpush.msra.mxu0 0.0
    %955 = vmatpush.msra.mxu0 0.0
    %956 = vmatpush.msra.mxu0 0.0
    %957 = vmatpush.msra.mxu0 0.0
    %958 = vmatpush.msra.mxu0 0.0
    %959 = vmatpush.msra.mxu0 0.0
    %960 = vmatpush.msra.mxu0 0.0
    %961 = vmatpush.msra.mxu0 0.0
    %962 = vmatpush.msra.mxu0 %v57
    %963 = vmatpush.msra.mxu0 %v56
    %964 = vmatpush.msra.mxu0 %v55
    %965 = vmatpush.msra.mxu0 %v54
    %966 = vmatmul.f32.gmra.mxu0 %v948
    %v967 = vpop.f32.mrf.mxu0
    %v968 = vadd.f32 %v945, %v967
    %969 = vdwg.mxu0
    %v970 = vadd.f32 %v968, %v72
    %v971 = vtanh.pop %v970
    %972 = vmatpush.msra.mxu0 0.0
    %973 = vmatpush.msra.mxu0 0.0
    %974 = vmatpush.msra.mxu0 0.0
    %975 = vmatpush.msra.mxu0 0.0
    %976 = vmatpush.msra.mxu0 0.0
    %977 = vmatpush.msra.mxu0 0.0
    %978 = vmatpush.msra.mxu0 0.0
    %979 = vmatpush.msra.mxu0 0.0
    %980 = vmatpush.msra.mxu0 0.0
    %981 = vmatpush.msra.mxu0 0.0
    %982 = vmatpush.msra.mxu0 0.0
    %983 = vmatpush.msra.mxu0 0.0
    %984 = vmatpush.msra.mxu0 %v45
    %985 = vmatpush.msra.mxu0 %v44
    %986 = vmatpush.msra.mxu0 %v43
    %987 = vmatpush.msra.mxu0 %v42
    %988 = vmatmul.f32.gmra.mxu0 %v734
    %v989 = vpop.f32.mrf.mxu0
    %v990 = vadd.f32 0.0, %v989
    %991 = vdwg.mxu0
    %v993 = vrot.slane %v990, 6
    %v994 = vrot.slane %v990, 7
    %v995 = vrot.slane %v990, 1
    %v996 = vrot.slane %v990, 2
    %v997 = vrot.slane %v990, 3
    %v998 = vrot.slane %v990, 4
    %v999 = vrot.slane %v990, 5
    %v1008 = vadd.f32 %v190, %v993
    %v1009 = vadd.f32 %v193, %v994
    %v1010 = vadd.f32 %v196, %v990
    %v1011 = vadd.f32 %v199, %v995
    %v1012 = vadd.f32 %v202, %v996
    %v1013 = vadd.f32 %v205, %v997
    %v1014 = vadd.f32 %v208, %v998
    %v1015 = vadd.f32 %v211, %v999
    %v1016 = vtanh.pop %v1008
    %v1017 = vtanh.pop %v1009
    %v1018 = vtanh.pop %v1010
    %v1019 = vtanh.pop %v1011
    %v1020 = vtanh.pop %v1012
    %v1021 = vtanh.pop %v1013
    %v1022 = vtanh.pop %v1014
    %v1023 = vtanh.pop %v1015
    %1024 = vmatpush.msra.mxu0 0.0
    %1025 = vmatpush.msra.mxu0 0.0
    %1026 = vmatpush.msra.mxu0 0.0
    %1027 = vmatpush.msra.mxu0 0.0
    %1028 = vmatpush.msra.mxu0 0.0
    %1029 = vmatpush.msra.mxu0 0.0
    %1030 = vmatpush.msra.mxu0 0.0
    %1031 = vmatpush.msra.mxu0 0.0
    %1032 = vmatpush.msra.mxu0 0.0
    %1033 = vmatpush.msra.mxu0 0.0
    %1034 = vmatpush.msra.mxu0 0.0
    %1035 = vmatpush.msra.mxu0 0.0
    %1036 = vmatpush.msra.mxu0 %v53
    %1037 = vmatpush.msra.mxu0 %v52
    %1038 = vmatpush.msra.mxu0 %v51
    %1039 = vmatpush.msra.mxu0 %v50
    %1040 = vmatmul.f32.gmra.mxu0 %v782
    %v1041 = vpop.f32.mrf.mxu0
    %v1042 = vadd.f32 0.0, %v1041
    %1043 = vdwg.mxu0
    %v1052 = vrot.slane %v1016, 2
    %v1053 = vrot.slane %v1017, 1
    %v1054 = vsel %vm298, %v1053, %v1052
    %v1055 = vsel %vm301, %v1018, %v1054
    %v1056 = vrot.slane %v1019, 7
    %v1057 = vsel %vm304, %v1056, %v1055
    %v1058 = vrot.slane %v1020, 6
    %v1059 = vsel %vm307, %v1058, %v1057
    %v1060 = vrot.slane %v1021, 5
    %v1061 = vsel %vm310, %v1060, %v1059
    %v1062 = vrot.slane %v1022, 4
    %v1063 = vsel %vm313, %v1062, %v1061
    %v1064 = vrot.slane %v1023, 3
    %v1065 = vsel %vm316, %v1064, %v1063
    %v1066 = vsel %vm213, %v1065, 0
    %1068 = vmatpush.msra.mxu0 0.0
    %1069 = vmatpush.msra.mxu0 0.0
    %1070 = vmatpush.msra.mxu0 0.0
    %1071 = vmatpush.msra.mxu0 0.0
    %1072 = vmatpush.msra.mxu0 0.0
    %1073 = vmatpush.msra.mxu0 0.0
    %1074 = vmatpush.msra.mxu0 0.0
    %1075 = vmatpush.msra.mxu0 0.0
    %1076 = vmatpush.msra.mxu0 0.0
    %1077 = vmatpush.msra.mxu0 0.0
    %1078 = vmatpush.msra.mxu0 0.0
    %1079 = vmatpush.msra.mxu0 0.0
    %1080 = vmatpush.msra.mxu0 %v49
    %1081 = vmatpush.msra.mxu0 %v48
    %1082 = vmatpush.msra.mxu0 %v47
    %1083 = vmatpush.msra.mxu0 %v46
    %1084 = vmatmul.f32.gmra.mxu0 %v1066
    %v1085 = vpop.f32.mrf.mxu0
    %v1086 = vadd.f32 %v1042, %v1085
    %1087 = vdwg.mxu0
    %v1088 = vadd.f32 %v1086, %v68
    %v1089 = vtanh.pop %v1088
    %v1091 = vsel %vm213, %v805, 0
    %1093 = vmatpush.msra.mxu0 0.0
    %1094 = vmatpush.msra.mxu0 0.0
    %1095 = vmatpush.msra.mxu0 0.0
    %1096 = vmatpush.msra.mxu0 0.0
    %1097 = vmatpush.msra.mxu0 0.0
    %1098 = vmatpush.msra.mxu0 0.0
    %1099 = vmatpush.msra.mxu0 0.0
    %1100 = vmatpush.msra.mxu0 0.0
    %1101 = vmatpush.msra.mxu0 0.0
    %1102 = vmatpush.msra.mxu0 0.0
    %1103 = vmatpush.msra.mxu0 0.0
    %1104 = vmatpush.msra.mxu0 0.0
    %1105 = vmatpush.msra.mxu0 %v61
    %1106 = vmatpush.msra.mxu0 %v60
    %1107 = vmatpush.msra.mxu0 %v59
    %1108 = vmatpush.msra.mxu0 %v58
    %1109 = vmatmul.f32.gmra.mxu0 %v1091
    %v1110 = vpop.f32.mrf.mxu0
    %v1111 = vadd.f32 0.0, %v1110
    %1112 = vdwg.mxu0
    %v1114 = vsel %vm213, %v1089, 0
    %1116 = vmatpush.msra.mxu0 0.0
    %1117 = vmatpush.msra.mxu0 0.0
    %1118 = vmatpush.msra.mxu0 0.0
    %1119 = vmatpush.msra.mxu0 0.0
    %1120 = vmatpush.msra.mxu0 0.0
    %1121 = vmatpush.msra.mxu0 0.0
    %1122 = vmatpush.msra.mxu0 0.0
    %1123 = vmatpush.msra.mxu0 0.0
    %1124 = vmatpush.msra.mxu0 0.0
    %1125 = vmatpush.msra.mxu0 0.0
    %1126 = vmatpush.msra.mxu0 0.0
    %1127 = vmatpush.msra.mxu0 0.0
    %1128 = vmatpush.msra.mxu0 %v57
    %1129 = vmatpush.msra.mxu0 %v56
    %1130 = vmatpush.msra.mxu0 %v55
    %1131 = vmatpush.msra.mxu0 %v54
    %1132 = vmatmul.f32.gmra.mxu0 %v1114
    %v1133 = vpop.f32.mrf.mxu0
    %v1134 = vadd.f32 %v1111, %v1133
    %1135 = vdwg.mxu0
    %v1136 = vadd.f32 %v1134, %v72
    %v1137 = vtanh.pop %v1136
    %1138 = vmatpush.msra.mxu0 0.0
    %1139 = vmatpush.msra.mxu0 0.0
    %1140 = vmatpush.msra.mxu0 0.0
    %1141 = vmatpush.msra.mxu0 0.0
    %1142 = vmatpush.msra.mxu0 0.0
    %1143 = vmatpush.msra.mxu0 0.0
    %1144 = vmatpush.msra.mxu0 0.0
    %1145 = vmatpush.msra.mxu0 0.0
    %1146 = vmatpush.msra.mxu0 0.0
    %1147 = vmatpush.msra.mxu0 0.0
    %1148 = vmatpush.msra.mxu0 0.0
    %1149 = vmatpush.msra.mxu0 0.0
    %1150 = vmatpush.msra.mxu0 %v45
    %1151 = vmatpush.msra.mxu0 %v44
    %1152 = vmatpush.msra.mxu0 %v43
    %1153 = vmatpush.msra.mxu0 %v42
    %1154 = vmatmul.f32.gmra.mxu0 %v900
    %v1155 = vpop.f32.mrf.mxu0
    %v1156 = vadd.f32 0.0, %v1155
    %1157 = vdwg.mxu0
    %v1159 = vrot.slane %v1156, 5
    %v1160 = vrot.slane %v1156, 6
    %v1161 = vrot.slane %v1156, 7
    %v1162 = vrot.slane %v1156, 1
    %v1163 = vrot.slane %v1156, 2
    %v1164 = vrot.slane %v1156, 3
    %v1165 = vrot.slane %v1156, 4
    %v1174 = vadd.f32 %v166, %v1159
    %v1175 = vadd.f32 %v169, %v1160
    %v1176 = vadd.f32 %v172, %v1161
    %v1177 = vadd.f32 %v175, %v1156
    %v1178 = vadd.f32 %v178, %v1162
    %v1179 = vadd.f32 %v181, %v1163
    %v1180 = vadd.f32 %v184, %v1164
    %v1181 = vadd.f32 %v187, %v1165
    %v1182 = vtanh.pop %v1174
    %v1183 = vtanh.pop %v1175
    %v1184 = vtanh.pop %v1176
    %v1185 = vtanh.pop %v1177
    %v1186 = vtanh.pop %v1178
    %v1187 = vtanh.pop %v1179
    %v1188 = vtanh.pop %v1180
    %v1189 = vtanh.pop %v1181
    %1190 = vmatpush.msra.mxu0 0.0
    %1191 = vmatpush.msra.mxu0 0.0
    %1192 = vmatpush.msra.mxu0 0.0
    %1193 = vmatpush.msra.mxu0 0.0
    %1194 = vmatpush.msra.mxu0 0.0
    %1195 = vmatpush.msra.mxu0 0.0
    %1196 = vmatpush.msra.mxu0 0.0
    %1197 = vmatpush.msra.mxu0 0.0
    %1198 = vmatpush.msra.mxu0 0.0
    %1199 = vmatpush.msra.mxu0 0.0
    %1200 = vmatpush.msra.mxu0 0.0
    %1201 = vmatpush.msra.mxu0 0.0
    %1202 = vmatpush.msra.mxu0 %v53
    %1203 = vmatpush.msra.mxu0 %v52
    %1204 = vmatpush.msra.mxu0 %v51
    %1205 = vmatpush.msra.mxu0 %v50
    %1206 = vmatmul.f32.gmra.mxu0 %v948
    %v1207 = vpop.f32.mrf.mxu0
    %v1208 = vadd.f32 0.0, %v1207
    %1209 = vdwg.mxu0
    %v1218 = vrot.slane %v1182, 3
    %v1219 = vrot.slane %v1183, 2
    %v1220 = vsel %vm298, %v1219, %v1218
    %v1221 = vrot.slane %v1184, 1
    %v1222 = vsel %vm301, %v1221, %v1220
    %v1223 = vsel %vm304, %v1185, %v1222
    %v1224 = vrot.slane %v1186, 7
    %v1225 = vsel %vm307, %v1224, %v1223
    %v1226 = vrot.slane %v1187, 6
    %v1227 = vsel %vm310, %v1226, %v1225
    %v1228 = vrot.slane %v1188, 5
    %v1229 = vsel %vm313, %v1228, %v1227
    %v1230 = vrot.slane %v1189, 4
    %v1231 = vsel %vm316, %v1230, %v1229
    %v1232 = vsel %vm213, %v1231, 0
    %1234 = vmatpush.msra.mxu0 0.0
    %1235 = vmatpush.msra.mxu0 0.0
    %1236 = vmatpush.msra.mxu0 0.0
    %1237 = vmatpush.msra.mxu0 0.0
    %1238 = vmatpush.msra.mxu0 0.0
    %1239 = vmatpush.msra.mxu0 0.0
    %1240 = vmatpush.msra.mxu0 0.0
    %1241 = vmatpush.msra.mxu0 0.0
    %1242 = vmatpush.msra.mxu0 0.0
    %1243 = vmatpush.msra.mxu0 0.0
    %1244 = vmatpush.msra.mxu0 0.0
    %1245 = vmatpush.msra.mxu0 0.0
    %1246 = vmatpush.msra.mxu0 %v49
    %1247 = vmatpush.msra.mxu0 %v48
    %1248 = vmatpush.msra.mxu0 %v47
    %1249 = vmatpush.msra.mxu0 %v46
    %1250 = vmatmul.f32.gmra.mxu0 %v1232
    %v1251 = vpop.f32.mrf.mxu0
    %v1252 = vadd.f32 %v1208, %v1251
    %1253 = vdwg.mxu0
    %v1254 = vadd.f32 %v1252, %v68
    %v1255 = vtanh.pop %v1254
    %v1257 = vsel %vm213, %v971, 0
    %1259 = vmatpush.msra.mxu0 0.0
    %1260 = vmatpush.msra.mxu0 0.0
    %1261 = vmatpush.msra.mxu0 0.0
    %1262 = vmatpush.msra.mxu0 0.0
    %1263 = vmatpush.msra.mxu0 0.0
    %1264 = vmatpush.msra.mxu0 0.0
    %1265 = vmatpush.msra.mxu0 0.0
    %1266 = vmatpush.msra.mxu0 0.0
    %1267 = vmatpush.msra.mxu0 0.0
    %1268 = vmatpush.msra.mxu0 0.0
    %1269 = vmatpush.msra.mxu0 0.0
    %1270 = vmatpush.msra.mxu0 0.0
    %1271 = vmatpush.msra.mxu0 %v61
    %1272 = vmatpush.msra.mxu0 %v60
    %1273 = vmatpush.msra.mxu0 %v59
    %1274 = vmatpush.msra.mxu0 %v58
    %1275 = vmatmul.f32.gmra.mxu0 %v1257
    %v1276 = vpop.f32.mrf.mxu0
    %v1277 = vadd.f32 0.0, %v1276
    %1278 = vdwg.mxu0
    %v1280 = vsel %vm213, %v1255, 0
    %1282 = vmatpush.msra.mxu0 0.0
    %1283 = vmatpush.msra.mxu0 0.0
    %1284 = vmatpush.msra.mxu0 0.0
    %1285 = vmatpush.msra.mxu0 0.0
    %1286 = vmatpush.msra.mxu0 0.0
    %1287 = vmatpush.msra.mxu0 0.0
    %1288 = vmatpush.msra.mxu0 0.0
    %1289 = vmatpush.msra.mxu0 0.0
    %1290 = vmatpush.msra.mxu0 0.0
    %1291 = vmatpush.msra.mxu0 0.0
    %1292 = vmatpush.msra.mxu0 0.0
    %1293 = vmatpush.msra.mxu0 0.0
    %1294 = vmatpush.msra.mxu0 %v57
    %1295 = vmatpush.msra.mxu0 %v56
    %1296 = vmatpush.msra.mxu0 %v55
    %1297 = vmatpush.msra.mxu0 %v54
    %1298 = vmatmul.f32.gmra.mxu0 %v1280
    %v1299 = vpop.f32.mrf.mxu0
    %v1300 = vadd.f32 %v1277, %v1299
    %1301 = vdwg.mxu0
    %v1302 = vadd.f32 %v1300, %v72
    %v1303 = vtanh.pop %v1302
    %1304 = vmatpush.msra.mxu0 0.0
    %1305 = vmatpush.msra.mxu0 0.0
    %1306 = vmatpush.msra.mxu0 0.0
    %1307 = vmatpush.msra.mxu0 0.0
    %1308 = vmatpush.msra.mxu0 0.0
    %1309 = vmatpush.msra.mxu0 0.0
    %1310 = vmatpush.msra.mxu0 0.0
    %1311 = vmatpush.msra.mxu0 0.0
    %1312 = vmatpush.msra.mxu0 0.0
    %1313 = vmatpush.msra.mxu0 0.0
    %1314 = vmatpush.msra.mxu0 0.0
    %1315 = vmatpush.msra.mxu0 0.0
    %1316 = vmatpush.msra.mxu0 %v45
    %1317 = vmatpush.msra.mxu0 %v44
    %1318 = vmatpush.msra.mxu0 %v43
    %1319 = vmatpush.msra.mxu0 %v42
    %1320 = vmatmul.f32.gmra.mxu0 %v1066
    %v1321 = vpop.f32.mrf.mxu0
    %v1322 = vadd.f32 0.0, %v1321
    %1323 = vdwg.mxu0
    %v1325 = vrot.slane %v1322, 5
    %v1326 = vrot.slane %v1322, 6
    %v1327 = vrot.slane %v1322, 7
    %v1328 = vrot.slane %v1322, 1
    %v1329 = vrot.slane %v1322, 2
    %v1330 = vrot.slane %v1322, 3
    %v1331 = vrot.slane %v1322, 4
    %v1340 = vadd.f32 %v190, %v1325
    %v1341 = vadd.f32 %v193, %v1326
    %v1342 = vadd.f32 %v196, %v1327
    %v1343 = vadd.f32 %v199, %v1322
    %v1344 = vadd.f32 %v202, %v1328
    %v1345 = vadd.f32 %v205, %v1329
    %v1346 = vadd.f32 %v208, %v1330
    %v1347 = vadd.f32 %v211, %v1331
    %v1348 = vtanh.pop %v1340
    %v1349 = vtanh.pop %v1341
    %v1350 = vtanh.pop %v1342
    %v1351 = vtanh.pop %v1343
    %v1352 = vtanh.pop %v1344
    %v1353 = vtanh.pop %v1345
    %v1354 = vtanh.pop %v1346
    %v1355 = vtanh.pop %v1347
    %1356 = vmatpush.msra.mxu0 0.0
    %1357 = vmatpush.msra.mxu0 0.0
    %1358 = vmatpush.msra.mxu0 0.0
    %1359 = vmatpush.msra.mxu0 0.0
    %1360 = vmatpush.msra.mxu0 0.0
    %1361 = vmatpush.msra.mxu0 0.0
    %1362 = vmatpush.msra.mxu0 0.0
    %1363 = vmatpush.msra.mxu0 0.0
    %1364 = vmatpush.msra.mxu0 0.0
    %1365 = vmatpush.msra.mxu0 0.0
    %1366 = vmatpush.msra.mxu0 0.0
    %1367 = vmatpush.msra.mxu0 0.0
    %1368 = vmatpush.msra.mxu0 %v53
    %1369 = vmatpush.msra.mxu0 %v52
    %1370 = vmatpush.msra.mxu0 %v51
    %1371 = vmatpush.msra.mxu0 %v50
    %1372 = vmatmul.f32.gmra.mxu0 %v1114
    %v1373 = vpop.f32.mrf.mxu0
    %v1374 = vadd.f32 0.0, %v1373
    %1375 = vdwg.mxu0
    %v1384 = vrot.slane %v1348, 3
    %v1385 = vrot.slane %v1349, 2
    %v1386 = vsel %vm298, %v1385, %v1384
    %v1387 = vrot.slane %v1350, 1
    %v1388 = vsel %vm301, %v1387, %v1386
    %v1389 = vsel %vm304, %v1351, %v1388
    %v1390 = vrot.slane %v1352, 7
    %v1391 = vsel %vm307, %v1390, %v1389
    %v1392 = vrot.slane %v1353, 6
    %v1393 = vsel %vm310, %v1392, %v1391
    %v1394 = vrot.slane %v1354, 5
    %v1395 = vsel %vm313, %v1394, %v1393
    %v1396 = vrot.slane %v1355, 4
    %v1397 = vsel %vm316, %v1396, %v1395
    %v1398 = vsel %vm213, %v1397, 0
    %1400 = vmatpush.msra.mxu0 0.0
    %1401 = vmatpush.msra.mxu0 0.0
    %1402 = vmatpush.msra.mxu0 0.0
    %1403 = vmatpush.msra.mxu0 0.0
    %1404 = vmatpush.msra.mxu0 0.0
    %1405 = vmatpush.msra.mxu0 0.0
    %1406 = vmatpush.msra.mxu0 0.0
    %1407 = vmatpush.msra.mxu0 0.0
    %1408 = vmatpush.msra.mxu0 0.0
    %1409 = vmatpush.msra.mxu0 0.0
    %1410 = vmatpush.msra.mxu0 0.0
    %1411 = vmatpush.msra.mxu0 0.0
    %1412 = vmatpush.msra.mxu0 %v49
    %1413 = vmatpush.msra.mxu0 %v48
    %1414 = vmatpush.msra.mxu0 %v47
    %1415 = vmatpush.msra.mxu0 %v46
    %1416 = vmatmul.f32.gmra.mxu0 %v1398
    %v1417 = vpop.f32.mrf.mxu0
    %v1418 = vadd.f32 %v1374, %v1417
    %1419 = vdwg.mxu0
    %v1420 = vadd.f32 %v1418, %v68
    %v1421 = vtanh.pop %v1420
    %v1423 = vsel %vm213, %v1137, 0
    %1425 = vmatpush.msra.mxu0 0.0
    %1426 = vmatpush.msra.mxu0 0.0
    %1427 = vmatpush.msra.mxu0 0.0
    %1428 = vmatpush.msra.mxu0 0.0
    %1429 = vmatpush.msra.mxu0 0.0
    %1430 = vmatpush.msra.mxu0 0.0
    %1431 = vmatpush.msra.mxu0 0.0
    %1432 = vmatpush.msra.mxu0 0.0
    %1433 = vmatpush.msra.mxu0 0.0
    %1434 = vmatpush.msra.mxu0 0.0
    %1435 = vmatpush.msra.mxu0 0.0
    %1436 = vmatpush.msra.mxu0 0.0
    %1437 = vmatpush.msra.mxu0 %v61
    %1438 = vmatpush.msra.mxu0 %v60
    %1439 = vmatpush.msra.mxu0 %v59
    %1440 = vmatpush.msra.mxu0 %v58
    %1441 = vmatmul.f32.gmra.mxu0 %v1423
    %v1442 = vpop.f32.mrf.mxu0
    %v1443 = vadd.f32 0.0, %v1442
    %1444 = vdwg.mxu0
    %v1446 = vsel %vm213, %v1421, 0
    %1448 = vmatpush.msra.mxu0 0.0
    %1449 = vmatpush.msra.mxu0 0.0
    %1450 = vmatpush.msra.mxu0 0.0
    %1451 = vmatpush.msra.mxu0 0.0
    %1452 = vmatpush.msra.mxu0 0.0
    %1453 = vmatpush.msra.mxu0 0.0
    %1454 = vmatpush.msra.mxu0 0.0
    %1455 = vmatpush.msra.mxu0 0.0
    %1456 = vmatpush.msra.mxu0 0.0
    %1457 = vmatpush.msra.mxu0 0.0
    %1458 = vmatpush.msra.mxu0 0.0
    %1459 = vmatpush.msra.mxu0 0.0
    %1460 = vmatpush.msra.mxu0 %v57
    %1461 = vmatpush.msra.mxu0 %v56
    %1462 = vmatpush.msra.mxu0 %v55
    %1463 = vmatpush.msra.mxu0 %v54
    %1464 = vmatmul.f32.gmra.mxu0 %v1446
    %v1465 = vpop.f32.mrf.mxu0
    %v1466 = vadd.f32 %v1443, %v1465
    %1467 = vdwg.mxu0
    %v1468 = vadd.f32 %v1466, %v72
    %v1469 = vtanh.pop %v1468
    %1470 = vmatpush.msra.mxu0 0.0
    %1471 = vmatpush.msra.mxu0 0.0
    %1472 = vmatpush.msra.mxu0 0.0
    %1473 = vmatpush.msra.mxu0 0.0
    %1474 = vmatpush.msra.mxu0 0.0
    %1475 = vmatpush.msra.mxu0 0.0
    %1476 = vmatpush.msra.mxu0 0.0
    %1477 = vmatpush.msra.mxu0 0.0
    %1478 = vmatpush.msra.mxu0 0.0
    %1479 = vmatpush.msra.mxu0 0.0
    %1480 = vmatpush.msra.mxu0 0.0
    %1481 = vmatpush.msra.mxu0 0.0
    %1482 = vmatpush.msra.mxu0 %v45
    %1483 = vmatpush.msra.mxu0 %v44
    %1484 = vmatpush.msra.mxu0 %v43
    %1485 = vmatpush.msra.mxu0 %v42
    %1486 = vmatmul.f32.gmra.mxu0 %v1232
    %v1487 = vpop.f32.mrf.mxu0
    %v1488 = vadd.f32 0.0, %v1487
    %1489 = vdwg.mxu0
    %v1491 = vrot.slane %v1488, 4
    %v1492 = vrot.slane %v1488, 5
    %v1493 = vrot.slane %v1488, 6
    %v1494 = vrot.slane %v1488, 7
    %v1495 = vrot.slane %v1488, 1
    %v1496 = vrot.slane %v1488, 2
    %v1497 = vrot.slane %v1488, 3
    %v1506 = vadd.f32 %v166, %v1491
    %v1507 = vadd.f32 %v169, %v1492
    %v1508 = vadd.f32 %v172, %v1493
    %v1509 = vadd.f32 %v175, %v1494
    %v1510 = vadd.f32 %v178, %v1488
    %v1511 = vadd.f32 %v181, %v1495
    %v1512 = vadd.f32 %v184, %v1496
    %v1513 = vadd.f32 %v187, %v1497
    %v1514 = vtanh.pop %v1506
    %v1515 = vtanh.pop %v1507
    %v1516 = vtanh.pop %v1508
    %v1517 = vtanh.pop %v1509
    %v1518 = vtanh.pop %v1510
    %v1519 = vtanh.pop %v1511
    %v1520 = vtanh.pop %v1512
    %v1521 = vtanh.pop %v1513
    %1522 = vmatpush.msra.mxu0 0.0
    %1523 = vmatpush.msra.mxu0 0.0
    %1524 = vmatpush.msra.mxu0 0.0
    %1525 = vmatpush.msra.mxu0 0.0
    %1526 = vmatpush.msra.mxu0 0.0
    %1527 = vmatpush.msra.mxu0 0.0
    %1528 = vmatpush.msra.mxu0 0.0
    %1529 = vmatpush.msra.mxu0 0.0
    %1530 = vmatpush.msra.mxu0 0.0
    %1531 = vmatpush.msra.mxu0 0.0
    %1532 = vmatpush.msra.mxu0 0.0
    %1533 = vmatpush.msra.mxu0 0.0
    %1534 = vmatpush.msra.mxu0 %v53
    %1535 = vmatpush.msra.mxu0 %v52
    %1536 = vmatpush.msra.mxu0 %v51
    %1537 = vmatpush.msra.mxu0 %v50
    %1538 = vmatmul.f32.gmra.mxu0 %v1280
    %v1539 = vpop.f32.mrf.mxu0
    %v1540 = vadd.f32 0.0, %v1539
    %1541 = vdwg.mxu0
    %v1550 = vrot.slane %v1514, 4
    %v1551 = vrot.slane %v1515, 3
    %v1552 = vsel %vm298, %v1551, %v1550
    %v1553 = vrot.slane %v1516, 2
    %v1554 = vsel %vm301, %v1553, %v1552
    %v1555 = vrot.slane %v1517, 1
    %v1556 = vsel %vm304, %v1555, %v1554
    %v1557 = vsel %vm307, %v1518, %v1556
    %v1558 = vrot.slane %v1519, 7
    %v1559 = vsel %vm310, %v1558, %v1557
    %v1560 = vrot.slane %v1520, 6
    %v1561 = vsel %vm313, %v1560, %v1559
    %v1562 = vrot.slane %v1521, 5
    %v1563 = vsel %vm316, %v1562, %v1561
    %v1564 = vsel %vm213, %v1563, 0
    %1566 = vmatpush.msra.mxu0 0.0
    %1567 = vmatpush.msra.mxu0 0.0
    %1568 = vmatpush.msra.mxu0 0.0
    %1569 = vmatpush.msra.mxu0 0.0
    %1570 = vmatpush.msra.mxu0 0.0
    %1571 = vmatpush.msra.mxu0 0.0
    %1572 = vmatpush.msra.mxu0 0.0
    %1573 = vmatpush.msra.mxu0 0.0
    %1574 = vmatpush.msra.mxu0 0.0
    %1575 = vmatpush.msra.mxu0 0.0
    %1576 = vmatpush.msra.mxu0 0.0
    %1577 = vmatpush.msra.mxu0 0.0
    %1578 = vmatpush.msra.mxu0 %v49
    %1579 = vmatpush.msra.mxu0 %v48
    %1580 = vmatpush.msra.mxu0 %v47
    %1581 = vmatpush.msra.mxu0 %v46
    %1582 = vmatmul.f32.gmra.mxu0 %v1564
    %v1583 = vpop.f32.mrf.mxu0
    %v1584 = vadd.f32 %v1540, %v1583
    %1585 = vdwg.mxu0
    %v1586 = vadd.f32 %v1584, %v68
    %v1587 = vtanh.pop %v1586
    %v1589 = vsel %vm213, %v1303, 0
    %1591 = vmatpush.msra.mxu0 0.0
    %1592 = vmatpush.msra.mxu0 0.0
    %1593 = vmatpush.msra.mxu0 0.0
    %1594 = vmatpush.msra.mxu0 0.0
    %1595 = vmatpush.msra.mxu0 0.0
    %1596 = vmatpush.msra.mxu0 0.0
    %1597 = vmatpush.msra.mxu0 0.0
    %1598 = vmatpush.msra.mxu0 0.0
    %1599 = vmatpush.msra.mxu0 0.0
    %1600 = vmatpush.msra.mxu0 0.0
    %1601 = vmatpush.msra.mxu0 0.0
    %1602 = vmatpush.msra.mxu0 0.0
    %1603 = vmatpush.msra.mxu0 %v61
    %1604 = vmatpush.msra.mxu0 %v60
    %1605 = vmatpush.msra.mxu0 %v59
    %1606 = vmatpush.msra.mxu0 %v58
    %1607 = vmatmul.f32.gmra.mxu0 %v1589
    %v1608 = vpop.f32.mrf.mxu0
    %v1609 = vadd.f32 0.0, %v1608
    %1610 = vdwg.mxu0
    %v1612 = vsel %vm213, %v1587, 0
    %1614 = vmatpush.msra.mxu0 0.0
    %1615 = vmatpush.msra.mxu0 0.0
    %1616 = vmatpush.msra.mxu0 0.0
    %1617 = vmatpush.msra.mxu0 0.0
    %1618 = vmatpush.msra.mxu0 0.0
    %1619 = vmatpush.msra.mxu0 0.0
    %1620 = vmatpush.msra.mxu0 0.0
    %1621 = vmatpush.msra.mxu0 0.0
    %1622 = vmatpush.msra.mxu0 0.0
    %1623 = vmatpush.msra.mxu0 0.0
    %1624 = vmatpush.msra.mxu0 0.0
    %1625 = vmatpush.msra.mxu0 0.0
    %1626 = vmatpush.msra.mxu0 %v57
    %1627 = vmatpush.msra.mxu0 %v56
    %1628 = vmatpush.msra.mxu0 %v55
    %1629 = vmatpush.msra.mxu0 %v54
    %1630 = vmatmul.f32.gmra.mxu0 %v1612
    %v1631 = vpop.f32.mrf.mxu0
    %v1632 = vadd.f32 %v1609, %v1631
    %1633 = vdwg.mxu0
    %v1634 = vadd.f32 %v1632, %v72
    %v1635 = vtanh.pop %v1634
    %1636 = vmatpush.msra.mxu0 0.0
    %1637 = vmatpush.msra.mxu0 0.0
    %1638 = vmatpush.msra.mxu0 0.0
    %1639 = vmatpush.msra.mxu0 0.0
    %1640 = vmatpush.msra.mxu0 0.0
    %1641 = vmatpush.msra.mxu0 0.0
    %1642 = vmatpush.msra.mxu0 0.0
    %1643 = vmatpush.msra.mxu0 0.0
    %1644 = vmatpush.msra.mxu0 0.0
    %1645 = vmatpush.msra.mxu0 0.0
    %1646 = vmatpush.msra.mxu0 0.0
    %1647 = vmatpush.msra.mxu0 0.0
    %1648 = vmatpush.msra.mxu0 %v45
    %1649 = vmatpush.msra.mxu0 %v44
    %1650 = vmatpush.msra.mxu0 %v43
    %1651 = vmatpush.msra.mxu0 %v42
    %1652 = vmatmul.f32.gmra.mxu0 %v1398
    %v1653 = vpop.f32.mrf.mxu0
    %v1654 = vadd.f32 0.0, %v1653
    %1655 = vdwg.mxu0
    %v1657 = vrot.slane %v1654, 4
    %v1658 = vrot.slane %v1654, 5
    %v1659 = vrot.slane %v1654, 6
    %v1660 = vrot.slane %v1654, 7
    %v1661 = vrot.slane %v1654, 1
    %v1662 = vrot.slane %v1654, 2
    %v1663 = vrot.slane %v1654, 3
    %v1672 = vadd.f32 %v190, %v1657
    %v1673 = vadd.f32 %v193, %v1658
    %v1674 = vadd.f32 %v196, %v1659
    %v1675 = vadd.f32 %v199, %v1660
    %v1676 = vadd.f32 %v202, %v1654
    %v1677 = vadd.f32 %v205, %v1661
    %v1678 = vadd.f32 %v208, %v1662
    %v1679 = vadd.f32 %v211, %v1663
    %v1680 = vtanh.pop %v1672
    %v1681 = vtanh.pop %v1673
    %v1682 = vtanh.pop %v1674
    %v1683 = vtanh.pop %v1675
    %v1684 = vtanh.pop %v1676
    %v1685 = vtanh.pop %v1677
    %v1686 = vtanh.pop %v1678
    %v1687 = vtanh.pop %v1679
    %1688 = vmatpush.msra.mxu0 0.0
    %1689 = vmatpush.msra.mxu0 0.0
    %1690 = vmatpush.msra.mxu0 0.0
    %1691 = vmatpush.msra.mxu0 0.0
    %1692 = vmatpush.msra.mxu0 0.0
    %1693 = vmatpush.msra.mxu0 0.0
    %1694 = vmatpush.msra.mxu0 0.0
    %1695 = vmatpush.msra.mxu0 0.0
    %1696 = vmatpush.msra.mxu0 0.0
    %1697 = vmatpush.msra.mxu0 0.0
    %1698 = vmatpush.msra.mxu0 0.0
    %1699 = vmatpush.msra.mxu0 0.0
    %1700 = vmatpush.msra.mxu0 %v53
    %1701 = vmatpush.msra.mxu0 %v52
    %1702 = vmatpush.msra.mxu0 %v51
    %1703 = vmatpush.msra.mxu0 %v50
    %1704 = vmatmul.f32.gmra.mxu0 %v1446
    %v1705 = vpop.f32.mrf.mxu0
    %v1706 = vadd.f32 0.0, %v1705
    %1707 = vdwg.mxu0
    %v1716 = vrot.slane %v1680, 4
    %v1717 = vrot.slane %v1681, 3
    %v1718 = vsel %vm298, %v1717, %v1716
    %v1719 = vrot.slane %v1682, 2
    %v1720 = vsel %vm301, %v1719, %v1718
    %v1721 = vrot.slane %v1683, 1
    %v1722 = vsel %vm304, %v1721, %v1720
    %v1723 = vsel %vm307, %v1684, %v1722
    %v1724 = vrot.slane %v1685, 7
    %v1725 = vsel %vm310, %v1724, %v1723
    %v1726 = vrot.slane %v1686, 6
    %v1727 = vsel %vm313, %v1726, %v1725
    %v1728 = vrot.slane %v1687, 5
    %v1729 = vsel %vm316, %v1728, %v1727
    %v1730 = vsel %vm213, %v1729, 0
    %1732 = vmatpush.msra.mxu0 0.0
    %1733 = vmatpush.msra.mxu0 0.0
    %1734 = vmatpush.msra.mxu0 0.0
    %1735 = vmatpush.msra.mxu0 0.0
    %1736 = vmatpush.msra.mxu0 0.0
    %1737 = vmatpush.msra.mxu0 0.0
    %1738 = vmatpush.msra.mxu0 0.0
    %1739 = vmatpush.msra.mxu0 0.0
    %1740 = vmatpush.msra.mxu0 0.0
    %1741 = vmatpush.msra.mxu0 0.0
    %1742 = vmatpush.msra.mxu0 0.0
    %1743 = vmatpush.msra.mxu0 0.0
    %1744 = vmatpush.msra.mxu0 %v49
    %1745 = vmatpush.msra.mxu0 %v48
    %1746 = vmatpush.msra.mxu0 %v47
    %1747 = vmatpush.msra.mxu0 %v46
    %1748 = vmatmul.f32.gmra.mxu0 %v1730
    %v1749 = vpop.f32.mrf.mxu0
    %v1750 = vadd.f32 %v1706, %v1749
    %1751 = vdwg.mxu0
    %v1752 = vadd.f32 %v1750, %v68
    %v1753 = vtanh.pop %v1752
    %v1755 = vsel %vm213, %v1469, 0
    %1757 = vmatpush.msra.mxu0 0.0
    %1758 = vmatpush.msra.mxu0 0.0
    %1759 = vmatpush.msra.mxu0 0.0
    %1760 = vmatpush.msra.mxu0 0.0
    %1761 = vmatpush.msra.mxu0 0.0
    %1762 = vmatpush.msra.mxu0 0.0
    %1763 = vmatpush.msra.mxu0 0.0
    %1764 = vmatpush.msra.mxu0 0.0
    %1765 = vmatpush.msra.mxu0 0.0
    %1766 = vmatpush.msra.mxu0 0.0
    %1767 = vmatpush.msra.mxu0 0.0
    %1768 = vmatpush.msra.mxu0 0.0
    %1769 = vmatpush.msra.mxu0 %v61
    %1770 = vmatpush.msra.mxu0 %v60
    %1771 = vmatpush.msra.mxu0 %v59
    %1772 = vmatpush.msra.mxu0 %v58
    %1773 = vmatmul.f32.gmra.mxu0 %v1755
    %v1774 = vpop.f32.mrf.mxu0
    %v1775 = vadd.f32 0.0, %v1774
    %1776 = vdwg.mxu0
    %v1778 = vsel %vm213, %v1753, 0
    %1780 = vmatpush.msra.mxu0 0.0
    %1781 = vmatpush.msra.mxu0 0.0
    %1782 = vmatpush.msra.mxu0 0.0
    %1783 = vmatpush.msra.mxu0 0.0
    %1784 = vmatpush.msra.mxu0 0.0
    %1785 = vmatpush.msra.mxu0 0.0
    %1786 = vmatpush.msra.mxu0 0.0
    %1787 = vmatpush.msra.mxu0 0.0
    %1788 = vmatpush.msra.mxu0 0.0
    %1789 = vmatpush.msra.mxu0 0.0
    %1790 = vmatpush.msra.mxu0 0.0
    %1791 = vmatpush.msra.mxu0 0.0
    %1792 = vmatpush.msra.mxu0 %v57
    %1793 = vmatpush.msra.mxu0 %v56
    %1794 = vmatpush.msra.mxu0 %v55
    %1795 = vmatpush.msra.mxu0 %v54
    %1796 = vmatmul.f32.gmra.mxu0 %v1778
    %v1797 = vpop.f32.mrf.mxu0
    %v1798 = vadd.f32 %v1775, %v1797
    %1799 = vdwg.mxu0
    %v1800 = vadd.f32 %v1798, %v72
    %v1801 = vtanh.pop %v1800
    %1802 = vmatpush.msra.mxu0 0.0
    %1803 = vmatpush.msra.mxu0 0.0
    %1804 = vmatpush.msra.mxu0 0.0
    %1805 = vmatpush.msra.mxu0 0.0
    %1806 = vmatpush.msra.mxu0 0.0
    %1807 = vmatpush.msra.mxu0 0.0
    %1808 = vmatpush.msra.mxu0 0.0
    %1809 = vmatpush.msra.mxu0 0.0
    %1810 = vmatpush.msra.mxu0 0.0
    %1811 = vmatpush.msra.mxu0 0.0
    %1812 = vmatpush.msra.mxu0 0.0
    %1813 = vmatpush.msra.mxu0 0.0
    %1814 = vmatpush.msra.mxu0 %v45
    %1815 = vmatpush.msra.mxu0 %v44
    %1816 = vmatpush.msra.mxu0 %v43
    %1817 = vmatpush.msra.mxu0 %v42
    %1818 = vmatmul.f32.gmra.mxu0 %v1564
    %v1819 = vpop.f32.mrf.mxu0
    %v1820 = vadd.f32 0.0, %v1819
    %1821 = vdwg.mxu0
    %v1823 = vrot.slane %v1820, 3
    %v1824 = vrot.slane %v1820, 4
    %v1825 = vrot.slane %v1820, 5
    %v1826 = vrot.slane %v1820, 6
    %v1827 = vrot.slane %v1820, 7
    %v1828 = vrot.slane %v1820, 1
    %v1829 = vrot.slane %v1820, 2
    %v1838 = vadd.f32 %v166, %v1823
    %v1839 = vadd.f32 %v169, %v1824
    %v1840 = vadd.f32 %v172, %v1825
    %v1841 = vadd.f32 %v175, %v1826
    %v1842 = vadd.f32 %v178, %v1827
    %v1843 = vadd.f32 %v181, %v1820
    %v1844 = vadd.f32 %v184, %v1828
    %v1845 = vadd.f32 %v187, %v1829
    %v1846 = vtanh.pop %v1838
    %v1847 = vtanh.pop %v1839
    %v1848 = vtanh.pop %v1840
    %v1849 = vtanh.pop %v1841
    %v1850 = vtanh.pop %v1842
    %v1851 = vtanh.pop %v1843
    %v1852 = vtanh.pop %v1844
    %v1853 = vtanh.pop %v1845
    %1854 = vmatpush.msra.mxu0 0.0
    %1855 = vmatpush.msra.mxu0 0.0
    %1856 = vmatpush.msra.mxu0 0.0
    %1857 = vmatpush.msra.mxu0 0.0
    %1858 = vmatpush.msra.mxu0 0.0
    %1859 = vmatpush.msra.mxu0 0.0
    %1860 = vmatpush.msra.mxu0 0.0
    %1861 = vmatpush.msra.mxu0 0.0
    %1862 = vmatpush.msra.mxu0 0.0
    %1863 = vmatpush.msra.mxu0 0.0
    %1864 = vmatpush.msra.mxu0 0.0
    %1865 = vmatpush.msra.mxu0 0.0
    %1866 = vmatpush.msra.mxu0 %v53
    %1867 = vmatpush.msra.mxu0 %v52
    %1868 = vmatpush.msra.mxu0 %v51
    %1869 = vmatpush.msra.mxu0 %v50
    %1870 = vmatmul.f32.gmra.mxu0 %v1612
    %v1871 = vpop.f32.mrf.mxu0
    %v1872 = vadd.f32 0.0, %v1871
    %1873 = vdwg.mxu0
    %v1882 = vrot.slane %v1846, 5
    %v1883 = vrot.slane %v1847, 4
    %v1884 = vsel %vm298, %v1883, %v1882
    %v1885 = vrot.slane %v1848, 3
    %v1886 = vsel %vm301, %v1885, %v1884
    %v1887 = vrot.slane %v1849, 2
    %v1888 = vsel %vm304, %v1887, %v1886
    %v1889 = vrot.slane %v1850, 1
    %v1890 = vsel %vm307, %v1889, %v1888
    %v1891 = vsel %vm310, %v1851, %v1890
    %v1892 = vrot.slane %v1852, 7
    %v1893 = vsel %vm313, %v1892, %v1891
    %v1894 = vrot.slane %v1853, 6
    %v1895 = vsel %vm316, %v1894, %v1893
    %v1896 = vsel %vm213, %v1895, 0
    %1898 = vmatpush.msra.mxu0 0.0
    %1899 = vmatpush.msra.mxu0 0.0
    %1900 = vmatpush.msra.mxu0 0.0
    %1901 = vmatpush.msra.mxu0 0.0
    %1902 = vmatpush.msra.mxu0 0.0
    %1903 = vmatpush.msra.mxu0 0.0
    %1904 = vmatpush.msra.mxu0 0.0
    %1905 = vmatpush.msra.mxu0 0.0
    %1906 = vmatpush.msra.mxu0 0.0
    %1907 = vmatpush.msra.mxu0 0.0
    %1908 = vmatpush.msra.mxu0 0.0
    %1909 = vmatpush.msra.mxu0 0.0
    %1910 = vmatpush.msra.mxu0 %v49
    %1911 = vmatpush.msra.mxu0 %v48
    %1912 = vmatpush.msra.mxu0 %v47
    %1913 = vmatpush.msra.mxu0 %v46
    %1914 = vmatmul.f32.gmra.mxu0 %v1896
    %v1915 = vpop.f32.mrf.mxu0
    %v1916 = vadd.f32 %v1872, %v1915
    %1917 = vdwg.mxu0
    %v1918 = vadd.f32 %v1916, %v68
    %v1919 = vtanh.pop %v1918
    %v1921 = vsel %vm213, %v1635, 0
    %1923 = vmatpush.msra.mxu0 0.0
    %1924 = vmatpush.msra.mxu0 0.0
    %1925 = vmatpush.msra.mxu0 0.0
    %1926 = vmatpush.msra.mxu0 0.0
    %1927 = vmatpush.msra.mxu0 0.0
    %1928 = vmatpush.msra.mxu0 0.0
    %1929 = vmatpush.msra.mxu0 0.0
    %1930 = vmatpush.msra.mxu0 0.0
    %1931 = vmatpush.msra.mxu0 0.0
    %1932 = vmatpush.msra.mxu0 0.0
    %1933 = vmatpush.msra.mxu0 0.0
    %1934 = vmatpush.msra.mxu0 0.0
    %1935 = vmatpush.msra.mxu0 %v61
    %1936 = vmatpush.msra.mxu0 %v60
    %1937 = vmatpush.msra.mxu0 %v59
    %1938 = vmatpush.msra.mxu0 %v58
    %1939 = vmatmul.f32.gmra.mxu0 %v1921
    %v1940 = vpop.f32.mrf.mxu0
    %v1941 = vadd.f32 0.0, %v1940
    %1942 = vdwg.mxu0
    %v1944 = vsel %vm213, %v1919, 0
    %1946 = vmatpush.msra.mxu0 0.0
    %1947 = vmatpush.msra.mxu0 0.0
    %1948 = vmatpush.msra.mxu0 0.0
    %1949 = vmatpush.msra.mxu0 0.0
    %1950 = vmatpush.msra.mxu0 0.0
    %1951 = vmatpush.msra.mxu0 0.0
    %1952 = vmatpush.msra.mxu0 0.0
    %1953 = vmatpush.msra.mxu0 0.0
    %1954 = vmatpush.msra.mxu0 0.0
    %1955 = vmatpush.msra.mxu0 0.0
    %1956 = vmatpush.msra.mxu0 0.0
    %1957 = vmatpush.msra.mxu0 0.0
    %1958 = vmatpush.msra.mxu0 %v57
    %1959 = vmatpush.msra.mxu0 %v56
    %1960 = vmatpush.msra.mxu0 %v55
    %1961 = vmatpush.msra.mxu0 %v54
    %1962 = vmatmul.f32.gmra.mxu0 %v1944
    %v1963 = vpop.f32.mrf.mxu0
    %v1964 = vadd.f32 %v1941, %v1963
    %1965 = vdwg.mxu0
    %v1966 = vadd.f32 %v1964, %v72
    %v1967 = vtanh.pop %v1966
    %1968 = vmatpush.msra.mxu0 0.0
    %1969 = vmatpush.msra.mxu0 0.0
    %1970 = vmatpush.msra.mxu0 0.0
    %1971 = vmatpush.msra.mxu0 0.0
    %1972 = vmatpush.msra.mxu0 0.0
    %1973 = vmatpush.msra.mxu0 0.0
    %1974 = vmatpush.msra.mxu0 0.0
    %1975 = vmatpush.msra.mxu0 0.0
    %1976 = vmatpush.msra.mxu0 0.0
    %1977 = vmatpush.msra.mxu0 0.0
    %1978 = vmatpush.msra.mxu0 0.0
    %1979 = vmatpush.msra.mxu0 0.0
    %1980 = vmatpush.msra.mxu0 %v45
    %1981 = vmatpush.msra.mxu0 %v44
    %1982 = vmatpush.msra.mxu0 %v43
    %1983 = vmatpush.msra.mxu0 %v42
    %1984 = vmatmul.f32.gmra.mxu0 %v1730
    %v1985 = vpop.f32.mrf.mxu0
    %v1986 = vadd.f32 0.0, %v1985
    %1987 = vdwg.mxu0
    %v1989 = vrot.slane %v1986, 3
    %v1990 = vrot.slane %v1986, 4
    %v1991 = vrot.slane %v1986, 5
    %v1992 = vrot.slane %v1986, 6
    %v1993 = vrot.slane %v1986, 7
    %v1994 = vrot.slane %v1986, 1
    %v1995 = vrot.slane %v1986, 2
    %v2004 = vadd.f32 %v190, %v1989
    %v2005 = vadd.f32 %v193, %v1990
    %v2006 = vadd.f32 %v196, %v1991
    %v2007 = vadd.f32 %v199, %v1992
    %v2008 = vadd.f32 %v202, %v1993
    %v2009 = vadd.f32 %v205, %v1986
    %v2010 = vadd.f32 %v208, %v1994
    %v2011 = vadd.f32 %v211, %v1995
    %v2012 = vtanh.pop %v2004
    %v2013 = vtanh.pop %v2005
    %v2014 = vtanh.pop %v2006
    %v2015 = vtanh.pop %v2007
    %v2016 = vtanh.pop %v2008
    %v2017 = vtanh.pop %v2009
    %v2018 = vtanh.pop %v2010
    %v2019 = vtanh.pop %v2011
    %2020 = vmatpush.msra.mxu0 0.0
    %2021 = vmatpush.msra.mxu0 0.0
    %2022 = vmatpush.msra.mxu0 0.0
    %2023 = vmatpush.msra.mxu0 0.0
    %2024 = vmatpush.msra.mxu0 0.0
    %2025 = vmatpush.msra.mxu0 0.0
    %2026 = vmatpush.msra.mxu0 0.0
    %2027 = vmatpush.msra.mxu0 0.0
    %2028 = vmatpush.msra.mxu0 0.0
    %2029 = vmatpush.msra.mxu0 0.0
    %2030 = vmatpush.msra.mxu0 0.0
    %2031 = vmatpush.msra.mxu0 0.0
    %2032 = vmatpush.msra.mxu0 %v53
    %2033 = vmatpush.msra.mxu0 %v52
    %2034 = vmatpush.msra.mxu0 %v51
    %2035 = vmatpush.msra.mxu0 %v50
    %2036 = vmatmul.f32.gmra.mxu0 %v1778
    %v2037 = vpop.f32.mrf.mxu0
    %v2038 = vadd.f32 0.0, %v2037
    %2039 = vdwg.mxu0
    %v2048 = vrot.slane %v2012, 5
    %v2049 = vrot.slane %v2013, 4
    %v2050 = vsel %vm298, %v2049, %v2048
    %v2051 = vrot.slane %v2014, 3
    %v2052 = vsel %vm301, %v2051, %v2050
    %v2053 = vrot.slane %v2015, 2
    %v2054 = vsel %vm304, %v2053, %v2052
    %v2055 = vrot.slane %v2016, 1
    %v2056 = vsel %vm307, %v2055, %v2054
    %v2057 = vsel %vm310, %v2017, %v2056
    %v2058 = vrot.slane %v2018, 7
    %v2059 = vsel %vm313, %v2058, %v2057
    %v2060 = vrot.slane %v2019, 6
    %v2061 = vsel %vm316, %v2060, %v2059
    %v2062 = vsel %vm213, %v2061, 0
    %2064 = vmatpush.msra.mxu0 0.0
    %2065 = vmatpush.msra.mxu0 0.0
    %2066 = vmatpush.msra.mxu0 0.0
    %2067 = vmatpush.msra.mxu0 0.0
    %2068 = vmatpush.msra.mxu0 0.0
    %2069 = vmatpush.msra.mxu0 0.0
    %2070 = vmatpush.msra.mxu0 0.0
    %2071 = vmatpush.msra.mxu0 0.0
    %2072 = vmatpush.msra.mxu0 0.0
    %2073 = vmatpush.msra.mxu0 0.0
    %2074 = vmatpush.msra.mxu0 0.0
    %2075 = vmatpush.msra.mxu0 0.0
    %2076 = vmatpush.msra.mxu0 %v49
    %2077 = vmatpush.msra.mxu0 %v48
    %2078 = vmatpush.msra.mxu0 %v47
    %2079 = vmatpush.msra.mxu0 %v46
    %2080 = vmatmul.f32.gmra.mxu0 %v2062
    %v2081 = vpop.f32.mrf.mxu0
    %v2082 = vadd.f32 %v2038, %v2081
    %2083 = vdwg.mxu0
    %v2084 = vadd.f32 %v2082, %v68
    %v2085 = vtanh.pop %v2084
    %v2087 = vsel %vm213, %v1801, 0
    %2089 = vmatpush.msra.mxu0 0.0
    %2090 = vmatpush.msra.mxu0 0.0
    %2091 = vmatpush.msra.mxu0 0.0
    %2092 = vmatpush.msra.mxu0 0.0
    %2093 = vmatpush.msra.mxu0 0.0
    %2094 = vmatpush.msra.mxu0 0.0
    %2095 = vmatpush.msra.mxu0 0.0
    %2096 = vmatpush.msra.mxu0 0.0
    %2097 = vmatpush.msra.mxu0 0.0
    %2098 = vmatpush.msra.mxu0 0.0
    %2099 = vmatpush.msra.mxu0 0.0
    %2100 = vmatpush.msra.mxu0 0.0
    %2101 = vmatpush.msra.mxu0 %v61
    %2102 = vmatpush.msra.mxu0 %v60
    %2103 = vmatpush.msra.mxu0 %v59
    %2104 = vmatpush.msra.mxu0 %v58
    %2105 = vmatmul.f32.gmra.mxu0 %v2087
    %v2106 = vpop.f32.mrf.mxu0
    %v2107 = vadd.f32 0.0, %v2106
    %2108 = vdwg.mxu0
    %v2110 = vsel %vm213, %v2085, 0
    %2112 = vmatpush.msra.mxu0 0.0
    %2113 = vmatpush.msra.mxu0 0.0
    %2114 = vmatpush.msra.mxu0 0.0
    %2115 = vmatpush.msra.mxu0 0.0
    %2116 = vmatpush.msra.mxu0 0.0
    %2117 = vmatpush.msra.mxu0 0.0
    %2118 = vmatpush.msra.mxu0 0.0
    %2119 = vmatpush.msra.mxu0 0.0
    %2120 = vmatpush.msra.mxu0 0.0
    %2121 = vmatpush.msra.mxu0 0.0
    %2122 = vmatpush.msra.mxu0 0.0
    %2123 = vmatpush.msra.mxu0 0.0
    %2124 = vmatpush.msra.mxu0 %v57
    %2125 = vmatpush.msra.mxu0 %v56
    %2126 = vmatpush.msra.mxu0 %v55
    %2127 = vmatpush.msra.mxu0 %v54
    %2128 = vmatmul.f32.gmra.mxu0 %v2110
    %v2129 = vpop.f32.mrf.mxu0
    %v2130 = vadd.f32 %v2107, %v2129
    %2131 = vdwg.mxu0
    %v2132 = vadd.f32 %v2130, %v72
    %v2133 = vtanh.pop %v2132
    %2134 = vmatpush.msra.mxu0 0.0
    %2135 = vmatpush.msra.mxu0 0.0
    %2136 = vmatpush.msra.mxu0 0.0
    %2137 = vmatpush.msra.mxu0 0.0
    %2138 = vmatpush.msra.mxu0 0.0
    %2139 = vmatpush.msra.mxu0 0.0
    %2140 = vmatpush.msra.mxu0 0.0
    %2141 = vmatpush.msra.mxu0 0.0
    %2142 = vmatpush.msra.mxu0 0.0
    %2143 = vmatpush.msra.mxu0 0.0
    %2144 = vmatpush.msra.mxu0 0.0
    %2145 = vmatpush.msra.mxu0 0.0
    %2146 = vmatpush.msra.mxu0 %v45
    %2147 = vmatpush.msra.mxu0 %v44
    %2148 = vmatpush.msra.mxu0 %v43
    %2149 = vmatpush.msra.mxu0 %v42
    %2150 = vmatmul.f32.gmra.mxu0 %v1896
    %v2151 = vpop.f32.mrf.mxu0
    %v2152 = vadd.f32 0.0, %v2151
    %2153 = vdwg.mxu0
    %v2155 = vrot.slane %v2152, 2
    %v2156 = vrot.slane %v2152, 3
    %v2157 = vrot.slane %v2152, 4
    %v2158 = vrot.slane %v2152, 5
    %v2159 = vrot.slane %v2152, 6
    %v2160 = vrot.slane %v2152, 7
    %v2161 = vrot.slane %v2152, 1
    %v2170 = vadd.f32 %v166, %v2155
    %v2171 = vadd.f32 %v169, %v2156
    %v2172 = vadd.f32 %v172, %v2157
    %v2173 = vadd.f32 %v175, %v2158
    %v2174 = vadd.f32 %v178, %v2159
    %v2175 = vadd.f32 %v181, %v2160
    %v2176 = vadd.f32 %v184, %v2152
    %v2177 = vadd.f32 %v187, %v2161
    %v2178 = vtanh.pop %v2170
    %v2179 = vtanh.pop %v2171
    %v2180 = vtanh.pop %v2172
    %v2181 = vtanh.pop %v2173
    %v2182 = vtanh.pop %v2174
    %v2183 = vtanh.pop %v2175
    %v2184 = vtanh.pop %v2176
    %v2185 = vtanh.pop %v2177
    %2186 = vmatpush.msra.mxu0 0.0
    %2187 = vmatpush.msra.mxu0 0.0
    %2188 = vmatpush.msra.mxu0 0.0
    %2189 = vmatpush.msra.mxu0 0.0
    %2190 = vmatpush.msra.mxu0 0.0
    %2191 = vmatpush.msra.mxu0 0.0
    %2192 = vmatpush.msra.mxu0 0.0
    %2193 = vmatpush.msra.mxu0 0.0
    %2194 = vmatpush.msra.mxu0 0.0
    %2195 = vmatpush.msra.mxu0 0.0
    %2196 = vmatpush.msra.mxu0 0.0
    %2197 = vmatpush.msra.mxu0 0.0
    %2198 = vmatpush.msra.mxu0 %v53
    %2199 = vmatpush.msra.mxu0 %v52
    %2200 = vmatpush.msra.mxu0 %v51
    %2201 = vmatpush.msra.mxu0 %v50
    %2202 = vmatmul.f32.gmra.mxu0 %v1944
    %v2203 = vpop.f32.mrf.mxu0
    %v2204 = vadd.f32 0.0, %v2203
    %2205 = vdwg.mxu0
    %v2214 = vrot.slane %v2178, 6
    %v2215 = vrot.slane %v2179, 5
    %v2216 = vsel %vm298, %v2215, %v2214
    %v2217 = vrot.slane %v2180, 4
    %v2218 = vsel %vm301, %v2217, %v2216
    %v2219 = vrot.slane %v2181, 3
    %v2220 = vsel %vm304, %v2219, %v2218
    %v2221 = vrot.slane %v2182, 2
    %v2222 = vsel %vm307, %v2221, %v2220
    %v2223 = vrot.slane %v2183, 1
    %v2224 = vsel %vm310, %v2223, %v2222
    %v2225 = vsel %vm313, %v2184, %v2224
    %v2226 = vrot.slane %v2185, 7
    %v2227 = vsel %vm316, %v2226, %v2225
    %v2228 = vsel %vm213, %v2227, 0
    %2230 = vmatpush.msra.mxu0 0.0
    %2231 = vmatpush.msra.mxu0 0.0
    %2232 = vmatpush.msra.mxu0 0.0
    %2233 = vmatpush.msra.mxu0 0.0
    %2234 = vmatpush.msra.mxu0 0.0
    %2235 = vmatpush.msra.mxu0 0.0
    %2236 = vmatpush.msra.mxu0 0.0
    %2237 = vmatpush.msra.mxu0 0.0
    %2238 = vmatpush.msra.mxu0 0.0
    %2239 = vmatpush.msra.mxu0 0.0
    %2240 = vmatpush.msra.mxu0 0.0
    %2241 = vmatpush.msra.mxu0 0.0
    %2242 = vmatpush.msra.mxu0 %v49
    %2243 = vmatpush.msra.mxu0 %v48
    %2244 = vmatpush.msra.mxu0 %v47
    %2245 = vmatpush.msra.mxu0 %v46
    %2246 = vmatmul.f32.gmra.mxu0 %v2228
    %v2247 = vpop.f32.mrf.mxu0
    %v2248 = vadd.f32 %v2204, %v2247
    %2249 = vdwg.mxu0
    %v2250 = vadd.f32 %v2248, %v68
    %v2251 = vtanh.pop %v2250
    %v2253 = vsel %vm213, %v1967, 0
    %2255 = vmatpush.msra.mxu0 0.0
    %2256 = vmatpush.msra.mxu0 0.0
    %2257 = vmatpush.msra.mxu0 0.0
    %2258 = vmatpush.msra.mxu0 0.0
    %2259 = vmatpush.msra.mxu0 0.0
    %2260 = vmatpush.msra.mxu0 0.0
    %2261 = vmatpush.msra.mxu0 0.0
    %2262 = vmatpush.msra.mxu0 0.0
    %2263 = vmatpush.msra.mxu0 0.0
    %2264 = vmatpush.msra.mxu0 0.0
    %2265 = vmatpush.msra.mxu0 0.0
    %2266 = vmatpush.msra.mxu0 0.0
    %2267 = vmatpush.msra.mxu0 %v61
    %2268 = vmatpush.msra.mxu0 %v60
    %2269 = vmatpush.msra.mxu0 %v59
    %2270 = vmatpush.msra.mxu0 %v58
    %2271 = vmatmul.f32.gmra.mxu0 %v2253
    %v2272 = vpop.f32.mrf.mxu0
    %v2273 = vadd.f32 0.0, %v2272
    %2274 = vdwg.mxu0
    %v2276 = vsel %vm213, %v2251, 0
    %2278 = vmatpush.msra.mxu0 0.0
    %2279 = vmatpush.msra.mxu0 0.0
    %2280 = vmatpush.msra.mxu0 0.0
    %2281 = vmatpush.msra.mxu0 0.0
    %2282 = vmatpush.msra.mxu0 0.0
    %2283 = vmatpush.msra.mxu0 0.0
    %2284 = vmatpush.msra.mxu0 0.0
    %2285 = vmatpush.msra.mxu0 0.0
    %2286 = vmatpush.msra.mxu0 0.0
    %2287 = vmatpush.msra.mxu0 0.0
    %2288 = vmatpush.msra.mxu0 0.0
    %2289 = vmatpush.msra.mxu0 0.0
    %2290 = vmatpush.msra.mxu0 %v57
    %2291 = vmatpush.msra.mxu0 %v56
    %2292 = vmatpush.msra.mxu0 %v55
    %2293 = vmatpush.msra.mxu0 %v54
    %2294 = vmatmul.f32.gmra.mxu0 %v2276
    %v2295 = vpop.f32.mrf.mxu0
    %v2296 = vadd.f32 %v2273, %v2295
    %2297 = vdwg.mxu0
    %v2298 = vadd.f32 %v2296, %v72
    %v2299 = vtanh.pop %v2298
    %2300 = vmatpush.msra.mxu0 0.0
    %2301 = vmatpush.msra.mxu0 0.0
    %2302 = vmatpush.msra.mxu0 0.0
    %2303 = vmatpush.msra.mxu0 0.0
    %2304 = vmatpush.msra.mxu0 0.0
    %2305 = vmatpush.msra.mxu0 0.0
    %2306 = vmatpush.msra.mxu0 0.0
    %2307 = vmatpush.msra.mxu0 0.0
    %2308 = vmatpush.msra.mxu0 0.0
    %2309 = vmatpush.msra.mxu0 0.0
    %2310 = vmatpush.msra.mxu0 0.0
    %2311 = vmatpush.msra.mxu0 0.0
    %2312 = vmatpush.msra.mxu0 %v45
    %2313 = vmatpush.msra.mxu0 %v44
    %2314 = vmatpush.msra.mxu0 %v43
    %2315 = vmatpush.msra.mxu0 %v42
    %2316 = vmatmul.f32.gmra.mxu0 %v2062
    %v2317 = vpop.f32.mrf.mxu0
    %v2318 = vadd.f32 0.0, %v2317
    %2319 = vdwg.mxu0
    %v2321 = vrot.slane %v2318, 2
    %v2322 = vrot.slane %v2318, 3
    %v2323 = vrot.slane %v2318, 4
    %v2324 = vrot.slane %v2318, 5
    %v2325 = vrot.slane %v2318, 6
    %v2326 = vrot.slane %v2318, 7
    %v2327 = vrot.slane %v2318, 1
    %v2336 = vadd.f32 %v190, %v2321
    %v2337 = vadd.f32 %v193, %v2322
    %v2338 = vadd.f32 %v196, %v2323
    %v2339 = vadd.f32 %v199, %v2324
    %v2340 = vadd.f32 %v202, %v2325
    %v2341 = vadd.f32 %v205, %v2326
    %v2342 = vadd.f32 %v208, %v2318
    %v2343 = vadd.f32 %v211, %v2327
    %v2344 = vtanh.pop %v2336
    %v2345 = vtanh.pop %v2337
    %v2346 = vtanh.pop %v2338
    %v2347 = vtanh.pop %v2339
    %v2348 = vtanh.pop %v2340
    %v2349 = vtanh.pop %v2341
    %v2350 = vtanh.pop %v2342
    %v2351 = vtanh.pop %v2343
    %2352 = vmatpush.msra.mxu0 0.0
    %2353 = vmatpush.msra.mxu0 0.0
    %2354 = vmatpush.msra.mxu0 0.0
    %2355 = vmatpush.msra.mxu0 0.0
    %2356 = vmatpush.msra.mxu0 0.0
    %2357 = vmatpush.msra.mxu0 0.0
    %2358 = vmatpush.msra.mxu0 0.0
    %2359 = vmatpush.msra.mxu0 0.0
    %2360 = vmatpush.msra.mxu0 0.0
    %2361 = vmatpush.msra.mxu0 0.0
    %2362 = vmatpush.msra.mxu0 0.0
    %2363 = vmatpush.msra.mxu0 0.0
    %2364 = vmatpush.msra.mxu0 %v53
    %2365 = vmatpush.msra.mxu0 %v52
    %2366 = vmatpush.msra.mxu0 %v51
    %2367 = vmatpush.msra.mxu0 %v50
    %2368 = vmatmul.f32.gmra.mxu0 %v2110
    %v2369 = vpop.f32.mrf.mxu0
    %v2370 = vadd.f32 0.0, %v2369
    %2371 = vdwg.mxu0
    %v2380 = vrot.slane %v2344, 6
    %v2381 = vrot.slane %v2345, 5
    %v2382 = vsel %vm298, %v2381, %v2380
    %v2383 = vrot.slane %v2346, 4
    %v2384 = vsel %vm301, %v2383, %v2382
    %v2385 = vrot.slane %v2347, 3
    %v2386 = vsel %vm304, %v2385, %v2384
    %v2387 = vrot.slane %v2348, 2
    %v2388 = vsel %vm307, %v2387, %v2386
    %v2389 = vrot.slane %v2349, 1
    %v2390 = vsel %vm310, %v2389, %v2388
    %v2391 = vsel %vm313, %v2350, %v2390
    %v2392 = vrot.slane %v2351, 7
    %v2393 = vsel %vm316, %v2392, %v2391
    %v2394 = vsel %vm213, %v2393, 0
    %2396 = vmatpush.msra.mxu0 0.0
    %2397 = vmatpush.msra.mxu0 0.0
    %2398 = vmatpush.msra.mxu0 0.0
    %2399 = vmatpush.msra.mxu0 0.0
    %2400 = vmatpush.msra.mxu0 0.0
    %2401 = vmatpush.msra.mxu0 0.0
    %2402 = vmatpush.msra.mxu0 0.0
    %2403 = vmatpush.msra.mxu0 0.0
    %2404 = vmatpush.msra.mxu0 0.0
    %2405 = vmatpush.msra.mxu0 0.0
    %2406 = vmatpush.msra.mxu0 0.0
    %2407 = vmatpush.msra.mxu0 0.0
    %2408 = vmatpush.msra.mxu0 %v49
    %2409 = vmatpush.msra.mxu0 %v48
    %2410 = vmatpush.msra.mxu0 %v47
    %2411 = vmatpush.msra.mxu0 %v46
    %2412 = vmatmul.f32.gmra.mxu0 %v2394
    %v2413 = vpop.f32.mrf.mxu0
    %v2414 = vadd.f32 %v2370, %v2413
    %2415 = vdwg.mxu0
    %v2416 = vadd.f32 %v2414, %v68
    %v2417 = vtanh.pop %v2416
    %v2419 = vsel %vm213, %v2133, 0
    %2421 = vmatpush.msra.mxu0 0.0
    %2422 = vmatpush.msra.mxu0 0.0
    %2423 = vmatpush.msra.mxu0 0.0
    %2424 = vmatpush.msra.mxu0 0.0
    %2425 = vmatpush.msra.mxu0 0.0
    %2426 = vmatpush.msra.mxu0 0.0
    %2427 = vmatpush.msra.mxu0 0.0
    %2428 = vmatpush.msra.mxu0 0.0
    %2429 = vmatpush.msra.mxu0 0.0
    %2430 = vmatpush.msra.mxu0 0.0
    %2431 = vmatpush.msra.mxu0 0.0
    %2432 = vmatpush.msra.mxu0 0.0
    %2433 = vmatpush.msra.mxu0 %v61
    %2434 = vmatpush.msra.mxu0 %v60
    %2435 = vmatpush.msra.mxu0 %v59
    %2436 = vmatpush.msra.mxu0 %v58
    %2437 = vmatmul.f32.gmra.mxu0 %v2419
    %v2438 = vpop.f32.mrf.mxu0
    %v2439 = vadd.f32 0.0, %v2438
    %2440 = vdwg.mxu0
    %v2442 = vsel %vm213, %v2417, 0
    %2444 = vmatpush.msra.mxu0 0.0
    %2445 = vmatpush.msra.mxu0 0.0
    %2446 = vmatpush.msra.mxu0 0.0
    %2447 = vmatpush.msra.mxu0 0.0
    %2448 = vmatpush.msra.mxu0 0.0
    %2449 = vmatpush.msra.mxu0 0.0
    %2450 = vmatpush.msra.mxu0 0.0
    %2451 = vmatpush.msra.mxu0 0.0
    %2452 = vmatpush.msra.mxu0 0.0
    %2453 = vmatpush.msra.mxu0 0.0
    %2454 = vmatpush.msra.mxu0 0.0
    %2455 = vmatpush.msra.mxu0 0.0
    %2456 = vmatpush.msra.mxu0 %v57
    %2457 = vmatpush.msra.mxu0 %v56
    %2458 = vmatpush.msra.mxu0 %v55
    %2459 = vmatpush.msra.mxu0 %v54
    %2460 = vmatmul.f32.gmra.mxu0 %v2442
    %v2461 = vpop.f32.mrf.mxu0
    %v2462 = vadd.f32 %v2439, %v2461
    %2463 = vdwg.mxu0
    %v2464 = vadd.f32 %v2462, %v72
    %v2465 = vtanh.pop %v2464
    %2466 = vmatpush.msra.mxu0 0.0
    %2467 = vmatpush.msra.mxu0 0.0
    %2468 = vmatpush.msra.mxu0 0.0
    %2469 = vmatpush.msra.mxu0 0.0
    %2470 = vmatpush.msra.mxu0 0.0
    %2471 = vmatpush.msra.mxu0 0.0
    %2472 = vmatpush.msra.mxu0 0.0
    %2473 = vmatpush.msra.mxu0 0.0
    %2474 = vmatpush.msra.mxu0 0.0
    %2475 = vmatpush.msra.mxu0 0.0
    %2476 = vmatpush.msra.mxu0 0.0
    %2477 = vmatpush.msra.mxu0 0.0
    %2478 = vmatpush.msra.mxu0 %v45
    %2479 = vmatpush.msra.mxu0 %v44
    %2480 = vmatpush.msra.mxu0 %v43
    %2481 = vmatpush.msra.mxu0 %v42
    %2482 = vmatmul.f32.gmra.mxu0 %v2228
    %v2483 = vpop.f32.mrf.mxu0
    %v2484 = vadd.f32 0.0, %v2483
    %2485 = vdwg.mxu0
    %v2487 = vrot.slane %v2484, 1
    %v2488 = vrot.slane %v2484, 2
    %v2489 = vrot.slane %v2484, 3
    %v2490 = vrot.slane %v2484, 4
    %v2491 = vrot.slane %v2484, 5
    %v2492 = vrot.slane %v2484, 6
    %v2493 = vrot.slane %v2484, 7
    %v2502 = vadd.f32 %v166, %v2487
    %v2503 = vadd.f32 %v169, %v2488
    %v2504 = vadd.f32 %v172, %v2489
    %v2505 = vadd.f32 %v175, %v2490
    %v2506 = vadd.f32 %v178, %v2491
    %v2507 = vadd.f32 %v181, %v2492
    %v2508 = vadd.f32 %v184, %v2493
    %v2509 = vadd.f32 %v187, %v2484
    %v2510 = vtanh.pop %v2502
    %v2511 = vtanh.pop %v2503
    %v2512 = vtanh.pop %v2504
    %v2513 = vtanh.pop %v2505
    %v2514 = vtanh.pop %v2506
    %v2515 = vtanh.pop %v2507
    %v2516 = vtanh.pop %v2508
    %v2517 = vtanh.pop %v2509
    %2518 = vmatpush.msra.mxu0 0.0
    %2519 = vmatpush.msra.mxu0 0.0
    %2520 = vmatpush.msra.mxu0 0.0
    %2521 = vmatpush.msra.mxu0 0.0
    %2522 = vmatpush.msra.mxu0 0.0
    %2523 = vmatpush.msra.mxu0 0.0
    %2524 = vmatpush.msra.mxu0 0.0
    %2525 = vmatpush.msra.mxu0 0.0
    %2526 = vmatpush.msra.mxu0 0.0
    %2527 = vmatpush.msra.mxu0 0.0
    %2528 = vmatpush.msra.mxu0 0.0
    %2529 = vmatpush.msra.mxu0 0.0
    %2530 = vmatpush.msra.mxu0 %v53
    %2531 = vmatpush.msra.mxu0 %v52
    %2532 = vmatpush.msra.mxu0 %v51
    %2533 = vmatpush.msra.mxu0 %v50
    %2534 = vmatmul.f32.gmra.mxu0 %v2276
    %v2535 = vpop.f32.mrf.mxu0
    %v2536 = vadd.f32 0.0, %v2535
    %2537 = vdwg.mxu0
    %v2546 = vrot.slane %v2510, 7
    %v2547 = vrot.slane %v2511, 6
    %v2548 = vsel %vm298, %v2547, %v2546
    %v2549 = vrot.slane %v2512, 5
    %v2550 = vsel %vm301, %v2549, %v2548
    %v2551 = vrot.slane %v2513, 4
    %v2552 = vsel %vm304, %v2551, %v2550
    %v2553 = vrot.slane %v2514, 3
    %v2554 = vsel %vm307, %v2553, %v2552
    %v2555 = vrot.slane %v2515, 2
    %v2556 = vsel %vm310, %v2555, %v2554
    %v2557 = vrot.slane %v2516, 1
    %v2558 = vsel %vm313, %v2557, %v2556
    %v2559 = vsel %vm316, %v2517, %v2558
    %v2560 = vsel %vm213, %v2559, 0
    %2562 = vmatpush.msra.mxu0 0.0
    %2563 = vmatpush.msra.mxu0 0.0
    %2564 = vmatpush.msra.mxu0 0.0
    %2565 = vmatpush.msra.mxu0 0.0
    %2566 = vmatpush.msra.mxu0 0.0
    %2567 = vmatpush.msra.mxu0 0.0
    %2568 = vmatpush.msra.mxu0 0.0
    %2569 = vmatpush.msra.mxu0 0.0
    %2570 = vmatpush.msra.mxu0 0.0
    %2571 = vmatpush.msra.mxu0 0.0
    %2572 = vmatpush.msra.mxu0 0.0
    %2573 = vmatpush.msra.mxu0 0.0
    %2574 = vmatpush.msra.mxu0 %v49
    %2575 = vmatpush.msra.mxu0 %v48
    %2576 = vmatpush.msra.mxu0 %v47
    %2577 = vmatpush.msra.mxu0 %v46
    %2578 = vmatmul.f32.gmra.mxu0 %v2560
    %v2579 = vpop.f32.mrf.mxu0
    %v2580 = vadd.f32 %v2536, %v2579
    %2581 = vdwg.mxu0
    %v2582 = vadd.f32 %v2580, %v68
    %v2583 = vtanh.pop %v2582
    %v2585 = vsel %vm213, %v2299, 0
    %2587 = vmatpush.msra.mxu0 0.0
    %2588 = vmatpush.msra.mxu0 0.0
    %2589 = vmatpush.msra.mxu0 0.0
    %2590 = vmatpush.msra.mxu0 0.0
    %2591 = vmatpush.msra.mxu0 0.0
    %2592 = vmatpush.msra.mxu0 0.0
    %2593 = vmatpush.msra.mxu0 0.0
    %2594 = vmatpush.msra.mxu0 0.0
    %2595 = vmatpush.msra.mxu0 0.0
    %2596 = vmatpush.msra.mxu0 0.0
    %2597 = vmatpush.msra.mxu0 0.0
    %2598 = vmatpush.msra.mxu0 0.0
    %2599 = vmatpush.msra.mxu0 %v61
    %2600 = vmatpush.msra.mxu0 %v60
    %2601 = vmatpush.msra.mxu0 %v59
    %2602 = vmatpush.msra.mxu0 %v58
    %2603 = vmatmul.f32.gmra.mxu0 %v2585
    %v2604 = vpop.f32.mrf.mxu0
    %v2605 = vadd.f32 0.0, %v2604
    %2606 = vdwg.mxu0
    %v2608 = vsel %vm213, %v2583, 0
    %2610 = vmatpush.msra.mxu0 0.0
    %2611 = vmatpush.msra.mxu0 0.0
    %2612 = vmatpush.msra.mxu0 0.0
    %2613 = vmatpush.msra.mxu0 0.0
    %2614 = vmatpush.msra.mxu0 0.0
    %2615 = vmatpush.msra.mxu0 0.0
    %2616 = vmatpush.msra.mxu0 0.0
    %2617 = vmatpush.msra.mxu0 0.0
    %2618 = vmatpush.msra.mxu0 0.0
    %2619 = vmatpush.msra.mxu0 0.0
    %2620 = vmatpush.msra.mxu0 0.0
    %2621 = vmatpush.msra.mxu0 0.0
    %2622 = vmatpush.msra.mxu0 %v57
    %2623 = vmatpush.msra.mxu0 %v56
    %2624 = vmatpush.msra.mxu0 %v55
    %2625 = vmatpush.msra.mxu0 %v54
    %2626 = vmatmul.f32.gmra.mxu0 %v2608
    %v2627 = vpop.f32.mrf.mxu0
    %v2628 = vadd.f32 %v2605, %v2627
    %2629 = vdwg.mxu0
    %v2630 = vadd.f32 %v2628, %v72
    %v2631 = vtanh.pop %v2630
    %2632 = vmatpush.msra.mxu0 0.0
    %2633 = vmatpush.msra.mxu0 0.0
    %2634 = vmatpush.msra.mxu0 0.0
    %2635 = vmatpush.msra.mxu0 0.0
    %2636 = vmatpush.msra.mxu0 0.0
    %2637 = vmatpush.msra.mxu0 0.0
    %2638 = vmatpush.msra.mxu0 0.0
    %2639 = vmatpush.msra.mxu0 0.0
    %2640 = vmatpush.msra.mxu0 0.0
    %2641 = vmatpush.msra.mxu0 0.0
    %2642 = vmatpush.msra.mxu0 0.0
    %2643 = vmatpush.msra.mxu0 0.0
    %2644 = vmatpush.msra.mxu0 %v45
    %2645 = vmatpush.msra.mxu0 %v44
    %2646 = vmatpush.msra.mxu0 %v43
    %2647 = vmatpush.msra.mxu0 %v42
    %2648 = vmatmul.f32.gmra.mxu0 %v2394
    %v2649 = vpop.f32.mrf.mxu0
    %v2650 = vadd.f32 0.0, %v2649
    %2651 = vdwg.mxu0
    %v2653 = vrot.slane %v2650, 1
    %v2654 = vrot.slane %v2650, 2
    %v2655 = vrot.slane %v2650, 3
    %v2656 = vrot.slane %v2650, 4
    %v2657 = vrot.slane %v2650, 5
    %v2658 = vrot.slane %v2650, 6
    %v2659 = vrot.slane %v2650, 7
    %v2668 = vadd.f32 %v190, %v2653
    %v2669 = vadd.f32 %v193, %v2654
    %v2670 = vadd.f32 %v196, %v2655
    %v2671 = vadd.f32 %v199, %v2656
    %v2672 = vadd.f32 %v202, %v2657
    %v2673 = vadd.f32 %v205, %v2658
    %v2674 = vadd.f32 %v208, %v2659
    %v2675 = vadd.f32 %v211, %v2650
    %v2676 = vtanh.pop %v2668
    %v2677 = vtanh.pop %v2669
    %v2678 = vtanh.pop %v2670
    %v2679 = vtanh.pop %v2671
    %v2680 = vtanh.pop %v2672
    %v2681 = vtanh.pop %v2673
    %v2682 = vtanh.pop %v2674
    %v2683 = vtanh.pop %v2675
    %2684 = vmatpush.msra.mxu0 0.0
    %2685 = vmatpush.msra.mxu0 0.0
    %2686 = vmatpush.msra.mxu0 0.0
    %2687 = vmatpush.msra.mxu0 0.0
    %2688 = vmatpush.msra.mxu0 0.0
    %2689 = vmatpush.msra.mxu0 0.0
    %2690 = vmatpush.msra.mxu0 0.0
    %2691 = vmatpush.msra.mxu0 0.0
    %2692 = vmatpush.msra.mxu0 0.0
    %2693 = vmatpush.msra.mxu0 0.0
    %2694 = vmatpush.msra.mxu0 0.0
    %2695 = vmatpush.msra.mxu0 0.0
    %2696 = vmatpush.msra.mxu0 %v53
    %2697 = vmatpush.msra.mxu0 %v52
    %2698 = vmatpush.msra.mxu0 %v51
    %2699 = vmatpush.msra.mxu0 %v50
    %2700 = vmatmul.f32.gmra.mxu0 %v2442
    %v2701 = vpop.f32.mrf.mxu0
    %v2702 = vadd.f32 0.0, %v2701
    %2703 = vdwg.mxu0
    %v2712 = vrot.slane %v2676, 7
    %v2713 = vrot.slane %v2677, 6
    %v2714 = vsel %vm298, %v2713, %v2712
    %v2715 = vrot.slane %v2678, 5
    %v2716 = vsel %vm301, %v2715, %v2714
    %v2717 = vrot.slane %v2679, 4
    %v2718 = vsel %vm304, %v2717, %v2716
    %v2719 = vrot.slane %v2680, 3
    %v2720 = vsel %vm307, %v2719, %v2718
    %v2721 = vrot.slane %v2681, 2
    %v2722 = vsel %vm310, %v2721, %v2720
    %v2723 = vrot.slane %v2682, 1
    %v2724 = vsel %vm313, %v2723, %v2722
    %v2725 = vsel %vm316, %v2683, %v2724
    %v2726 = vsel %vm213, %v2725, 0
    %2728 = vmatpush.msra.mxu0 0.0
    %2729 = vmatpush.msra.mxu0 0.0
    %2730 = vmatpush.msra.mxu0 0.0
    %2731 = vmatpush.msra.mxu0 0.0
    %2732 = vmatpush.msra.mxu0 0.0
    %2733 = vmatpush.msra.mxu0 0.0
    %2734 = vmatpush.msra.mxu0 0.0
    %2735 = vmatpush.msra.mxu0 0.0
    %2736 = vmatpush.msra.mxu0 0.0
    %2737 = vmatpush.msra.mxu0 0.0
    %2738 = vmatpush.msra.mxu0 0.0
    %2739 = vmatpush.msra.mxu0 0.0
    %2740 = vmatpush.msra.mxu0 %v49
    %2741 = vmatpush.msra.mxu0 %v48
    %2742 = vmatpush.msra.mxu0 %v47
    %2743 = vmatpush.msra.mxu0 %v46
    %2744 = vmatmul.f32.gmra.mxu0 %v2726
    %v2745 = vpop.f32.mrf.mxu0
    %v2746 = vadd.f32 %v2702, %v2745
    %2747 = vdwg.mxu0
    %v2748 = vadd.f32 %v2746, %v68
    %v2749 = vtanh.pop %v2748
    %v2751 = vsel %vm213, %v2465, 0
    %2753 = vmatpush.msra.mxu0 0.0
    %2754 = vmatpush.msra.mxu0 0.0
    %2755 = vmatpush.msra.mxu0 0.0
    %2756 = vmatpush.msra.mxu0 0.0
    %2757 = vmatpush.msra.mxu0 0.0
    %2758 = vmatpush.msra.mxu0 0.0
    %2759 = vmatpush.msra.mxu0 0.0
    %2760 = vmatpush.msra.mxu0 0.0
    %2761 = vmatpush.msra.mxu0 0.0
    %2762 = vmatpush.msra.mxu0 0.0
    %2763 = vmatpush.msra.mxu0 0.0
    %2764 = vmatpush.msra.mxu0 0.0
    %2765 = vmatpush.msra.mxu0 %v61
    %2766 = vmatpush.msra.mxu0 %v60
    %2767 = vmatpush.msra.mxu0 %v59
    %2768 = vmatpush.msra.mxu0 %v58
    %2769 = vmatmul.f32.gmra.mxu0 %v2751
    %v2770 = vpop.f32.mrf.mxu0
    %v2771 = vadd.f32 0.0, %v2770
    %2772 = vdwg.mxu0
    %v2774 = vsel %vm213, %v2749, 0
    %2776 = vmatpush.msra.mxu0 0.0
    %2777 = vmatpush.msra.mxu0 0.0
    %2778 = vmatpush.msra.mxu0 0.0
    %2779 = vmatpush.msra.mxu0 0.0
    %2780 = vmatpush.msra.mxu0 0.0
    %2781 = vmatpush.msra.mxu0 0.0
    %2782 = vmatpush.msra.mxu0 0.0
    %2783 = vmatpush.msra.mxu0 0.0
    %2784 = vmatpush.msra.mxu0 0.0
    %2785 = vmatpush.msra.mxu0 0.0
    %2786 = vmatpush.msra.mxu0 0.0
    %2787 = vmatpush.msra.mxu0 0.0
    %2788 = vmatpush.msra.mxu0 %v57
    %2789 = vmatpush.msra.mxu0 %v56
    %2790 = vmatpush.msra.mxu0 %v55
    %2791 = vmatpush.msra.mxu0 %v54
    %2792 = vmatmul.f32.gmra.mxu0 %v2774
    %v2793 = vpop.f32.mrf.mxu0
    %v2794 = vadd.f32 %v2771, %v2793
    %2795 = vdwg.mxu0
    %v2796 = vadd.f32 %v2794, %v72
    %v2797 = vtanh.pop %v2796
    %v2799 = vsel %vm213, %v2631, 0
    %2801 = vmatpush.msra.mxu0 0.0
    %2802 = vmatpush.msra.mxu0 0.0
    %2803 = vmatpush.msra.mxu0 0.0
    %2804 = vmatpush.msra.mxu0 0.0
    %2805 = vmatpush.msra.mxu0 0.0
    %2806 = vmatpush.msra.mxu0 0.0
    %2807 = vmatpush.msra.mxu0 0.0
    %2808 = vmatpush.msra.mxu0 0.0
    %2809 = vmatpush.msra.mxu0 0.0
    %2810 = vmatpush.msra.mxu0 0.0
    %2811 = vmatpush.msra.mxu0 0.0
    %2812 = vmatpush.msra.mxu0 0.0
    %2813 = vmatpush.msra.mxu0 %v65
    %2814 = vmatpush.msra.mxu0 %v64
    %2815 = vmatpush.msra.mxu0 %v63
    %2816 = vmatpush.msra.mxu0 %v62
    %2817 = vmatmul.f32.gmra.mxu0 %v2799
    %v2818 = vpop.f32.mrf.mxu0
    %v2819 = vadd.f32 %v76, %v2818
    %2820 = vdwg.mxu0
    %vm2821 = vcmask 130048
    %v2822 = vsel %vm2821, %v2819, -inf
    %2823 = vmax.xlane.f32.xlu0 %v2822
    %v2824 = vpop.xlane.xlu0 %2823
    %v2825 = vsub.f32 %v2819, %v2824
    %v2826 = vmul.f32 %v2825, 1.442695
    %v2827 = vpow.pop %v2826
    %v2828 = vsel %vm2821, %v2827, 0.0
    %2829 = vadd.xlane.f32.xlu0 %v2828
    %v2830 = vpop.xlane.xlu0 %2829
    %v2831 = vlog2.pop %v2830
    %v2832 = vmul.f32 %v2831, 0.6931472
    %v2833 = vsub.f32 %v2825, %v2832
    %2834 = vst.msk [vmem:[#allocation2] sm:$0xff] %vm2821, %v2833
    %v2836 = vsel %vm213, %v2797, 0
    %2838 = vmatpush.msra.mxu0 0.0
    %2839 = vmatpush.msra.mxu0 0.0
    %2840 = vmatpush.msra.mxu0 0.0
    %2841 = vmatpush.msra.mxu0 0.0
    %2842 = vmatpush.msra.mxu0 0.0
    %2843 = vmatpush.msra.mxu0 0.0
    %2844 = vmatpush.msra.mxu0 0.0
    %2845 = vmatpush.msra.mxu0 0.0
    %2846 = vmatpush.msra.mxu0 0.0
    %2847 = vmatpush.msra.mxu0 0.0
    %2848 = vmatpush.msra.mxu0 0.0
    %2849 = vmatpush.msra.mxu0 0.0
    %2850 = vmatpush.msra.mxu0 %v65
    %2851 = vmatpush.msra.mxu0 %v64
    %2852 = vmatpush.msra.mxu0 %v63
    %2853 = vmatpush.msra.mxu0 %v62
    %2854 = vmatmul.f32.gmra.mxu0 %v2836
    %v2855 = vpop.f32.mrf.mxu0
    %v2856 = vadd.f32 %v76, %v2855
    %2857 = vdwg.mxu0
    %v2858 = vsel %vm2821, %v2856, -inf
    %2859 = vmax.xlane.f32.xlu0 %v2858
    %v2860 = vpop.xlane.xlu0 %2859
    %v2861 = vsub.f32 %v2856, %v2860
    %v2862 = vmul.f32 %v2861, 1.442695
    %v2863 = vpow.pop %v2862
    %v2864 = vsel %vm2821, %v2863, 0.0
    %2865 = vadd.xlane.f32.xlu0 %v2864
    %v2866 = vpop.xlane.xlu0 %2865
    %v2867 = vlog2.pop %v2866
    %v2868 = vmul.f32 %v2867, 0.6931472
    %v2869 = vsub.f32 %v2861, %v2868
    %2870 = vst.msk [vmem:[#allocation2 + $0x8] sm:$0xff] %vm2821, %v2869
    // Predicated region
    $region50: #{tpu_custom_call.1} parent=1 // pred_check
      _
    $region51: #{tpu_custom_call.1} parent=1 // pred_check_branch
      %2872 = sbr.rel (0) target = $region53
    $region52: #{tpu_custom_call.1} parent=1 // pred_region
      %2874 = vsyncadd [#allocation3], 0
      %s2875 = sshll.u32 [#allocation2], 4
      %s2876 = int_to_ptr.vmem [resolvable:$true] %s2875
      %s2877 = sshll.u32 %s12, 4
      %s2878 = int_to_ptr.hbm [resolvable:$true] %s2877
      %2883 = dma.vmem_to_hbm [thread:$0]  %s2876, 256, %s2878, [#allocation3], 128, 128, 8
    $region53: #{tpu_custom_call.1} parent=1 // pred_fallthru
      _
    // Predicated region
    $region54: #{tpu_custom_call.1} parent=1 // pred_check
      _
    $region55: #{tpu_custom_call.1} parent=1 // pred_check_branch
      %2885 = sbr.rel (0) target = $region57
    $region56: #{tpu_custom_call.1} parent=1 // pred_region
      %2887 = dma.done [#allocation3], 256
    $region57: #{tpu_custom_call.1} parent=1 // pred_fallthru
      _
    %2888 = vsyncpa [#allocation3], 1

</llo_original>
